<compile_context>
chip_gen: v7x
topology: tpu7x:2x2x1
jax: 0.10.0
libtpu: 0.0.40
codegen_flags: <defaults>
</compile_context>

<pallas_src>
import functools

import jax
import jax.numpy as jnp
from jax.experimental import pallas as pl
from jax.experimental.pallas import tpu as pltpu


def _round_up(x, m):
    return ((x + m - 1) // m) * m


_LANE = 128  # lane-dense padding width for labels / packed eps


# ----------------------------------------------------------------------------
# Fused per-batch-tile kernel: both VAE branches, all matmuls + activations +
# reparameterization.  Weight refs are full-array VMEM blocks (resident across
# the grid); data refs are [TM, ...] tiles walking the batch.
# ----------------------------------------------------------------------------
def _autoencoder_kernel(
    # data tiles (walk with grid index)
    ref_ref, tgt_ref, lab_ref, eps_ref,
    # fused / resident weights
    w_xr_ref,            # [F, 3*Hd]  bf16: [ref_enc_l1 | tgt_enc(ref) | tgt_dec(ref)]
    te_wt_ref,           # [F, Hd]    bf16: tgt_enc(target rows)
    wl_ref,              # [128, 2*Hd] bf16: [tgt_enc(labels) | tgt_dec(labels)] (zero-padded rows)
    re_b1_ref, te_b1_ref, td_b1_ref,      # [1, Hd] f32
    re_wh_ref, re_bh_ref,                 # [Hd, 2*Zr] bf16, [1, 2*Zr] f32
    te_wh_ref, te_bh_ref,                 # [Hd, 2*Zt] bf16, [1, 2*Zt] f32
    rd_w1_ref, rd_b1_ref, rd_wo_ref, rd_bo_ref,   # ref decoder
    td_wz_ref, td_wo_ref, td_bo_ref,              # target decoder (z rows / out)
    # outputs
    tgt_hat_ref, ref_hat_ref,
):
    f32 = jnp.float32
    bf16 = jnp.bfloat16

    Hd = re_b1_ref.shape[-1]
    Zr = re_bh_ref.shape[-1] // 2
    Zt = te_bh_ref.shape[-1] // 2

    x_r = ref_ref[...]     # [TM, F]   bf16
    x_t = tgt_ref[...]     # [TM, F]   bf16
    lab = lab_ref[...]     # [TM, 128] bf16 (zero-padded lanes)
    eps = eps_ref[...]     # [TM, 128] f32  (eps_r | eps_t | zeros)

    # ---- shared fused projections of x_r and labels (one MXU pass each) ----
    xr_proj = jnp.dot(x_r, w_xr_ref[...], preferred_element_type=f32)   # [TM, 3*Hd]
    xr_re = xr_proj[:, :Hd]          # ref encoder hidden pre-activation term
    xr_te = xr_proj[:, Hd:2 * Hd]    # target encoder split-K term
    xr_td = xr_proj[:, 2 * Hd:]      # target decoder split-K term

    lab_proj = jnp.dot(lab, wl_ref[...], preferred_element_type=f32)    # [TM, 2*Hd]
    lab_te = lab_proj[:, :Hd]
    lab_td = lab_proj[:, Hd:]

    # -------------------- ref branch: enc -> reparam -> dec ----------------
    h = jnp.maximum(xr_re + re_b1_ref[...], 0.0).astype(bf16)
    head = jnp.dot(h, re_wh_ref[...], preferred_element_type=f32) + re_bh_ref[...]
    mu, lv = head[:, :Zr], head[:, Zr:]
    z_r = mu + jnp.exp(0.5 * lv) * eps[:, :Zr]                 # reparameterize (f32)

    hd = jnp.dot(z_r.astype(bf16), rd_w1_ref[...],
                 preferred_element_type=f32) + rd_b1_ref[...]
    hd = jnp.maximum(hd, 0.0).astype(bf16)
    y_r = jnp.dot(hd, rd_wo_ref[...], preferred_element_type=f32) + rd_bo_ref[...]
    ref_hat_ref[...] = jax.nn.sigmoid(y_r).astype(ref_hat_ref.dtype)

    # ---------- target branch (conditioned on the ORIGINAL ref) ------------
    ht = (jnp.dot(x_t, te_wt_ref[...], preferred_element_type=f32)
          + xr_te + lab_te + te_b1_ref[...])
    ht = jnp.maximum(ht, 0.0).astype(bf16)
    head_t = jnp.dot(ht, te_wh_ref[...], preferred_element_type=f32) + te_bh_ref[...]
    mu_t, lv_t = head_t[:, :Zt], head_t[:, Zt:]
    z_t = mu_t + jnp.exp(0.5 * lv_t) * eps[:, Zr:Zr + Zt]      # reparameterize (f32)

    hdt = (jnp.dot(z_t.astype(bf16), td_wz_ref[...], preferred_element_type=f32)
           + xr_td + lab_td + td_b1_ref[...])
    hdt = jnp.maximum(hdt, 0.0).astype(bf16)
    y_t = jnp.dot(hdt, td_wo_ref[...], preferred_element_type=f32) + td_bo_ref[...]
    tgt_hat_ref[...] = jax.nn.sigmoid(y_t).astype(tgt_hat_ref.dtype)


_WEIGHT_ORDER = [
    "w_xr", "te_wt", "wl",
    "re_b1", "te_b1", "td_b1",
    "re_wh", "re_bh", "te_wh", "te_bh",
    "rd_w1", "rd_b1", "rd_wo", "rd_bo",
    "td_wz", "td_wo", "td_bo",
]


# ----------------------------------------------------------------------------
# Deterministic parameter construction (synthetic, not a checkpoint).
# Stored in the "PyTorch-like" layout (concat-K first layers, combined
# mu/logvar heads) so the mapping to the original Linear layers is explicit.
# ----------------------------------------------------------------------------
def _init_linear(key, d_in, d_out):
    kw, kb = jax.random.split(key)
    scale = 1.0 / jnp.sqrt(jnp.float32(d_in))
    w = jax.random.uniform(kw, (d_in, d_out), jnp.float32, -scale, scale)
    b = jax.random.uniform(kb, (d_out,), jnp.float32, -scale, scale)
    return w, b


def make_params(img_shape=(4, 16, 16), n_labels=4,
                ref_latent=16, target_latent=16, hidden=128, seed=0):
    C, H, W = img_shape
    flat = C * H * W
    keys = jax.random.split(jax.random.PRNGKey(seed), 8)
    params = {
        # ref encoder: flat -> hidden -> (mu | logvar)
        "ref_enc_l1": _init_linear(keys[0], flat, hidden),
        "ref_enc_head": _init_linear(keys[1], hidden, 2 * ref_latent),
        # ref decoder: latent -> hidden -> flat
        "ref_dec_l1": _init_linear(keys[2], ref_latent, hidden),
        "ref_dec_out": _init_linear(keys[3], hidden, flat),
        # target encoder: [target_flat | ref_flat | labels] -> hidden -> heads
        "tgt_enc_l1": _init_linear(keys[4], flat + flat + n_labels, hidden),
        "tgt_enc_head": _init_linear(keys[5], hidden, 2 * target_latent),
        # target decoder: [z_target | ref_flat | labels] -> hidden -> flat
        "tgt_dec_l1": _init_linear(keys[6], target_latent + flat + n_labels, hidden),
        "tgt_dec_out": _init_linear(keys[7], hidden, flat),
    }
    meta = dict(img_shape=img_shape, n_labels=n_labels,
                ref_latent=ref_latent, target_latent=target_latent,
                hidden=hidden)
    return params, meta


def prepare_kernel_weights(params, meta):
    """One-time weight prep: split concat-K layers, column-fuse the x_r and
    label projections, pad label rows to 128 lanes, cast to bf16.  Call once
    at init (NOT per forward step)."""
    C, H, W = meta["img_shape"]
    F = C * H * W
    L = meta["n_labels"]
    Hd = meta["hidden"]
    Zr, Zt = meta["ref_latent"], meta["target_latent"]
    assert L <= _LANE and Zr + Zt <= _LANE

    def bf(w):
        return w.astype(jnp.bfloat16)

    def brow(b):
        return b.reshape(1, -1).astype(jnp.float32)

    re_w1, re_b1 = params["ref_enc_l1"]
    te_w1, te_b1 = params["tgt_enc_l1"]      # rows: [target F | ref F | labels L]
    td_w1, td_b1 = params["tgt_dec_l1"]      # rows: [z Zt | ref F | labels L]
    re_wh, re_bh = params["ref_enc_head"]
    te_wh, te_bh = params["tgt_enc_head"]
    rd_w1, rd_b1 = params["ref_dec_l1"]
    rd_wo, rd_bo = params["ref_dec_out"]
    td_wo, td_bo = params["tgt_dec_out"]

    # Column-fused x_r projection: [F, 3*Hd] = [ref_enc_l1 | tgt_enc(ref) | tgt_dec(ref)]
    w_xr = jnp.concatenate([re_w1, te_w1[F:2 * F], td_w1[Zt:Zt + F]], axis=1)

    # Column-fused, lane-dense label projection: [128, 2*Hd] (zero rows past L)
    te_wl = jnp.pad(te_w1[2 * F:2 * F + L], ((0, _LANE - L), (0, 0)))
    td_wl = jnp.pad(td_w1[Zt + F:Zt + F + L], ((0, _LANE - L), (0, 0)))
    wl = jnp.concatenate([te_wl, td_wl], axis=1)

    return {
        "w_xr": bf(w_xr), "te_wt": bf(te_w1[:F]), "wl": bf(wl),
        "re_b1": brow(re_b1), "te_b1": brow(te_b1), "td_b1": brow(td_b1),
        "re_wh": bf(re_wh), "re_bh": brow(re_bh),
        "te_wh": bf(te_wh), "te_bh": brow(te_bh),
        "rd_w1": bf(rd_w1), "rd_b1": brow(rd_b1),
        "rd_wo": bf(rd_wo), "rd_bo": brow(rd_bo),
        "td_wz": bf(td_w1[:Zt]), "td_wo": bf(td_wo), "td_bo": brow(td_bo),
    }


# ----------------------------------------------------------------------------
# Autoencoder.forward (target is not None AND ref is not None path)
# ----------------------------------------------------------------------------
def autoencoder_forward(kernel_weights, meta, target, ref, labels, rng,
                        *, block_rows=None, out_dtype=jnp.float32):
    """Mirrors Autoencoder.forward(target, ref, labels) with both inputs given.

    Returns (target_hat, ref_hat) just like the PyTorch module.
    # TODO(synk): the `ref is None` / `target is None` branches sample
    # z ~ N(0, I) with .normal_(); only the main (both-present) path is run.
    """
    B = labels.shape[0]
    C, H, W = meta["img_shape"]
    F = C * H * W
    L = labels.shape[1]
    Zr, Zt = meta["ref_latent"], meta["target_latent"]

    # Batch tiling: multiple of 16 (bf16 sublane pack), capped at 256 rows
    # (fills the 256-wide MXU M dim on v6e/v7x; still fine on v5e).
    B16 = _round_up(max(B, 1), 16)
    TM = block_rows if block_rows is not None else min(256, B16)
    Bp = _round_up(B16, TM)
    grid = (Bp // TM,)

    # Activations enter the kernel already in bf16; eps/reparam stay f32.
    ref_flat = ref.reshape(B, F).astype(jnp.bfloat16)
    tgt_flat = target.reshape(B, F).astype(jnp.bfloat16)
    lab_p = jnp.pad(labels.astype(jnp.bfloat16), ((0, Bp - B), (0, _LANE - L)))

    k_ref, k_tgt = jax.random.split(rng)
    eps_r = jax.random.normal(k_ref, (B, Zr), jnp.float32)
    eps_t = jax.random.normal(k_tgt, (B, Zt), jnp.float32)
    eps_p = jnp.pad(jnp.concatenate([eps_r, eps_t], axis=1),
                    ((0, Bp - B), (0, _LANE - Zr - Zt)))

    def pad_rows(x):
        return jnp.pad(x, ((0, Bp - B), (0, 0)))

    data_in = [pad_rows(ref_flat), pad_rows(tgt_flat), lab_p, eps_p]
    weight_in = [kernel_weights[name] for name in _WEIGHT_ORDER]

    data_specs = [
        pl.BlockSpec((TM, F), lambda i: (i, 0)),
        pl.BlockSpec((TM, F), lambda i: (i, 0)),
        pl.BlockSpec((TM, _LANE), lambda i: (i, 0)),
        pl.BlockSpec((TM, _LANE), lambda i: (i, 0)),
    ]
    # Constant index_map -> weights DMA'd once, VMEM-resident across the grid.
    weight_specs = [pl.BlockSpec(w.shape, lambda i: (0, 0)) for w in weight_in]

    tgt_hat_p, ref_hat_p = pl.pallas_call(
        _autoencoder_kernel,
        out_shape=(jax.ShapeDtypeStruct((Bp, F), out_dtype),
                   jax.ShapeDtypeStruct((Bp, F), out_dtype)),
        grid=grid,
        in_specs=data_specs + weight_specs,
        out_specs=(pl.BlockSpec((TM, F), lambda i: (i, 0)),
                   pl.BlockSpec((TM, F), lambda i: (i, 0))),
        compiler_params=pltpu.CompilerParams(
            dimension_semantics=("parallel",)),
    )(*data_in, *weight_in)

    target_hat = tgt_hat_p[:B].reshape(B, C, H, W)
    ref_hat = ref_hat_p[:B].reshape(B, C, H, W)
    return target_hat, ref_hat


# ----------------------------------------------------------------------------
# Pure-JAX reference (same bf16-weight / f32-accumulation math) for checking.
# ----------------------------------------------------------------------------
def reference_forward(params, meta, target, ref, labels, rng):
    B = labels.shape[0]
    C, H, W = meta["img_shape"]
    F = C * H * W
    Zr, Zt = meta["ref_latent"], meta["target_latent"]
    bf16, f32 = jnp.bfloat16, jnp.float32

    ref_flat = ref.reshape(B, F).astype(f32)
    tgt_flat = target.reshape(B, F).astype(f32)
    k_ref, k_tgt = jax.random.split(rng)
    eps_r = jax.random.normal(k_ref, (B, Zr), f32)
    eps_t = jax.random.normal(k_tgt, (B, Zt), f32)

    def lin(x, w, b, act=None):
        y = jnp.dot(x.astype(bf16), w.astype(bf16),
                    preferred_element_type=f32) + b
        if act == "relu":
            y = jnp.maximum(y, 0.0)
        elif act == "sigmoid":
            y = jax.nn.sigmoid(y)
        return y

    # ref branch
    h = lin(ref_flat, *params["ref_enc_l1"], act="relu")
    out = lin(h, *params["ref_enc_head"])
    z_r = out[:, :Zr] + jnp.exp(0.5 * out[:, Zr:]) * eps_r
    ref_hat = lin(lin(z_r, *params["ref_dec_l1"], act="relu"),
                  *params["ref_dec_out"], act="sigmoid").reshape(B, C, H, W)

    # target branch (conditioned on original ref)
    x = jnp.concatenate([tgt_flat, ref_flat, labels.astype(f32)], axis=1)
    h = lin(x, *params["tgt_enc_l1"], act="relu")
    out = lin(h, *params["tgt_enc_head"])
    z_t = out[:, :Zt] + jnp.exp(0.5 * out[:, Zt:]) * eps_t
    xd = jnp.concatenate([z_t, ref_flat, labels.astype(f32)], axis=1)
    target_hat = lin(lin(xd, *params["tgt_dec_l1"], act="relu"),
                     *params["tgt_dec_out"], act="sigmoid").reshape(B, C, H, W)
    return target_hat, ref_hat


# ----------------------------------------------------------------------------
if __name__ == "__main__":
    B, C, H, W = 2, 4, 16, 16
    N_LABELS = 4

    params, meta = make_params(img_shape=(C, H, W), n_labels=N_LABELS,
                               ref_latent=16, target_latent=16,
                               hidden=128, seed=0)
    # Weight prep is hoisted out of the per-call path (done once here).
    kernel_weights = prepare_kernel_weights(params, meta)

    key = jax.random.PRNGKey(0)
    k_t, k_r, k_l, k_fwd = jax.random.split(key, 4)
    target = jax.random.normal(k_t, (B, C, H, W), jnp.float32)
    ref = jax.random.normal(k_r, (B, C, H, W), jnp.float32)
    labels = jax.random.normal(k_l, (B, N_LABELS), jnp.float32)

    fwd = jax.jit(functools.partial(autoencoder_forward, kernel_weights, meta))
    target_hat, ref_hat = fwd(target, ref, labels, k_fwd)
    jax.block_until_ready((target_hat, ref_hat))

    assert target_hat.shape == (B, C, H, W)
    assert ref_hat.shape == (B, C, H, W)
    assert target_hat.dtype == jnp.float32 and ref_hat.dtype == jnp.float32

    # Numerical check against the pure-JAX reference (same bf16/f32 math).
    t_ref, r_ref = reference_forward(params, meta, target, ref, labels, k_fwd)
    assert bool(jnp.all(jnp.isfinite(target_hat))) and bool(jnp.all(jnp.isfinite(ref_hat)))
    assert bool(jnp.allclose(target_hat, t_ref, atol=2e-2)), \
        float(jnp.max(jnp.abs(target_hat - t_ref)))
    assert bool(jnp.allclose(ref_hat, r_ref, atol=2e-2)), \
        float(jnp.max(jnp.abs(ref_hat - r_ref)))

    # Second check: exercise the multi-step batch grid (forced 16-row tiles,
    # B=40 -> padded 48 -> grid=(3,)) with resident weights.
    B2 = 40
    k2_t, k2_r, k2_l, k2_fwd = jax.random.split(jax.random.PRNGKey(1), 4)
    target2 = jax.random.normal(k2_t, (B2, C, H, W), jnp.float32)
    ref2 = jax.random.normal(k2_r, (B2, C, H, W), jnp.float32)
    labels2 = jax.random.normal(k2_l, (B2, N_LABELS), jnp.float32)
    fwd2 = jax.jit(functools.partial(autoencoder_forward, kernel_weights, meta,
                                     block_rows=16))
    t2_hat, r2_hat = fwd2(target2, ref2, labels2, k2_fwd)
    jax.block_until_ready((t2_hat, r2_hat))
    t2_ref, r2_ref = reference_forward(params, meta, target2, ref2, labels2, k2_fwd)
    assert bool(jnp.allclose(t2_hat, t2_ref, atol=2e-2)), \
        float(jnp.max(jnp.abs(t2_hat - t2_ref)))
    assert bool(jnp.allclose(r2_hat, r2_ref, atol=2e-2)), \
        float(jnp.max(jnp.abs(r2_hat - r2_ref)))

    print("KERNEL_OK")
</pallas_src>

<mosaic_0001>
module attributes {stable_mosaic.version = 11 : i64} {
  func.func @_autoencoder_kernel(%arg0: i32, %arg1: memref<16x1024xbf16, #tpu.memory_space<vmem>>, %arg2: memref<16x1024xbf16, #tpu.memory_space<vmem>>, %arg3: memref<16x128xbf16, #tpu.memory_space<vmem>>, %arg4: memref<16x128xf32, #tpu.memory_space<vmem>>, %arg5: memref<1024x384xbf16, #tpu.memory_space<vmem>>, %arg6: memref<1024x128xbf16, #tpu.memory_space<vmem>>, %arg7: memref<128x256xbf16, #tpu.memory_space<vmem>>, %arg8: memref<1x128xf32, #tpu.memory_space<vmem>>, %arg9: memref<1x128xf32, #tpu.memory_space<vmem>>, %arg10: memref<1x128xf32, #tpu.memory_space<vmem>>, %arg11: memref<128x32xbf16, #tpu.memory_space<vmem>>, %arg12: memref<1x32xf32, #tpu.memory_space<vmem>>, %arg13: memref<128x32xbf16, #tpu.memory_space<vmem>>, %arg14: memref<1x32xf32, #tpu.memory_space<vmem>>, %arg15: memref<16x128xbf16, #tpu.memory_space<vmem>>, %arg16: memref<1x128xf32, #tpu.memory_space<vmem>>, %arg17: memref<128x1024xbf16, #tpu.memory_space<vmem>>, %arg18: memref<1x1024xf32, #tpu.memory_space<vmem>>, %arg19: memref<16x128xbf16, #tpu.memory_space<vmem>>, %arg20: memref<128x1024xbf16, #tpu.memory_space<vmem>>, %arg21: memref<1x1024xf32, #tpu.memory_space<vmem>>, %arg22: memref<16x1024xf32, #tpu.memory_space<vmem>>, %arg23: memref<16x1024xf32, #tpu.memory_space<vmem>>) attributes {dimension_semantics = [#tpu.dimension_semantics<parallel>], iteration_bounds = array<i64: 1>, scalar_prefetch = 0 : i64, scratch_operands = 0 : i64, tpu.core_type = #tpu.core_type<tc>, window_params = [{transform_indices = @transform_0, window_bounds = array<i64: 16, 1024>}, {transform_indices = @transform_1, window_bounds = array<i64: 16, 1024>}, {transform_indices = @transform_2, window_bounds = array<i64: 16, 128>}, {transform_indices = @transform_3, window_bounds = array<i64: 16, 128>}, {pipeline_mode = #tpu.pipeline_mode<synchronous>, transform_indices = @transform_4, window_bounds = array<i64: 1024, 384>}, {pipeline_mode = #tpu.pipeline_mode<synchronous>, transform_indices = @transform_5, window_bounds = array<i64: 1024, 128>}, {pipeline_mode = #tpu.pipeline_mode<synchronous>, transform_indices = @transform_6, window_bounds = array<i64: 128, 256>}, {pipeline_mode = #tpu.pipeline_mode<synchronous>, transform_indices = @transform_7, window_bounds = array<i64: 1, 128>}, {pipeline_mode = #tpu.pipeline_mode<synchronous>, transform_indices = @transform_8, window_bounds = array<i64: 1, 128>}, {pipeline_mode = #tpu.pipeline_mode<synchronous>, transform_indices = @transform_9, window_bounds = array<i64: 1, 128>}, {pipeline_mode = #tpu.pipeline_mode<synchronous>, transform_indices = @transform_10, window_bounds = array<i64: 128, 32>}, {pipeline_mode = #tpu.pipeline_mode<synchronous>, transform_indices = @transform_11, window_bounds = array<i64: 1, 32>}, {pipeline_mode = #tpu.pipeline_mode<synchronous>, transform_indices = @transform_12, window_bounds = array<i64: 128, 32>}, {pipeline_mode = #tpu.pipeline_mode<synchronous>, transform_indices = @transform_13, window_bounds = array<i64: 1, 32>}, {pipeline_mode = #tpu.pipeline_mode<synchronous>, transform_indices = @transform_14, window_bounds = array<i64: 16, 128>}, {pipeline_mode = #tpu.pipeline_mode<synchronous>, transform_indices = @transform_15, window_bounds = array<i64: 1, 128>}, {pipeline_mode = #tpu.pipeline_mode<synchronous>, transform_indices = @transform_16, window_bounds = array<i64: 128, 1024>}, {pipeline_mode = #tpu.pipeline_mode<synchronous>, transform_indices = @transform_17, window_bounds = array<i64: 1, 1024>}, {pipeline_mode = #tpu.pipeline_mode<synchronous>, transform_indices = @transform_18, window_bounds = array<i64: 16, 128>}, {pipeline_mode = #tpu.pipeline_mode<synchronous>, transform_indices = @transform_19, window_bounds = array<i64: 128, 1024>}, {pipeline_mode = #tpu.pipeline_mode<synchronous>, transform_indices = @transform_20, window_bounds = array<i64: 1, 1024>}, {transform_indices = @transform_21, window_bounds = array<i64: 16, 1024>}, {transform_indices = @transform_22, window_bounds = array<i64: 16, 1024>}]} {
    %c0 = arith.constant 0 : index
    %c0_0 = arith.constant 0 : index
    %0 = vector.load %arg1[%c0, %c0_0] : memref<16x1024xbf16, #tpu.memory_space<vmem>>, vector<16x1024xbf16>
    %c0_1 = arith.constant 0 : index
    %c0_2 = arith.constant 0 : index
    %1 = vector.load %arg2[%c0_1, %c0_2] : memref<16x1024xbf16, #tpu.memory_space<vmem>>, vector<16x1024xbf16>
    %c0_3 = arith.constant 0 : index
    %c0_4 = arith.constant 0 : index
    %2 = vector.load %arg3[%c0_3, %c0_4] : memref<16x128xbf16, #tpu.memory_space<vmem>>, vector<16x128xbf16>
    %c0_5 = arith.constant 0 : index
    %c0_6 = arith.constant 0 : index
    %3 = vector.load %arg4[%c0_5, %c0_6] : memref<16x128xf32, #tpu.memory_space<vmem>>, vector<16x128xf32>
    %c0_7 = arith.constant 0 : index
    %c0_8 = arith.constant 0 : index
    %4 = vector.load %arg5[%c0_7, %c0_8] : memref<1024x384xbf16, #tpu.memory_space<vmem>>, vector<1024x384xbf16>
    %cst = arith.constant dense<0.000000e+00> : vector<16x384xf32>
    %5 = tpu.matmul %0, %4, %cst {dimension_numbers = #tpu.dot_dimension_numbers<[1], [0], [0], [1], [0, 0, 1, 1], [], []>} : vector<16x1024xbf16>, vector<1024x384xbf16>, vector<16x384xf32> -> vector<16x384xf32>
    %6 = vector.extract_strided_slice %5 {offsets = [0, 0], sizes = [16, 128], strides = [1, 1]} : vector<16x384xf32> to vector<16x128xf32>
    %7 = vector.extract_strided_slice %5 {offsets = [0, 128], sizes = [16, 128], strides = [1, 1]} : vector<16x384xf32> to vector<16x128xf32>
    %8 = vector.extract_strided_slice %5 {offsets = [0, 256], sizes = [16, 128], strides = [1, 1]} : vector<16x384xf32> to vector<16x128xf32>
    %c0_9 = arith.constant 0 : index
    %c0_10 = arith.constant 0 : index
    %9 = vector.load %arg7[%c0_9, %c0_10] : memref<128x256xbf16, #tpu.memory_space<vmem>>, vector<128x256xbf16>
    %cst_11 = arith.constant dense<0.000000e+00> : vector<16x256xf32>
    %10 = tpu.matmul %2, %9, %cst_11 {dimension_numbers = #tpu.dot_dimension_numbers<[1], [0], [0], [1], [0, 0, 1, 1], [], []>} : vector<16x128xbf16>, vector<128x256xbf16>, vector<16x256xf32> -> vector<16x256xf32>
    %11 = vector.extract_strided_slice %10 {offsets = [0, 0], sizes = [16, 128], strides = [1, 1]} : vector<16x256xf32> to vector<16x128xf32>
    %12 = vector.extract_strided_slice %10 {offsets = [0, 128], sizes = [16, 128], strides = [1, 1]} : vector<16x256xf32> to vector<16x128xf32>
    %c0_12 = arith.constant 0 : index
    %c0_13 = arith.constant 0 : index
    %13 = vector.load %arg8[%c0_12, %c0_13] : memref<1x128xf32, #tpu.memory_space<vmem>>, vector<1x128xf32>
    %14 = vector.broadcast %13 : vector<1x128xf32> to vector<16x128xf32>
    %15 = arith.addf %6, %14 : vector<16x128xf32>
    %cst_14 = arith.constant 0.000000e+00 : f32
    %16 = vector.broadcast %cst_14 : f32 to vector<16x128xf32>
    %17 = arith.maximumf %15, %16 : vector<16x128xf32>
    %18 = arith.truncf %17 : vector<16x128xf32> to vector<16x128xbf16>
    %c0_15 = arith.constant 0 : index
    %c0_16 = arith.constant 0 : index
    %19 = vector.load %arg11[%c0_15, %c0_16] : memref<128x32xbf16, #tpu.memory_space<vmem>>, vector<128x32xbf16>
    %cst_17 = arith.constant dense<0.000000e+00> : vector<16x32xf32>
    %20 = tpu.matmul %18, %19, %cst_17 {dimension_numbers = #tpu.dot_dimension_numbers<[1], [0], [0], [1], [0, 0, 1, 1], [], []>} : vector<16x128xbf16>, vector<128x32xbf16>, vector<16x32xf32> -> vector<16x32xf32>
    %c0_18 = arith.constant 0 : index
    %c0_19 = arith.constant 0 : index
    %21 = vector.load %arg12[%c0_18, %c0_19] : memref<1x32xf32, #tpu.memory_space<vmem>>, vector<1x32xf32>
    %22 = vector.broadcast %21 : vector<1x32xf32> to vector<16x32xf32>
    %23 = arith.addf %20, %22 : vector<16x32xf32>
    %24 = vector.extract_strided_slice %23 {offsets = [0, 0], sizes = [16, 16], strides = [1, 1]} : vector<16x32xf32> to vector<16x16xf32>
    %25 = vector.extract_strided_slice %23 {offsets = [0, 16], sizes = [16, 16], strides = [1, 1]} : vector<16x32xf32> to vector<16x16xf32>
    %cst_20 = arith.constant 5.000000e-01 : f32
    %26 = vector.broadcast %cst_20 : f32 to vector<16x16xf32>
    %27 = arith.mulf %26, %25 : vector<16x16xf32>
    %28 = math.exp %27 : vector<16x16xf32>
    %29 = vector.extract_strided_slice %3 {offsets = [0, 0], sizes = [16, 16], strides = [1, 1]} : vector<16x128xf32> to vector<16x16xf32>
    %30 = arith.mulf %28, %29 : vector<16x16xf32>
    %31 = arith.addf %24, %30 : vector<16x16xf32>
    %32 = arith.truncf %31 : vector<16x16xf32> to vector<16x16xbf16>
    %c0_21 = arith.constant 0 : index
    %c0_22 = arith.constant 0 : index
    %33 = vector.load %arg15[%c0_21, %c0_22] : memref<16x128xbf16, #tpu.memory_space<vmem>>, vector<16x128xbf16>
    %cst_23 = arith.constant dense<0.000000e+00> : vector<16x128xf32>
    %34 = tpu.matmul %32, %33, %cst_23 {dimension_numbers = #tpu.dot_dimension_numbers<[1], [0], [0], [1], [0, 0, 1, 1], [], []>} : vector<16x16xbf16>, vector<16x128xbf16>, vector<16x128xf32> -> vector<16x128xf32>
    %c0_24 = arith.constant 0 : index
    %c0_25 = arith.constant 0 : index
    %35 = vector.load %arg16[%c0_24, %c0_25] : memref<1x128xf32, #tpu.memory_space<vmem>>, vector<1x128xf32>
    %36 = vector.broadcast %35 : vector<1x128xf32> to vector<16x128xf32>
    %37 = arith.addf %34, %36 : vector<16x128xf32>
    %cst_26 = arith.constant 0.000000e+00 : f32
    %38 = vector.broadcast %cst_26 : f32 to vector<16x128xf32>
    %39 = arith.maximumf %37, %38 : vector<16x128xf32>
    %40 = arith.truncf %39 : vector<16x128xf32> to vector<16x128xbf16>
    %c0_27 = arith.constant 0 : index
    %c0_28 = arith.constant 0 : index
    %41 = vector.load %arg17[%c0_27, %c0_28] : memref<128x1024xbf16, #tpu.memory_space<vmem>>, vector<128x1024xbf16>
    %cst_29 = arith.constant dense<0.000000e+00> : vector<16x1024xf32>
    %42 = tpu.matmul %40, %41, %cst_29 {dimension_numbers = #tpu.dot_dimension_numbers<[1], [0], [0], [1], [0, 0, 1, 1], [], []>} : vector<16x128xbf16>, vector<128x1024xbf16>, vector<16x1024xf32> -> vector<16x1024xf32>
    %c0_30 = arith.constant 0 : index
    %c0_31 = arith.constant 0 : index
    %43 = vector.load %arg18[%c0_30, %c0_31] : memref<1x1024xf32, #tpu.memory_space<vmem>>, vector<1x1024xf32>
    %44 = vector.broadcast %43 : vector<1x1024xf32> to vector<16x1024xf32>
    %45 = arith.addf %42, %44 : vector<16x1024xf32>
    %46 = arith.negf %45 : vector<16x1024xf32>
    %47 = math.exp %46 : vector<16x1024xf32>
    %cst_32 = arith.constant 1.000000e+00 : f32
    %48 = vector.broadcast %cst_32 : f32 to vector<16x1024xf32>
    %49 = arith.addf %48, %47 : vector<16x1024xf32>
    %50 = arith.divf %48, %49 : vector<16x1024xf32>
    %c0_33 = arith.constant 0 : index
    %c0_34 = arith.constant 0 : index
    %51 = vector.load %arg23[%c0_33, %c0_34] : memref<16x1024xf32, #tpu.memory_space<vmem>>, vector<16x1024xf32>
    tpu.vector_store %arg23[%c0_33, %c0_34], %50 {strides = array<i32>} : memref<16x1024xf32, #tpu.memory_space<vmem>>, vector<16x1024xf32>,
    %c0_35 = arith.constant 0 : index
    %c0_36 = arith.constant 0 : index
    %52 = vector.load %arg6[%c0_35, %c0_36] : memref<1024x128xbf16, #tpu.memory_space<vmem>>, vector<1024x128xbf16>
    %cst_37 = arith.constant dense<0.000000e+00> : vector<16x128xf32>
    %53 = tpu.matmul %1, %52, %cst_37 {dimension_numbers = #tpu.dot_dimension_numbers<[1], [0], [0], [1], [0, 0, 1, 1], [], []>} : vector<16x1024xbf16>, vector<1024x128xbf16>, vector<16x128xf32> -> vector<16x128xf32>
    %54 = arith.addf %53, %7 : vector<16x128xf32>
    %55 = arith.addf %54, %11 : vector<16x128xf32>
    %c0_38 = arith.constant 0 : index
    %c0_39 = arith.constant 0 : index
    %56 = vector.load %arg9[%c0_38, %c0_39] : memref<1x128xf32, #tpu.memory_space<vmem>>, vector<1x128xf32>
    %57 = vector.broadcast %56 : vector<1x128xf32> to vector<16x128xf32>
    %58 = arith.addf %55, %57 : vector<16x128xf32>
    %cst_40 = arith.constant 0.000000e+00 : f32
    %59 = vector.broadcast %cst_40 : f32 to vector<16x128xf32>
    %60 = arith.maximumf %58, %59 : vector<16x128xf32>
    %61 = arith.truncf %60 : vector<16x128xf32> to vector<16x128xbf16>
    %c0_41 = arith.constant 0 : index
    %c0_42 = arith.constant 0 : index
    %62 = vector.load %arg13[%c0_41, %c0_42] : memref<128x32xbf16, #tpu.memory_space<vmem>>, vector<128x32xbf16>
    %cst_43 = arith.constant dense<0.000000e+00> : vector<16x32xf32>
    %63 = tpu.matmul %61, %62, %cst_43 {dimension_numbers = #tpu.dot_dimension_numbers<[1], [0], [0], [1], [0, 0, 1, 1], [], []>} : vector<16x128xbf16>, vector<128x32xbf16>, vector<16x32xf32> -> vector<16x32xf32>
    %c0_44 = arith.constant 0 : index
    %c0_45 = arith.constant 0 : index
    %64 = vector.load %arg14[%c0_44, %c0_45] : memref<1x32xf32, #tpu.memory_space<vmem>>, vector<1x32xf32>
    %65 = vector.broadcast %64 : vector<1x32xf32> to vector<16x32xf32>
    %66 = arith.addf %63, %65 : vector<16x32xf32>
    %67 = vector.extract_strided_slice %66 {offsets = [0, 0], sizes = [16, 16], strides = [1, 1]} : vector<16x32xf32> to vector<16x16xf32>
    %68 = vector.extract_strided_slice %66 {offsets = [0, 16], sizes = [16, 16], strides = [1, 1]} : vector<16x32xf32> to vector<16x16xf32>
    %cst_46 = arith.constant 5.000000e-01 : f32
    %69 = vector.broadcast %cst_46 : f32 to vector<16x16xf32>
    %70 = arith.mulf %69, %68 : vector<16x16xf32>
    %71 = math.exp %70 : vector<16x16xf32>
    %72 = vector.extract_strided_slice %3 {offsets = [0, 16], sizes = [16, 16], strides = [1, 1]} : vector<16x128xf32> to vector<16x16xf32>
    %73 = arith.mulf %71, %72 : vector<16x16xf32>
    %74 = arith.addf %67, %73 : vector<16x16xf32>
    %75 = arith.truncf %74 : vector<16x16xf32> to vector<16x16xbf16>
    %c0_47 = arith.constant 0 : index
    %c0_48 = arith.constant 0 : index
    %76 = vector.load %arg19[%c0_47, %c0_48] : memref<16x128xbf16, #tpu.memory_space<vmem>>, vector<16x128xbf16>
    %cst_49 = arith.constant dense<0.000000e+00> : vector<16x128xf32>
    %77 = tpu.matmul %75, %76, %cst_49 {dimension_numbers = #tpu.dot_dimension_numbers<[1], [0], [0], [1], [0, 0, 1, 1], [], []>} : vector<16x16xbf16>, vector<16x128xbf16>, vector<16x128xf32> -> vector<16x128xf32>
    %78 = arith.addf %77, %8 : vector<16x128xf32>
    %79 = arith.addf %78, %12 : vector<16x128xf32>
    %c0_50 = arith.constant 0 : index
    %c0_51 = arith.constant 0 : index
    %80 = vector.load %arg10[%c0_50, %c0_51] : memref<1x128xf32, #tpu.memory_space<vmem>>, vector<1x128xf32>
    %81 = vector.broadcast %80 : vector<1x128xf32> to vector<16x128xf32>
    %82 = arith.addf %79, %81 : vector<16x128xf32>
    %cst_52 = arith.constant 0.000000e+00 : f32
    %83 = vector.broadcast %cst_52 : f32 to vector<16x128xf32>
    %84 = arith.maximumf %82, %83 : vector<16x128xf32>
    %85 = arith.truncf %84 : vector<16x128xf32> to vector<16x128xbf16>
    %c0_53 = arith.constant 0 : index
    %c0_54 = arith.constant 0 : index
    %86 = vector.load %arg20[%c0_53, %c0_54] : memref<128x1024xbf16, #tpu.memory_space<vmem>>, vector<128x1024xbf16>
    %cst_55 = arith.constant dense<0.000000e+00> : vector<16x1024xf32>
    %87 = tpu.matmul %85, %86, %cst_55 {dimension_numbers = #tpu.dot_dimension_numbers<[1], [0], [0], [1], [0, 0, 1, 1], [], []>} : vector<16x128xbf16>, vector<128x1024xbf16>, vector<16x1024xf32> -> vector<16x1024xf32>
    %c0_56 = arith.constant 0 : index
    %c0_57 = arith.constant 0 : index
    %88 = vector.load %arg21[%c0_56, %c0_57] : memref<1x1024xf32, #tpu.memory_space<vmem>>, vector<1x1024xf32>
    %89 = vector.broadcast %88 : vector<1x1024xf32> to vector<16x1024xf32>
    %90 = arith.addf %87, %89 : vector<16x1024xf32>
    %91 = arith.negf %90 : vector<16x1024xf32>
    %92 = math.exp %91 : vector<16x1024xf32>
    %cst_58 = arith.constant 1.000000e+00 : f32
    %93 = vector.broadcast %cst_58 : f32 to vector<16x1024xf32>
    %94 = arith.addf %93, %92 : vector<16x1024xf32>
    %95 = arith.divf %93, %94 : vector<16x1024xf32>
    %c0_59 = arith.constant 0 : index
    %c0_60 = arith.constant 0 : index
    %96 = vector.load %arg22[%c0_59, %c0_60] : memref<16x1024xf32, #tpu.memory_space<vmem>>, vector<16x1024xf32>
    tpu.vector_store %arg22[%c0_59, %c0_60], %95 {strides = array<i32>} : memref<16x1024xf32, #tpu.memory_space<vmem>>, vector<16x1024xf32>,
    return
  }
  func.func @transform_0(%arg0: i32) -> (i32, i32) {
    %c0_i32 = arith.constant 0 : i32
    %c0_i32_0 = arith.constant 0 : i32
    return %arg0, %c0_i32 : i32, i32
  }
  func.func @transform_1(%arg0: i32) -> (i32, i32) {
    %c0_i32 = arith.constant 0 : i32
    %c0_i32_0 = arith.constant 0 : i32
    return %arg0, %c0_i32 : i32, i32
  }
  func.func @transform_2(%arg0: i32) -> (i32, i32) {
    %c0_i32 = arith.constant 0 : i32
    %c0_i32_0 = arith.constant 0 : i32
    return %arg0, %c0_i32 : i32, i32
  }
  func.func @transform_3(%arg0: i32) -> (i32, i32) {
    %c0_i32 = arith.constant 0 : i32
    %c0_i32_0 = arith.constant 0 : i32
    return %arg0, %c0_i32 : i32, i32
  }
  func.func @transform_4(%arg0: i32) -> (i32, i32) {
    %c0_i32 = arith.constant 0 : i32
    %c0_i32_0 = arith.constant 0 : i32
    %c0_i32_1 = arith.constant 0 : i32
    return %c0_i32, %c0_i32_0 : i32, i32
  }
  func.func @transform_5(%arg0: i32) -> (i32, i32) {
    %c0_i32 = arith.constant 0 : i32
    %c0_i32_0 = arith.constant 0 : i32
    %c0_i32_1 = arith.constant 0 : i32
    return %c0_i32, %c0_i32_0 : i32, i32
  }
  func.func @transform_6(%arg0: i32) -> (i32, i32) {
    %c0_i32 = arith.constant 0 : i32
    %c0_i32_0 = arith.constant 0 : i32
    %c0_i32_1 = arith.constant 0 : i32
    return %c0_i32, %c0_i32_0 : i32, i32
  }
  func.func @transform_7(%arg0: i32) -> (i32, i32) {
    %c0_i32 = arith.constant 0 : i32
    %c0_i32_0 = arith.constant 0 : i32
    %c0_i32_1 = arith.constant 0 : i32
    return %c0_i32, %c0_i32_0 : i32, i32
  }
  func.func @transform_8(%arg0: i32) -> (i32, i32) {
    %c0_i32 = arith.constant 0 : i32
    %c0_i32_0 = arith.constant 0 : i32
    %c0_i32_1 = arith.constant 0 : i32
    return %c0_i32, %c0_i32_0 : i32, i32
  }
  func.func @transform_9(%arg0: i32) -> (i32, i32) {
    %c0_i32 = arith.constant 0 : i32
    %c0_i32_0 = arith.constant 0 : i32
    %c0_i32_1 = arith.constant 0 : i32
    return %c0_i32, %c0_i32_0 : i32, i32
  }
  func.func @transform_10(%arg0: i32) -> (i32, i32) {
    %c0_i32 = arith.constant 0 : i32
    %c0_i32_0 = arith.constant 0 : i32
    %c0_i32_1 = arith.constant 0 : i32
    return %c0_i32, %c0_i32_0 : i32, i32
  }
  func.func @transform_11(%arg0: i32) -> (i32, i32) {
    %c0_i32 = arith.constant 0 : i32
    %c0_i32_0 = arith.constant 0 : i32
    %c0_i32_1 = arith.constant 0 : i32
    return %c0_i32, %c0_i32_0 : i32, i32
  }
  func.func @transform_12(%arg0: i32) -> (i32, i32) {
    %c0_i32 = arith.constant 0 : i32
    %c0_i32_0 = arith.constant 0 : i32
    %c0_i32_1 = arith.constant 0 : i32
    return %c0_i32, %c0_i32_0 : i32, i32
  }
  func.func @transform_13(%arg0: i32) -> (i32, i32) {
    %c0_i32 = arith.constant 0 : i32
    %c0_i32_0 = arith.constant 0 : i32
    %c0_i32_1 = arith.constant 0 : i32
    return %c0_i32, %c0_i32_0 : i32, i32
  }
  func.func @transform_14(%arg0: i32) -> (i32, i32) {
    %c0_i32 = arith.constant 0 : i32
    %c0_i32_0 = arith.constant 0 : i32
    %c0_i32_1 = arith.constant 0 : i32
    return %c0_i32, %c0_i32_0 : i32, i32
  }
  func.func @transform_15(%arg0: i32) -> (i32, i32) {
    %c0_i32 = arith.constant 0 : i32
    %c0_i32_0 = arith.constant 0 : i32
    %c0_i32_1 = arith.constant 0 : i32
    return %c0_i32, %c0_i32_0 : i32, i32
  }
  func.func @transform_16(%arg0: i32) -> (i32, i32) {
    %c0_i32 = arith.constant 0 : i32
    %c0_i32_0 = arith.constant 0 : i32
    %c0_i32_1 = arith.constant 0 : i32
    return %c0_i32, %c0_i32_0 : i32, i32
  }
  func.func @transform_17(%arg0: i32) -> (i32, i32) {
    %c0_i32 = arith.constant 0 : i32
    %c0_i32_0 = arith.constant 0 : i32
    %c0_i32_1 = arith.constant 0 : i32
    return %c0_i32, %c0_i32_0 : i32, i32
  }
  func.func @transform_18(%arg0: i32) -> (i32, i32) {
    %c0_i32 = arith.constant 0 : i32
    %c0_i32_0 = arith.constant 0 : i32
    %c0_i32_1 = arith.constant 0 : i32
    return %c0_i32, %c0_i32_0 : i32, i32
  }
  func.func @transform_19(%arg0: i32) -> (i32, i32) {
    %c0_i32 = arith.constant 0 : i32
    %c0_i32_0 = arith.constant 0 : i32
    %c0_i32_1 = arith.constant 0 : i32
    return %c0_i32, %c0_i32_0 : i32, i32
  }
  func.func @transform_20(%arg0: i32) -> (i32, i32) {
    %c0_i32 = arith.constant 0 : i32
    %c0_i32_0 = arith.constant 0 : i32
    %c0_i32_1 = arith.constant 0 : i32
    return %c0_i32, %c0_i32_0 : i32, i32
  }
  func.func @transform_21(%arg0: i32) -> (i32, i32) {
    %c0_i32 = arith.constant 0 : i32
    %c0_i32_0 = arith.constant 0 : i32
    return %arg0, %c0_i32 : i32, i32
  }
  func.func @transform_22(%arg0: i32) -> (i32, i32) {
    %c0_i32 = arith.constant 0 : i32
    %c0_i32_0 = arith.constant 0 : i32
    return %arg0, %c0_i32 : i32, i32
  }
}

</mosaic_0001>

<llo_original>
// kernel: autoencoder_forward.3
$region0: #{autoencoder_forward.3}
  #allocation0 [shape = 'u32[]', space=smem, size = 0x4, offset = 0x4, fixed_abs, tag = 'smem constant byte address 0x4 - core index']
  #allocation1 [shape = 'u32[144,128]{1,0:T(1,128)}', space=vmem, size = 0x12000, scoped, tag = 'internal scratch']
  %s0 = inlined_call_operand.vmem [shape: bf16[16,1024], index: 0, kind: input, shape index: {}]
  %s1 = inlined_call_operand.vmem [shape: bf16[16,1024], index: 1, kind: input, shape index: {}]
  %s2 = inlined_call_operand.vmem [shape: bf16[16,128], index: 2, kind: input, shape index: {}]
  %s3 = inlined_call_operand.vmem [shape: f32[16,128], index: 3, kind: input, shape index: {}]
  %s4 = inlined_call_operand.vmem [shape: bf16[1024,384], index: 4, kind: input, shape index: {}]
  %s5 = inlined_call_operand.vmem [shape: bf16[1024,128], index: 5, kind: input, shape index: {}]
  %s6 = inlined_call_operand.vmem [shape: bf16[128,256], index: 6, kind: input, shape index: {}]
  %s7 = inlined_call_operand.vmem [shape: f32[1,128], index: 7, kind: input, shape index: {}]
  %s8 = inlined_call_operand.vmem [shape: f32[1,128], index: 8, kind: input, shape index: {}]
  %s9 = inlined_call_operand.vmem [shape: f32[1,128], index: 9, kind: input, shape index: {}]
  %s10 = inlined_call_operand.vmem [shape: bf16[128,32], index: 10, kind: input, shape index: {}]
  %s11 = inlined_call_operand.vmem [shape: f32[1,32], index: 11, kind: input, shape index: {}]
  %s12 = inlined_call_operand.vmem [shape: bf16[128,32], index: 12, kind: input, shape index: {}]
  %s13 = inlined_call_operand.vmem [shape: f32[1,32], index: 13, kind: input, shape index: {}]
  %s14 = inlined_call_operand.vmem [shape: bf16[16,128], index: 14, kind: input, shape index: {}]
  %s15 = inlined_call_operand.vmem [shape: f32[1,128], index: 15, kind: input, shape index: {}]
  %s16 = inlined_call_operand.vmem [shape: bf16[128,1024], index: 16, kind: input, shape index: {}]
  %s17 = inlined_call_operand.vmem [shape: f32[1,1024], index: 17, kind: input, shape index: {}]
  %s18 = inlined_call_operand.vmem [shape: bf16[16,128], index: 18, kind: input, shape index: {}]
  %s19 = inlined_call_operand.vmem [shape: bf16[128,1024], index: 19, kind: input, shape index: {}]
  %s20 = inlined_call_operand.vmem [shape: f32[1,1024], index: 20, kind: input, shape index: {}]
  %s21 = inlined_call_operand.vmem [shape: f32[16,1024], index: 21, kind: output, shape index: {0}]
  %s22 = inlined_call_operand.vmem [shape: f32[16,1024], index: 22, kind: output, shape index: {1}]
  %23 = xla_tuple %s21, %s22
  %s24 = sld [smem:[#allocation0]]
  $region102: #{autoencoder_forward.3} parent=0
    _
  %s26 = ssub.s32 1, %s24
  %s27 = scalar_select 0, %s26, %s24
  // Predicated region
  $region2: #{autoencoder_forward.3} parent=0 // pred_check
    _
  $region3: #{autoencoder_forward.3} parent=0 // pred_check_branch
    %29 = sbr.rel (0) target = $region5
  $region4: #{autoencoder_forward.3} parent=0 // pred_region
    _
  $region5: #{autoencoder_forward.3} parent=0 // pred_fallthru
    _
  // Predicated region
  $region6: #{autoencoder_forward.3} parent=0 // pred_check
    _
  $region7: #{autoencoder_forward.3} parent=0 // pred_check_branch
    %31 = sbr.rel (0) target = $region9
  $region8: #{autoencoder_forward.3} parent=0 // pred_region
    _
  $region9: #{autoencoder_forward.3} parent=0 // pred_fallthru
    _
  // Predicated region
  $region10: #{autoencoder_forward.3} parent=0 // pred_check
    _
  $region11: #{autoencoder_forward.3} parent=0 // pred_check_branch
    %33 = sbr.rel (0) target = $region13
  $region12: #{autoencoder_forward.3} parent=0 // pred_region
    _
  $region13: #{autoencoder_forward.3} parent=0 // pred_fallthru
    _
  // Predicated region
  $region14: #{autoencoder_forward.3} parent=0 // pred_check
    _
  $region15: #{autoencoder_forward.3} parent=0 // pred_check_branch
    %35 = sbr.rel (0) target = $region17
  $region16: #{autoencoder_forward.3} parent=0 // pred_region
    _
  $region17: #{autoencoder_forward.3} parent=0 // pred_fallthru
    _
  // Predicated region
  $region18: #{autoencoder_forward.3} parent=0 // pred_check
    _
  $region19: #{autoencoder_forward.3} parent=0 // pred_check_branch
    %37 = sbr.rel (0) target = $region21
  $region20: #{autoencoder_forward.3} parent=0 // pred_region
    _
  $region21: #{autoencoder_forward.3} parent=0 // pred_fallthru
    _
  // Predicated region
  $region22: #{autoencoder_forward.3} parent=0 // pred_check
    _
  $region23: #{autoencoder_forward.3} parent=0 // pred_check_branch
    %39 = sbr.rel (0) target = $region25
  $region24: #{autoencoder_forward.3} parent=0 // pred_region
    _
  $region25: #{autoencoder_forward.3} parent=0 // pred_fallthru
    _
  // Predicated region
  $region26: #{autoencoder_forward.3} parent=0 // pred_check
    _
  $region27: #{autoencoder_forward.3} parent=0 // pred_check_branch
    %41 = sbr.rel (0) target = $region29
  $region28: #{autoencoder_forward.3} parent=0 // pred_region
    _
  $region29: #{autoencoder_forward.3} parent=0 // pred_fallthru
    _
  // Predicated region
  $region30: #{autoencoder_forward.3} parent=0 // pred_check
    _
  $region31: #{autoencoder_forward.3} parent=0 // pred_check_branch
    %43 = sbr.rel (0) target = $region33
  $region32: #{autoencoder_forward.3} parent=0 // pred_region
    _
  $region33: #{autoencoder_forward.3} parent=0 // pred_fallthru
    _
  // Predicated region
  $region34: #{autoencoder_forward.3} parent=0 // pred_check
    _
  $region35: #{autoencoder_forward.3} parent=0 // pred_check_branch
    %45 = sbr.rel (0) target = $region37
  $region36: #{autoencoder_forward.3} parent=0 // pred_region
    _
  $region37: #{autoencoder_forward.3} parent=0 // pred_fallthru
    _
  // Predicated region
  $region38: #{autoencoder_forward.3} parent=0 // pred_check
    _
  $region39: #{autoencoder_forward.3} parent=0 // pred_check_branch
    %47 = sbr.rel (0) target = $region41
  $region40: #{autoencoder_forward.3} parent=0 // pred_region
    _
  $region41: #{autoencoder_forward.3} parent=0 // pred_fallthru
    _
  // Predicated region
  $region42: #{autoencoder_forward.3} parent=0 // pred_check
    _
  $region43: #{autoencoder_forward.3} parent=0 // pred_check_branch
    %49 = sbr.rel (0) target = $region45
  $region44: #{autoencoder_forward.3} parent=0 // pred_region
    _
  $region45: #{autoencoder_forward.3} parent=0 // pred_fallthru
    _
  // Predicated region
  $region46: #{autoencoder_forward.3} parent=0 // pred_check
    _
  $region47: #{autoencoder_forward.3} parent=0 // pred_check_branch
    %51 = sbr.rel (0) target = $region49
  $region48: #{autoencoder_forward.3} parent=0 // pred_region
    _
  $region49: #{autoencoder_forward.3} parent=0 // pred_fallthru
    _
  // Predicated region
  $region50: #{autoencoder_forward.3} parent=0 // pred_check
    _
  $region51: #{autoencoder_forward.3} parent=0 // pred_check_branch
    %53 = sbr.rel (0) target = $region53
  $region52: #{autoencoder_forward.3} parent=0 // pred_region
    _
  $region53: #{autoencoder_forward.3} parent=0 // pred_fallthru
    _
  // Predicated region
  $region54: #{autoencoder_forward.3} parent=0 // pred_check
    _
  $region55: #{autoencoder_forward.3} parent=0 // pred_check_branch
    %55 = sbr.rel (0) target = $region57
  $region56: #{autoencoder_forward.3} parent=0 // pred_region
    _
  $region57: #{autoencoder_forward.3} parent=0 // pred_fallthru
    _
  // Predicated region
  $region58: #{autoencoder_forward.3} parent=0 // pred_check
    _
  $region59: #{autoencoder_forward.3} parent=0 // pred_check_branch
    %57 = sbr.rel (0) target = $region61
  $region60: #{autoencoder_forward.3} parent=0 // pred_region
    _
  $region61: #{autoencoder_forward.3} parent=0 // pred_fallthru
    _
  // Predicated region
  $region62: #{autoencoder_forward.3} parent=0 // pred_check
    _
  $region63: #{autoencoder_forward.3} parent=0 // pred_check_branch
    %59 = sbr.rel (0) target = $region65
  $region64: #{autoencoder_forward.3} parent=0 // pred_region
    _
  $region65: #{autoencoder_forward.3} parent=0 // pred_fallthru
    _
  // Predicated region
  $region66: #{autoencoder_forward.3} parent=0 // pred_check
    _
  $region67: #{autoencoder_forward.3} parent=0 // pred_check_branch
    %61 = sbr.rel (0) target = $region69
  $region68: #{autoencoder_forward.3} parent=0 // pred_region
    _
  $region69: #{autoencoder_forward.3} parent=0 // pred_fallthru
    _
  // Predicated region
  $region70: #{autoencoder_forward.3} parent=0 // pred_check
    _
  $region71: #{autoencoder_forward.3} parent=0 // pred_check_branch
    %63 = sbr.rel (0) target = $region73
  $region72: #{autoencoder_forward.3} parent=0 // pred_region
    _
  $region73: #{autoencoder_forward.3} parent=0 // pred_fallthru
    _
  // Predicated region
  $region74: #{autoencoder_forward.3} parent=0 // pred_check
    _
  $region75: #{autoencoder_forward.3} parent=0 // pred_check_branch
    %65 = sbr.rel (0) target = $region77
  $region76: #{autoencoder_forward.3} parent=0 // pred_region
    _
  $region77: #{autoencoder_forward.3} parent=0 // pred_fallthru
    _
  // Predicated region
  $region78: #{autoencoder_forward.3} parent=0 // pred_check
    _
  $region79: #{autoencoder_forward.3} parent=0 // pred_check_branch
    %67 = sbr.rel (0) target = $region81
  $region80: #{autoencoder_forward.3} parent=0 // pred_region
    _
  $region81: #{autoencoder_forward.3} parent=0 // pred_fallthru
    _
  // Predicated region
  $region82: #{autoencoder_forward.3} parent=0 // pred_check
    _
  $region83: #{autoencoder_forward.3} parent=0 // pred_check_branch
    %69 = sbr.rel (0) target = $region85
  $region84: #{autoencoder_forward.3} parent=0 // pred_region
    _
  $region85: #{autoencoder_forward.3} parent=0 // pred_fallthru
    _
  %v71 = vld [vmem:[%s0] sm:$0xff]
  %v72 = vld [vmem:[%s0 + $0x8] sm:$0xff]
  %v73 = vld [vmem:[%s0 + $0x10] sm:$0xff]
  %v74 = vld [vmem:[%s0 + $0x18] sm:$0xff]
  %v75 = vld [vmem:[%s0 + $0x20] sm:$0xff]
  %v76 = vld [vmem:[%s0 + $0x28] sm:$0xff]
  %v77 = vld [vmem:[%s0 + $0x30] sm:$0xff]
  %v78 = vld [vmem:[%s0 + $0x38] sm:$0xff]
  %v79 = vld [vmem:[%s1] sm:$0xff]
  %v80 = vld [vmem:[%s1 + $0x8] sm:$0xff]
  %v81 = vld [vmem:[%s1 + $0x10] sm:$0xff]
  %v82 = vld [vmem:[%s1 + $0x18] sm:$0xff]
  %v83 = vld [vmem:[%s1 + $0x20] sm:$0xff]
  %v84 = vld [vmem:[%s1 + $0x28] sm:$0xff]
  %v85 = vld [vmem:[%s1 + $0x30] sm:$0xff]
  %v86 = vld [vmem:[%s1 + $0x38] sm:$0xff]
  %v87 = vld [vmem:[%s2] sm:$0xf]
  %v88 = vld [vmem:[%s2 + $0x4] sm:$0xf]
  %v89 = vld [vmem:[%s3] sm:$0xff]
  %v90 = vld [vmem:[%s3 + $0x8] sm:$0xff]
  %v91 = vld [vmem:[%s4] sm:$0xff]
  %v92 = vld [vmem:[%s4 + $0x8] sm:$0xf]
  %v93 = vld [vmem:[%s4 + $0xc] sm:$0xff]
  %v94 = vld [vmem:[%s4 + $0x14] sm:$0xf]
  %v95 = vld [vmem:[%s4 + $0x18] sm:$0xff]
  %v96 = vld [vmem:[%s4 + $0x20] sm:$0xf]
  %v97 = vld [vmem:[%s4 + $0x24] sm:$0xff]
  %v98 = vld [vmem:[%s4 + $0x2c] sm:$0xf]
  %v99 = vld [vmem:[%s4 + $0x30] sm:$0xff]
  %v100 = vld [vmem:[%s4 + $0x38] sm:$0xf]
  %v101 = vld [vmem:[%s4 + $0x3c] sm:$0xff]
  %v102 = vld [vmem:[%s4 + $0x44] sm:$0xf]
  %v103 = vld [vmem:[%s4 + $0x48] sm:$0xff]
  %v104 = vld [vmem:[%s4 + $0x50] sm:$0xf]
  %v105 = vld [vmem:[%s4 + $0x54] sm:$0xff]
  %v106 = vld [vmem:[%s4 + $0x5c] sm:$0xf]
  %v107 = vld [vmem:[%s4 + $0x60] sm:$0xff]
  %v108 = vld [vmem:[%s4 + $0x68] sm:$0xf]
  %v109 = vld [vmem:[%s4 + $0x6c] sm:$0xff]
  %v110 = vld [vmem:[%s4 + $0x74] sm:$0xf]
  %v111 = vld [vmem:[%s4 + $0x78] sm:$0xff]
  %v112 = vld [vmem:[%s4 + $0x80] sm:$0xf]
  %v113 = vld [vmem:[%s4 + $0x84] sm:$0xff]
  %v114 = vld [vmem:[%s4 + $0x8c] sm:$0xf]
  %v115 = vld [vmem:[%s4 + $0x90] sm:$0xff]
  %v116 = vld [vmem:[%s4 + $0x98] sm:$0xf]
  %v117 = vld [vmem:[%s4 + $0x9c] sm:$0xff]
  %v118 = vld [vmem:[%s4 + $0xa4] sm:$0xf]
  %v119 = vld [vmem:[%s4 + $0xa8] sm:$0xff]
  %v120 = vld [vmem:[%s4 + $0xb0] sm:$0xf]
  %v121 = vld [vmem:[%s4 + $0xb4] sm:$0xff]
  %v122 = vld [vmem:[%s4 + $0xbc] sm:$0xf]
  %v123 = vld [vmem:[%s4 + $0xc0] sm:$0xff]
  %v124 = vld [vmem:[%s4 + $0xc8] sm:$0xf]
  %v125 = vld [vmem:[%s4 + $0xcc] sm:$0xff]
  %v126 = vld [vmem:[%s4 + $0xd4] sm:$0xf]
  %v127 = vld [vmem:[%s4 + $0xd8] sm:$0xff]
  %v128 = vld [vmem:[%s4 + $0xe0] sm:$0xf]
  %v129 = vld [vmem:[%s4 + $0xe4] sm:$0xff]
  %v130 = vld [vmem:[%s4 + $0xec] sm:$0xf]
  %v131 = vld [vmem:[%s4 + $0xf0] sm:$0xff]
  %v132 = vld [vmem:[%s4 + $0xf8] sm:$0xf]
  %v133 = vld [vmem:[%s4 + $0xfc] sm:$0xff]
  %v134 = vld [vmem:[%s4 + $0x104] sm:$0xf]
  %v135 = vld [vmem:[%s4 + $0x108] sm:$0xff]
  %v136 = vld [vmem:[%s4 + $0x110] sm:$0xf]
  %v137 = vld [vmem:[%s4 + $0x114] sm:$0xff]
  %v138 = vld [vmem:[%s4 + $0x11c] sm:$0xf]
  %v139 = vld [vmem:[%s4 + $0x120] sm:$0xff]
  %v140 = vld [vmem:[%s4 + $0x128] sm:$0xf]
  %v141 = vld [vmem:[%s4 + $0x12c] sm:$0xff]
  %v142 = vld [vmem:[%s4 + $0x134] sm:$0xf]
  %v143 = vld [vmem:[%s4 + $0x138] sm:$0xff]
  %v144 = vld [vmem:[%s4 + $0x140] sm:$0xf]
  %v145 = vld [vmem:[%s4 + $0x144] sm:$0xff]
  %v146 = vld [vmem:[%s4 + $0x14c] sm:$0xf]
  %v147 = vld [vmem:[%s4 + $0x150] sm:$0xff]
  %v148 = vld [vmem:[%s4 + $0x158] sm:$0xf]
  %v149 = vld [vmem:[%s4 + $0x15c] sm:$0xff]
  %v150 = vld [vmem:[%s4 + $0x164] sm:$0xf]
  %v151 = vld [vmem:[%s4 + $0x168] sm:$0xff]
  %v152 = vld [vmem:[%s4 + $0x170] sm:$0xf]
  %v153 = vld [vmem:[%s4 + $0x174] sm:$0xff]
  %v154 = vld [vmem:[%s4 + $0x17c] sm:$0xf]
  %v155 = vld [vmem:[%s4 + $0x180] sm:$0xff]
  %v156 = vld [vmem:[%s4 + $0x188] sm:$0xf]
  %v157 = vld [vmem:[%s4 + $0x18c] sm:$0xff]
  %v158 = vld [vmem:[%s4 + $0x194] sm:$0xf]
  %v159 = vld [vmem:[%s4 + $0x198] sm:$0xff]
  %v160 = vld [vmem:[%s4 + $0x1a0] sm:$0xf]
  %v161 = vld [vmem:[%s4 + $0x1a4] sm:$0xff]
  %v162 = vld [vmem:[%s4 + $0x1ac] sm:$0xf]
  %v163 = vld [vmem:[%s4 + $0x1b0] sm:$0xff]
  %v164 = vld [vmem:[%s4 + $0x1b8] sm:$0xf]
  %v165 = vld [vmem:[%s4 + $0x1bc] sm:$0xff]
  %v166 = vld [vmem:[%s4 + $0x1c4] sm:$0xf]
  %v167 = vld [vmem:[%s4 + $0x1c8] sm:$0xff]
  %v168 = vld [vmem:[%s4 + $0x1d0] sm:$0xf]
  %v169 = vld [vmem:[%s4 + $0x1d4] sm:$0xff]
  %v170 = vld [vmem:[%s4 + $0x1dc] sm:$0xf]
  %v171 = vld [vmem:[%s4 + $0x1e0] sm:$0xff]
  %v172 = vld [vmem:[%s4 + $0x1e8] sm:$0xf]
  %v173 = vld [vmem:[%s4 + $0x1ec] sm:$0xff]
  %v174 = vld [vmem:[%s4 + $0x1f4] sm:$0xf]
  %v175 = vld [vmem:[%s4 + $0x1f8] sm:$0xff]
  %v176 = vld [vmem:[%s4 + $0x200] sm:$0xf]
  %v177 = vld [vmem:[%s4 + $0x204] sm:$0xff]
  %v178 = vld [vmem:[%s4 + $0x20c] sm:$0xf]
  %v179 = vld [vmem:[%s4 + $0x210] sm:$0xff]
  %v180 = vld [vmem:[%s4 + $0x218] sm:$0xf]
  %v181 = vld [vmem:[%s4 + $0x21c] sm:$0xff]
  %v182 = vld [vmem:[%s4 + $0x224] sm:$0xf]
  %v183 = vld [vmem:[%s4 + $0x228] sm:$0xff]
  %v184 = vld [vmem:[%s4 + $0x230] sm:$0xf]
  %v185 = vld [vmem:[%s4 + $0x234] sm:$0xff]
  %v186 = vld [vmem:[%s4 + $0x23c] sm:$0xf]
  %v187 = vld [vmem:[%s4 + $0x240] sm:$0xff]
  %v188 = vld [vmem:[%s4 + $0x248] sm:$0xf]
  %v189 = vld [vmem:[%s4 + $0x24c] sm:$0xff]
  %v190 = vld [vmem:[%s4 + $0x254] sm:$0xf]
  %v191 = vld [vmem:[%s4 + $0x258] sm:$0xff]
  %v192 = vld [vmem:[%s4 + $0x260] sm:$0xf]
  %v193 = vld [vmem:[%s4 + $0x264] sm:$0xff]
  %v194 = vld [vmem:[%s4 + $0x26c] sm:$0xf]
  %v195 = vld [vmem:[%s4 + $0x270] sm:$0xff]
  %v196 = vld [vmem:[%s4 + $0x278] sm:$0xf]
  %v197 = vld [vmem:[%s4 + $0x27c] sm:$0xff]
  %v198 = vld [vmem:[%s4 + $0x284] sm:$0xf]
  %v199 = vld [vmem:[%s4 + $0x288] sm:$0xff]
  %v200 = vld [vmem:[%s4 + $0x290] sm:$0xf]
  %v201 = vld [vmem:[%s4 + $0x294] sm:$0xff]
  %v202 = vld [vmem:[%s4 + $0x29c] sm:$0xf]
  %v203 = vld [vmem:[%s4 + $0x2a0] sm:$0xff]
  %v204 = vld [vmem:[%s4 + $0x2a8] sm:$0xf]
  %v205 = vld [vmem:[%s4 + $0x2ac] sm:$0xff]
  %v206 = vld [vmem:[%s4 + $0x2b4] sm:$0xf]
  %v207 = vld [vmem:[%s4 + $0x2b8] sm:$0xff]
  %v208 = vld [vmem:[%s4 + $0x2c0] sm:$0xf]
  %v209 = vld [vmem:[%s4 + $0x2c4] sm:$0xff]
  %v210 = vld [vmem:[%s4 + $0x2cc] sm:$0xf]
  %v211 = vld [vmem:[%s4 + $0x2d0] sm:$0xff]
  %v212 = vld [vmem:[%s4 + $0x2d8] sm:$0xf]
  %v213 = vld [vmem:[%s4 + $0x2dc] sm:$0xff]
  %v214 = vld [vmem:[%s4 + $0x2e4] sm:$0xf]
  %v215 = vld [vmem:[%s4 + $0x2e8] sm:$0xff]
  %v216 = vld [vmem:[%s4 + $0x2f0] sm:$0xf]
  %v217 = vld [vmem:[%s4 + $0x2f4] sm:$0xff]
  %v218 = vld [vmem:[%s4 + $0x2fc] sm:$0xf]
  %v219 = vld [vmem:[%s4 + $0x300] sm:$0xff]
  %v220 = vld [vmem:[%s4 + $0x308] sm:$0xf]
  %v221 = vld [vmem:[%s4 + $0x30c] sm:$0xff]
  %v222 = vld [vmem:[%s4 + $0x314] sm:$0xf]
  %v223 = vld [vmem:[%s4 + $0x318] sm:$0xff]
  %v224 = vld [vmem:[%s4 + $0x320] sm:$0xf]
  %v225 = vld [vmem:[%s4 + $0x324] sm:$0xff]
  %v226 = vld [vmem:[%s4 + $0x32c] sm:$0xf]
  %v227 = vld [vmem:[%s4 + $0x330] sm:$0xff]
  %v228 = vld [vmem:[%s4 + $0x338] sm:$0xf]
  %v229 = vld [vmem:[%s4 + $0x33c] sm:$0xff]
  %v230 = vld [vmem:[%s4 + $0x344] sm:$0xf]
  %v231 = vld [vmem:[%s4 + $0x348] sm:$0xff]
  %v232 = vld [vmem:[%s4 + $0x350] sm:$0xf]
  %v233 = vld [vmem:[%s4 + $0x354] sm:$0xff]
  %v234 = vld [vmem:[%s4 + $0x35c] sm:$0xf]
  %v235 = vld [vmem:[%s4 + $0x360] sm:$0xff]
  %v236 = vld [vmem:[%s4 + $0x368] sm:$0xf]
  %v237 = vld [vmem:[%s4 + $0x36c] sm:$0xff]
  %v238 = vld [vmem:[%s4 + $0x374] sm:$0xf]
  %v239 = vld [vmem:[%s4 + $0x378] sm:$0xff]
  %v240 = vld [vmem:[%s4 + $0x380] sm:$0xf]
  %v241 = vld [vmem:[%s4 + $0x384] sm:$0xff]
  %v242 = vld [vmem:[%s4 + $0x38c] sm:$0xf]
  %v243 = vld [vmem:[%s4 + $0x390] sm:$0xff]
  %v244 = vld [vmem:[%s4 + $0x398] sm:$0xf]
  %v245 = vld [vmem:[%s4 + $0x39c] sm:$0xff]
  %v246 = vld [vmem:[%s4 + $0x3a4] sm:$0xf]
  %v247 = vld [vmem:[%s4 + $0x3a8] sm:$0xff]
  %v248 = vld [vmem:[%s4 + $0x3b0] sm:$0xf]
  %v249 = vld [vmem:[%s4 + $0x3b4] sm:$0xff]
  %v250 = vld [vmem:[%s4 + $0x3bc] sm:$0xf]
  %v251 = vld [vmem:[%s4 + $0x3c0] sm:$0xff]
  %v252 = vld [vmem:[%s4 + $0x3c8] sm:$0xf]
  %v253 = vld [vmem:[%s4 + $0x3cc] sm:$0xff]
  %v254 = vld [vmem:[%s4 + $0x3d4] sm:$0xf]
  %v255 = vld [vmem:[%s4 + $0x3d8] sm:$0xff]
  %v256 = vld [vmem:[%s4 + $0x3e0] sm:$0xf]
  %v257 = vld [vmem:[%s4 + $0x3e4] sm:$0xff]
  %v258 = vld [vmem:[%s4 + $0x3ec] sm:$0xf]
  %v259 = vld [vmem:[%s4 + $0x3f0] sm:$0xff]
  %v260 = vld [vmem:[%s4 + $0x3f8] sm:$0xf]
  %v261 = vld [vmem:[%s4 + $0x3fc] sm:$0xff]
  %v262 = vld [vmem:[%s4 + $0x404] sm:$0xf]
  %v263 = vld [vmem:[%s4 + $0x408] sm:$0xff]
  %v264 = vld [vmem:[%s4 + $0x410] sm:$0xf]
  %v265 = vld [vmem:[%s4 + $0x414] sm:$0xff]
  %v266 = vld [vmem:[%s4 + $0x41c] sm:$0xf]
  %v267 = vld [vmem:[%s4 + $0x420] sm:$0xff]
  %v268 = vld [vmem:[%s4 + $0x428] sm:$0xf]
  %v269 = vld [vmem:[%s4 + $0x42c] sm:$0xff]
  %v270 = vld [vmem:[%s4 + $0x434] sm:$0xf]
  %v271 = vld [vmem:[%s4 + $0x438] sm:$0xff]
  %v272 = vld [vmem:[%s4 + $0x440] sm:$0xf]
  %v273 = vld [vmem:[%s4 + $0x444] sm:$0xff]
  %v274 = vld [vmem:[%s4 + $0x44c] sm:$0xf]
  %v275 = vld [vmem:[%s4 + $0x450] sm:$0xff]
  %v276 = vld [vmem:[%s4 + $0x458] sm:$0xf]
  %v277 = vld [vmem:[%s4 + $0x45c] sm:$0xff]
  %v278 = vld [vmem:[%s4 + $0x464] sm:$0xf]
  %v279 = vld [vmem:[%s4 + $0x468] sm:$0xff]
  %v280 = vld [vmem:[%s4 + $0x470] sm:$0xf]
  %v281 = vld [vmem:[%s4 + $0x474] sm:$0xff]
  %v282 = vld [vmem:[%s4 + $0x47c] sm:$0xf]
  %v283 = vld [vmem:[%s4 + $0x480] sm:$0xff]
  %v284 = vld [vmem:[%s4 + $0x488] sm:$0xf]
  %v285 = vld [vmem:[%s4 + $0x48c] sm:$0xff]
  %v286 = vld [vmem:[%s4 + $0x494] sm:$0xf]
  %v287 = vld [vmem:[%s4 + $0x498] sm:$0xff]
  %v288 = vld [vmem:[%s4 + $0x4a0] sm:$0xf]
  %v289 = vld [vmem:[%s4 + $0x4a4] sm:$0xff]
  %v290 = vld [vmem:[%s4 + $0x4ac] sm:$0xf]
  %v291 = vld [vmem:[%s4 + $0x4b0] sm:$0xff]
  %v292 = vld [vmem:[%s4 + $0x4b8] sm:$0xf]
  %v293 = vld [vmem:[%s4 + $0x4bc] sm:$0xff]
  %v294 = vld [vmem:[%s4 + $0x4c4] sm:$0xf]
  %v295 = vld [vmem:[%s4 + $0x4c8] sm:$0xff]
  %v296 = vld [vmem:[%s4 + $0x4d0] sm:$0xf]
  %v297 = vld [vmem:[%s4 + $0x4d4] sm:$0xff]
  %v298 = vld [vmem:[%s4 + $0x4dc] sm:$0xf]
  %v299 = vld [vmem:[%s4 + $0x4e0] sm:$0xff]
  %v300 = vld [vmem:[%s4 + $0x4e8] sm:$0xf]
  %v301 = vld [vmem:[%s4 + $0x4ec] sm:$0xff]
  %v302 = vld [vmem:[%s4 + $0x4f4] sm:$0xf]
  %v303 = vld [vmem:[%s4 + $0x4f8] sm:$0xff]
  %v304 = vld [vmem:[%s4 + $0x500] sm:$0xf]
  %v305 = vld [vmem:[%s4 + $0x504] sm:$0xff]
  %v306 = vld [vmem:[%s4 + $0x50c] sm:$0xf]
  %v307 = vld [vmem:[%s4 + $0x510] sm:$0xff]
  %v308 = vld [vmem:[%s4 + $0x518] sm:$0xf]
  %v309 = vld [vmem:[%s4 + $0x51c] sm:$0xff]
  %v310 = vld [vmem:[%s4 + $0x524] sm:$0xf]
  %v311 = vld [vmem:[%s4 + $0x528] sm:$0xff]
  %v312 = vld [vmem:[%s4 + $0x530] sm:$0xf]
  %v313 = vld [vmem:[%s4 + $0x534] sm:$0xff]
  %v314 = vld [vmem:[%s4 + $0x53c] sm:$0xf]
  %v315 = vld [vmem:[%s4 + $0x540] sm:$0xff]
  %v316 = vld [vmem:[%s4 + $0x548] sm:$0xf]
  %v317 = vld [vmem:[%s4 + $0x54c] sm:$0xff]
  %v318 = vld [vmem:[%s4 + $0x554] sm:$0xf]
  %v319 = vld [vmem:[%s4 + $0x558] sm:$0xff]
  %v320 = vld [vmem:[%s4 + $0x560] sm:$0xf]
  %v321 = vld [vmem:[%s4 + $0x564] sm:$0xff]
  %v322 = vld [vmem:[%s4 + $0x56c] sm:$0xf]
  %v323 = vld [vmem:[%s4 + $0x570] sm:$0xff]
  %v324 = vld [vmem:[%s4 + $0x578] sm:$0xf]
  %v325 = vld [vmem:[%s4 + $0x57c] sm:$0xff]
  %v326 = vld [vmem:[%s4 + $0x584] sm:$0xf]
  %v327 = vld [vmem:[%s4 + $0x588] sm:$0xff]
  %v328 = vld [vmem:[%s4 + $0x590] sm:$0xf]
  %v329 = vld [vmem:[%s4 + $0x594] sm:$0xff]
  %v330 = vld [vmem:[%s4 + $0x59c] sm:$0xf]
  %v331 = vld [vmem:[%s4 + $0x5a0] sm:$0xff]
  %v332 = vld [vmem:[%s4 + $0x5a8] sm:$0xf]
  %v333 = vld [vmem:[%s4 + $0x5ac] sm:$0xff]
  %v334 = vld [vmem:[%s4 + $0x5b4] sm:$0xf]
  %v335 = vld [vmem:[%s4 + $0x5b8] sm:$0xff]
  %v336 = vld [vmem:[%s4 + $0x5c0] sm:$0xf]
  %v337 = vld [vmem:[%s4 + $0x5c4] sm:$0xff]
  %v338 = vld [vmem:[%s4 + $0x5cc] sm:$0xf]
  %v339 = vld [vmem:[%s4 + $0x5d0] sm:$0xff]
  %v340 = vld [vmem:[%s4 + $0x5d8] sm:$0xf]
  %v341 = vld [vmem:[%s4 + $0x5dc] sm:$0xff]
  %v342 = vld [vmem:[%s4 + $0x5e4] sm:$0xf]
  %v343 = vld [vmem:[%s4 + $0x5e8] sm:$0xff]
  %v344 = vld [vmem:[%s4 + $0x5f0] sm:$0xf]
  %v345 = vld [vmem:[%s4 + $0x5f4] sm:$0xff]
  %v346 = vld [vmem:[%s4 + $0x5fc] sm:$0xf]
  %v355 = vunpack.c.l.b16 %v71
  %v356 = vunpack.c.h.b16 %v71
  %v357 = vunpack.c.l.b16 %v72
  %v358 = vunpack.c.h.b16 %v72
  %v359 = vunpack.c.l.b16 %v73
  %v360 = vunpack.c.h.b16 %v73
  %v361 = vunpack.c.l.b16 %v74
  %v362 = vunpack.c.h.b16 %v74
  %v363 = vunpack.c.l.b16 %v75
  %v364 = vunpack.c.h.b16 %v75
  %v365 = vunpack.c.l.b16 %v76
  %v366 = vunpack.c.h.b16 %v76
  %v367 = vunpack.c.l.b16 %v77
  %v368 = vunpack.c.h.b16 %v77
  %v369 = vunpack.c.l.b16 %v78
  %v370 = vunpack.c.h.b16 %v78
  %v371 = vpack.c.b16 %v363, %v355
  %v372 = vpack.c.b16 %v364, %v356
  %v373 = vpack.c.b16 %v365, %v357
  %v374 = vpack.c.b16 %v366, %v358
  %v375 = vpack.c.b16 %v367, %v359
  %v376 = vpack.c.b16 %v368, %v360
  %v377 = vpack.c.b16 %v369, %v361
  %v378 = vpack.c.b16 %v370, %v362
  %v643 = vunpack.c.l.b16 %v91
  %v644 = vunpack.c.h.b16 %v91
  %v645 = vunpack.c.l.b16 %v92
  %v646 = vunpack.c.l.b16 %v93
  %v647 = vunpack.c.h.b16 %v93
  %v648 = vunpack.c.l.b16 %v94
  %v649 = vunpack.c.l.b16 %v95
  %v650 = vunpack.c.h.b16 %v95
  %v651 = vunpack.c.l.b16 %v96
  %v652 = vunpack.c.l.b16 %v97
  %v653 = vunpack.c.h.b16 %v97
  %v654 = vunpack.c.l.b16 %v98
  %v655 = vunpack.c.l.b16 %v99
  %v656 = vunpack.c.h.b16 %v99
  %v657 = vunpack.c.l.b16 %v100
  %v658 = vunpack.c.l.b16 %v101
  %v659 = vunpack.c.h.b16 %v101
  %v660 = vunpack.c.l.b16 %v102
  %v661 = vunpack.c.l.b16 %v103
  %v662 = vunpack.c.h.b16 %v103
  %v663 = vunpack.c.l.b16 %v104
  %v664 = vunpack.c.l.b16 %v105
  %v665 = vunpack.c.h.b16 %v105
  %v666 = vunpack.c.l.b16 %v106
  %v667 = vunpack.c.l.b16 %v107
  %v668 = vunpack.c.h.b16 %v107
  %v669 = vunpack.c.l.b16 %v108
  %v670 = vunpack.c.l.b16 %v109
  %v671 = vunpack.c.h.b16 %v109
  %v672 = vunpack.c.l.b16 %v110
  %v673 = vunpack.c.l.b16 %v111
  %v674 = vunpack.c.h.b16 %v111
  %v675 = vunpack.c.l.b16 %v112
  %v676 = vunpack.c.l.b16 %v113
  %v677 = vunpack.c.h.b16 %v113
  %v678 = vunpack.c.l.b16 %v114
  %v679 = vunpack.c.l.b16 %v115
  %v680 = vunpack.c.h.b16 %v115
  %v681 = vunpack.c.l.b16 %v116
  %v682 = vunpack.c.l.b16 %v117
  %v683 = vunpack.c.h.b16 %v117
  %v684 = vunpack.c.l.b16 %v118
  %v685 = vunpack.c.l.b16 %v119
  %v686 = vunpack.c.h.b16 %v119
  %v687 = vunpack.c.l.b16 %v120
  %v688 = vunpack.c.l.b16 %v121
  %v689 = vunpack.c.h.b16 %v121
  %v690 = vunpack.c.l.b16 %v122
  %v691 = vunpack.c.l.b16 %v123
  %v692 = vunpack.c.h.b16 %v123
  %v693 = vunpack.c.l.b16 %v124
  %v694 = vunpack.c.l.b16 %v125
  %v695 = vunpack.c.h.b16 %v125
  %v696 = vunpack.c.l.b16 %v126
  %v697 = vunpack.c.l.b16 %v127
  %v698 = vunpack.c.h.b16 %v127
  %v699 = vunpack.c.l.b16 %v128
  %v700 = vunpack.c.l.b16 %v129
  %v701 = vunpack.c.h.b16 %v129
  %v702 = vunpack.c.l.b16 %v130
  %v703 = vunpack.c.l.b16 %v131
  %v704 = vunpack.c.h.b16 %v131
  %v705 = vunpack.c.l.b16 %v132
  %v706 = vunpack.c.l.b16 %v133
  %v707 = vunpack.c.h.b16 %v133
  %v708 = vunpack.c.l.b16 %v134
  %v709 = vunpack.c.l.b16 %v135
  %v710 = vunpack.c.h.b16 %v135
  %v711 = vunpack.c.l.b16 %v136
  %v712 = vunpack.c.l.b16 %v137
  %v713 = vunpack.c.h.b16 %v137
  %v714 = vunpack.c.l.b16 %v138
  %v715 = vunpack.c.l.b16 %v139
  %v716 = vunpack.c.h.b16 %v139
  %v717 = vunpack.c.l.b16 %v140
  %v718 = vunpack.c.l.b16 %v141
  %v719 = vunpack.c.h.b16 %v141
  %v720 = vunpack.c.l.b16 %v142
  %v721 = vunpack.c.l.b16 %v143
  %v722 = vunpack.c.h.b16 %v143
  %v723 = vunpack.c.l.b16 %v144
  %v724 = vunpack.c.l.b16 %v145
  %v725 = vunpack.c.h.b16 %v145
  %v726 = vunpack.c.l.b16 %v146
  %v727 = vunpack.c.l.b16 %v147
  %v728 = vunpack.c.h.b16 %v147
  %v729 = vunpack.c.l.b16 %v148
  %v730 = vunpack.c.l.b16 %v149
  %v731 = vunpack.c.h.b16 %v149
  %v732 = vunpack.c.l.b16 %v150
  %v733 = vunpack.c.l.b16 %v151
  %v734 = vunpack.c.h.b16 %v151
  %v735 = vunpack.c.l.b16 %v152
  %v736 = vunpack.c.l.b16 %v153
  %v737 = vunpack.c.h.b16 %v153
  %v738 = vunpack.c.l.b16 %v154
  %v739 = vunpack.c.l.b16 %v155
  %v740 = vunpack.c.h.b16 %v155
  %v741 = vunpack.c.l.b16 %v156
  %v742 = vunpack.c.l.b16 %v157
  %v743 = vunpack.c.h.b16 %v157
  %v744 = vunpack.c.l.b16 %v158
  %v745 = vunpack.c.l.b16 %v159
  %v746 = vunpack.c.h.b16 %v159
  %v747 = vunpack.c.l.b16 %v160
  %v748 = vunpack.c.l.b16 %v161
  %v749 = vunpack.c.h.b16 %v161
  %v750 = vunpack.c.l.b16 %v162
  %v751 = vunpack.c.l.b16 %v163
  %v752 = vunpack.c.h.b16 %v163
  %v753 = vunpack.c.l.b16 %v164
  %v754 = vunpack.c.l.b16 %v165
  %v755 = vunpack.c.h.b16 %v165
  %v756 = vunpack.c.l.b16 %v166
  %v757 = vunpack.c.l.b16 %v167
  %v758 = vunpack.c.h.b16 %v167
  %v759 = vunpack.c.l.b16 %v168
  %v760 = vunpack.c.l.b16 %v169
  %v761 = vunpack.c.h.b16 %v169
  %v762 = vunpack.c.l.b16 %v170
  %v763 = vunpack.c.l.b16 %v171
  %v764 = vunpack.c.h.b16 %v171
  %v765 = vunpack.c.l.b16 %v172
  %v766 = vunpack.c.l.b16 %v173
  %v767 = vunpack.c.h.b16 %v173
  %v768 = vunpack.c.l.b16 %v174
  %v769 = vunpack.c.l.b16 %v175
  %v770 = vunpack.c.h.b16 %v175
  %v771 = vunpack.c.l.b16 %v176
  %v772 = vunpack.c.l.b16 %v177
  %v773 = vunpack.c.h.b16 %v177
  %v774 = vunpack.c.l.b16 %v178
  %v775 = vunpack.c.l.b16 %v179
  %v776 = vunpack.c.h.b16 %v179
  %v777 = vunpack.c.l.b16 %v180
  %v778 = vunpack.c.l.b16 %v181
  %v779 = vunpack.c.h.b16 %v181
  %v780 = vunpack.c.l.b16 %v182
  %v781 = vunpack.c.l.b16 %v183
  %v782 = vunpack.c.h.b16 %v183
  %v783 = vunpack.c.l.b16 %v184
  %v784 = vunpack.c.l.b16 %v185
  %v785 = vunpack.c.h.b16 %v185
  %v786 = vunpack.c.l.b16 %v186
  %v787 = vunpack.c.l.b16 %v187
  %v788 = vunpack.c.h.b16 %v187
  %v789 = vunpack.c.l.b16 %v188
  %v790 = vunpack.c.l.b16 %v189
  %v791 = vunpack.c.h.b16 %v189
  %v792 = vunpack.c.l.b16 %v190
  %v793 = vunpack.c.l.b16 %v191
  %v794 = vunpack.c.h.b16 %v191
  %v795 = vunpack.c.l.b16 %v192
  %v796 = vunpack.c.l.b16 %v193
  %v797 = vunpack.c.h.b16 %v193
  %v798 = vunpack.c.l.b16 %v194
  %v799 = vunpack.c.l.b16 %v195
  %v800 = vunpack.c.h.b16 %v195
  %v801 = vunpack.c.l.b16 %v196
  %v802 = vunpack.c.l.b16 %v197
  %v803 = vunpack.c.h.b16 %v197
  %v804 = vunpack.c.l.b16 %v198
  %v805 = vunpack.c.l.b16 %v199
  %v806 = vunpack.c.h.b16 %v199
  %v807 = vunpack.c.l.b16 %v200
  %v808 = vunpack.c.l.b16 %v201
  %v809 = vunpack.c.h.b16 %v201
  %v810 = vunpack.c.l.b16 %v202
  %v811 = vunpack.c.l.b16 %v203
  %v812 = vunpack.c.h.b16 %v203
  %v813 = vunpack.c.l.b16 %v204
  %v814 = vunpack.c.l.b16 %v205
  %v815 = vunpack.c.h.b16 %v205
  %v816 = vunpack.c.l.b16 %v206
  %v817 = vunpack.c.l.b16 %v207
  %v818 = vunpack.c.h.b16 %v207
  %v819 = vunpack.c.l.b16 %v208
  %v820 = vunpack.c.l.b16 %v209
  %v821 = vunpack.c.h.b16 %v209
  %v822 = vunpack.c.l.b16 %v210
  %v823 = vunpack.c.l.b16 %v211
  %v824 = vunpack.c.h.b16 %v211
  %v825 = vunpack.c.l.b16 %v212
  %v826 = vunpack.c.l.b16 %v213
  %v827 = vunpack.c.h.b16 %v213
  %v828 = vunpack.c.l.b16 %v214
  %v829 = vunpack.c.l.b16 %v215
  %v830 = vunpack.c.h.b16 %v215
  %v831 = vunpack.c.l.b16 %v216
  %v832 = vunpack.c.l.b16 %v217
  %v833 = vunpack.c.h.b16 %v217
  %v834 = vunpack.c.l.b16 %v218
  %v835 = vunpack.c.l.b16 %v219
  %v836 = vunpack.c.h.b16 %v219
  %v837 = vunpack.c.l.b16 %v220
  %v838 = vunpack.c.l.b16 %v221
  %v839 = vunpack.c.h.b16 %v221
  %v840 = vunpack.c.l.b16 %v222
  %v841 = vunpack.c.l.b16 %v223
  %v842 = vunpack.c.h.b16 %v223
  %v843 = vunpack.c.l.b16 %v224
  %v844 = vunpack.c.l.b16 %v225
  %v845 = vunpack.c.h.b16 %v225
  %v846 = vunpack.c.l.b16 %v226
  %v847 = vunpack.c.l.b16 %v227
  %v848 = vunpack.c.h.b16 %v227
  %v849 = vunpack.c.l.b16 %v228
  %v850 = vunpack.c.l.b16 %v229
  %v851 = vunpack.c.h.b16 %v229
  %v852 = vunpack.c.l.b16 %v230
  %v853 = vunpack.c.l.b16 %v231
  %v854 = vunpack.c.h.b16 %v231
  %v855 = vunpack.c.l.b16 %v232
  %v856 = vunpack.c.l.b16 %v233
  %v857 = vunpack.c.h.b16 %v233
  %v858 = vunpack.c.l.b16 %v234
  %v859 = vunpack.c.l.b16 %v235
  %v860 = vunpack.c.h.b16 %v235
  %v861 = vunpack.c.l.b16 %v236
  %v862 = vunpack.c.l.b16 %v237
  %v863 = vunpack.c.h.b16 %v237
  %v864 = vunpack.c.l.b16 %v238
  %v865 = vunpack.c.l.b16 %v239
  %v866 = vunpack.c.h.b16 %v239
  %v867 = vunpack.c.l.b16 %v240
  %v868 = vunpack.c.l.b16 %v241
  %v869 = vunpack.c.h.b16 %v241
  %v870 = vunpack.c.l.b16 %v242
  %v871 = vunpack.c.l.b16 %v243
  %v872 = vunpack.c.h.b16 %v243
  %v873 = vunpack.c.l.b16 %v244
  %v874 = vunpack.c.l.b16 %v245
  %v875 = vunpack.c.h.b16 %v245
  %v876 = vunpack.c.l.b16 %v246
  %v877 = vunpack.c.l.b16 %v247
  %v878 = vunpack.c.h.b16 %v247
  %v879 = vunpack.c.l.b16 %v248
  %v880 = vunpack.c.l.b16 %v249
  %v881 = vunpack.c.h.b16 %v249
  %v882 = vunpack.c.l.b16 %v250
  %v883 = vunpack.c.l.b16 %v251
  %v884 = vunpack.c.h.b16 %v251
  %v885 = vunpack.c.l.b16 %v252
  %v886 = vunpack.c.l.b16 %v253
  %v887 = vunpack.c.h.b16 %v253
  %v888 = vunpack.c.l.b16 %v254
  %v889 = vunpack.c.l.b16 %v255
  %v890 = vunpack.c.h.b16 %v255
  %v891 = vunpack.c.l.b16 %v256
  %v892 = vunpack.c.l.b16 %v257
  %v893 = vunpack.c.h.b16 %v257
  %v894 = vunpack.c.l.b16 %v258
  %v895 = vunpack.c.l.b16 %v259
  %v896 = vunpack.c.h.b16 %v259
  %v897 = vunpack.c.l.b16 %v260
  %v898 = vunpack.c.l.b16 %v261
  %v899 = vunpack.c.h.b16 %v261
  %v900 = vunpack.c.l.b16 %v262
  %v901 = vunpack.c.l.b16 %v263
  %v902 = vunpack.c.h.b16 %v263
  %v903 = vunpack.c.l.b16 %v264
  %v904 = vunpack.c.l.b16 %v265
  %v905 = vunpack.c.h.b16 %v265
  %v906 = vunpack.c.l.b16 %v266
  %v907 = vunpack.c.l.b16 %v267
  %v908 = vunpack.c.h.b16 %v267
  %v909 = vunpack.c.l.b16 %v268
  %v910 = vunpack.c.l.b16 %v269
  %v911 = vunpack.c.h.b16 %v269
  %v912 = vunpack.c.l.b16 %v270
  %v913 = vunpack.c.l.b16 %v271
  %v914 = vunpack.c.h.b16 %v271
  %v915 = vunpack.c.l.b16 %v272
  %v916 = vunpack.c.l.b16 %v273
  %v917 = vunpack.c.h.b16 %v273
  %v918 = vunpack.c.l.b16 %v274
  %v919 = vunpack.c.l.b16 %v275
  %v920 = vunpack.c.h.b16 %v275
  %v921 = vunpack.c.l.b16 %v276
  %v922 = vunpack.c.l.b16 %v277
  %v923 = vunpack.c.h.b16 %v277
  %v924 = vunpack.c.l.b16 %v278
  %v925 = vunpack.c.l.b16 %v279
  %v926 = vunpack.c.h.b16 %v279
  %v927 = vunpack.c.l.b16 %v280
  %v928 = vunpack.c.l.b16 %v281
  %v929 = vunpack.c.h.b16 %v281
  %v930 = vunpack.c.l.b16 %v282
  %v931 = vunpack.c.l.b16 %v283
  %v932 = vunpack.c.h.b16 %v283
  %v933 = vunpack.c.l.b16 %v284
  %v934 = vunpack.c.l.b16 %v285
  %v935 = vunpack.c.h.b16 %v285
  %v936 = vunpack.c.l.b16 %v286
  %v937 = vunpack.c.l.b16 %v287
  %v938 = vunpack.c.h.b16 %v287
  %v939 = vunpack.c.l.b16 %v288
  %v940 = vunpack.c.l.b16 %v289
  %v941 = vunpack.c.h.b16 %v289
  %v942 = vunpack.c.l.b16 %v290
  %v943 = vunpack.c.l.b16 %v291
  %v944 = vunpack.c.h.b16 %v291
  %v945 = vunpack.c.l.b16 %v292
  %v946 = vunpack.c.l.b16 %v293
  %v947 = vunpack.c.h.b16 %v293
  %v948 = vunpack.c.l.b16 %v294
  %v949 = vunpack.c.l.b16 %v295
  %v950 = vunpack.c.h.b16 %v295
  %v951 = vunpack.c.l.b16 %v296
  %v952 = vunpack.c.l.b16 %v297
  %v953 = vunpack.c.h.b16 %v297
  %v954 = vunpack.c.l.b16 %v298
  %v955 = vunpack.c.l.b16 %v299
  %v956 = vunpack.c.h.b16 %v299
  %v957 = vunpack.c.l.b16 %v300
  %v958 = vunpack.c.l.b16 %v301
  %v959 = vunpack.c.h.b16 %v301
  %v960 = vunpack.c.l.b16 %v302
  %v961 = vunpack.c.l.b16 %v303
  %v962 = vunpack.c.h.b16 %v303
  %v963 = vunpack.c.l.b16 %v304
  %v964 = vunpack.c.l.b16 %v305
  %v965 = vunpack.c.h.b16 %v305
  %v966 = vunpack.c.l.b16 %v306
  %v967 = vunpack.c.l.b16 %v307
  %v968 = vunpack.c.h.b16 %v307
  %v969 = vunpack.c.l.b16 %v308
  %v970 = vunpack.c.l.b16 %v309
  %v971 = vunpack.c.h.b16 %v309
  %v972 = vunpack.c.l.b16 %v310
  %v973 = vunpack.c.l.b16 %v311
  %v974 = vunpack.c.h.b16 %v311
  %v975 = vunpack.c.l.b16 %v312
  %v976 = vunpack.c.l.b16 %v313
  %v977 = vunpack.c.h.b16 %v313
  %v978 = vunpack.c.l.b16 %v314
  %v979 = vunpack.c.l.b16 %v315
  %v980 = vunpack.c.h.b16 %v315
  %v981 = vunpack.c.l.b16 %v316
  %v982 = vunpack.c.l.b16 %v317
  %v983 = vunpack.c.h.b16 %v317
  %v984 = vunpack.c.l.b16 %v318
  %v985 = vunpack.c.l.b16 %v319
  %v986 = vunpack.c.h.b16 %v319
  %v987 = vunpack.c.l.b16 %v320
  %v988 = vunpack.c.l.b16 %v321
  %v989 = vunpack.c.h.b16 %v321
  %v990 = vunpack.c.l.b16 %v322
  %v991 = vunpack.c.l.b16 %v323
  %v992 = vunpack.c.h.b16 %v323
  %v993 = vunpack.c.l.b16 %v324
  %v994 = vunpack.c.l.b16 %v325
  %v995 = vunpack.c.h.b16 %v325
  %v996 = vunpack.c.l.b16 %v326
  %v997 = vunpack.c.l.b16 %v327
  %v998 = vunpack.c.h.b16 %v327
  %v999 = vunpack.c.l.b16 %v328
  %v1000 = vunpack.c.l.b16 %v329
  %v1001 = vunpack.c.h.b16 %v329
  %v1002 = vunpack.c.l.b16 %v330
  %v1003 = vunpack.c.l.b16 %v331
  %v1004 = vunpack.c.h.b16 %v331
  %v1005 = vunpack.c.l.b16 %v332
  %v1006 = vunpack.c.l.b16 %v333
  %v1007 = vunpack.c.h.b16 %v333
  %v1008 = vunpack.c.l.b16 %v334
  %v1009 = vunpack.c.l.b16 %v335
  %v1010 = vunpack.c.h.b16 %v335
  %v1011 = vunpack.c.l.b16 %v336
  %v1012 = vunpack.c.l.b16 %v337
  %v1013 = vunpack.c.h.b16 %v337
  %v1014 = vunpack.c.l.b16 %v338
  %v1015 = vunpack.c.l.b16 %v339
  %v1016 = vunpack.c.h.b16 %v339
  %v1017 = vunpack.c.l.b16 %v340
  %v1018 = vunpack.c.l.b16 %v341
  %v1019 = vunpack.c.h.b16 %v341
  %v1020 = vunpack.c.l.b16 %v342
  %v1021 = vunpack.c.l.b16 %v343
  %v1022 = vunpack.c.h.b16 %v343
  %v1023 = vunpack.c.l.b16 %v344
  %v1024 = vunpack.c.l.b16 %v345
  %v1025 = vunpack.c.h.b16 %v345
  %v1026 = vunpack.c.l.b16 %v346
  %v1027 = vpack.c.b16 %v646, %v643
  %v1028 = vpack.c.b16 %v647, %v644
  %v1029 = vpack.c.b16 %v648, %v645
  %v1030 = vpack.c.b16 %v652, %v649
  %v1031 = vpack.c.b16 %v653, %v650
  %v1032 = vpack.c.b16 %v654, %v651
  %v1033 = vpack.c.b16 %v658, %v655
  %v1034 = vpack.c.b16 %v659, %v656
  %v1035 = vpack.c.b16 %v660, %v657
  %v1036 = vpack.c.b16 %v664, %v661
  %v1037 = vpack.c.b16 %v665, %v662
  %v1038 = vpack.c.b16 %v666, %v663
  %v1039 = vpack.c.b16 %v670, %v667
  %v1040 = vpack.c.b16 %v671, %v668
  %v1041 = vpack.c.b16 %v672, %v669
  %v1042 = vpack.c.b16 %v676, %v673
  %v1043 = vpack.c.b16 %v677, %v674
  %v1044 = vpack.c.b16 %v678, %v675
  %v1045 = vpack.c.b16 %v682, %v679
  %v1046 = vpack.c.b16 %v683, %v680
  %v1047 = vpack.c.b16 %v684, %v681
  %v1048 = vpack.c.b16 %v688, %v685
  %v1049 = vpack.c.b16 %v689, %v686
  %v1050 = vpack.c.b16 %v690, %v687
  %v1051 = vpack.c.b16 %v694, %v691
  %v1052 = vpack.c.b16 %v695, %v692
  %v1053 = vpack.c.b16 %v696, %v693
  %v1054 = vpack.c.b16 %v700, %v697
  %v1055 = vpack.c.b16 %v701, %v698
  %v1056 = vpack.c.b16 %v702, %v699
  %v1057 = vpack.c.b16 %v706, %v703
  %v1058 = vpack.c.b16 %v707, %v704
  %v1059 = vpack.c.b16 %v708, %v705
  %v1060 = vpack.c.b16 %v712, %v709
  %v1061 = vpack.c.b16 %v713, %v710
  %v1062 = vpack.c.b16 %v714, %v711
  %v1063 = vpack.c.b16 %v718, %v715
  %v1064 = vpack.c.b16 %v719, %v716
  %v1065 = vpack.c.b16 %v720, %v717
  %v1066 = vpack.c.b16 %v724, %v721
  %v1067 = vpack.c.b16 %v725, %v722
  %v1068 = vpack.c.b16 %v726, %v723
  %v1069 = vpack.c.b16 %v730, %v727
  %v1070 = vpack.c.b16 %v731, %v728
  %v1071 = vpack.c.b16 %v732, %v729
  %v1072 = vpack.c.b16 %v736, %v733
  %v1073 = vpack.c.b16 %v737, %v734
  %v1074 = vpack.c.b16 %v738, %v735
  %v1075 = vpack.c.b16 %v742, %v739
  %v1076 = vpack.c.b16 %v743, %v740
  %v1077 = vpack.c.b16 %v744, %v741
  %v1078 = vpack.c.b16 %v748, %v745
  %v1079 = vpack.c.b16 %v749, %v746
  %v1080 = vpack.c.b16 %v750, %v747
  %v1081 = vpack.c.b16 %v754, %v751
  %v1082 = vpack.c.b16 %v755, %v752
  %v1083 = vpack.c.b16 %v756, %v753
  %v1084 = vpack.c.b16 %v760, %v757
  %v1085 = vpack.c.b16 %v761, %v758
  %v1086 = vpack.c.b16 %v762, %v759
  %v1087 = vpack.c.b16 %v766, %v763
  %v1088 = vpack.c.b16 %v767, %v764
  %v1089 = vpack.c.b16 %v768, %v765
  %v1090 = vpack.c.b16 %v772, %v769
  %v1091 = vpack.c.b16 %v773, %v770
  %v1092 = vpack.c.b16 %v774, %v771
  %v1093 = vpack.c.b16 %v778, %v775
  %v1094 = vpack.c.b16 %v779, %v776
  %v1095 = vpack.c.b16 %v780, %v777
  %v1096 = vpack.c.b16 %v784, %v781
  %v1097 = vpack.c.b16 %v785, %v782
  %v1098 = vpack.c.b16 %v786, %v783
  %v1099 = vpack.c.b16 %v790, %v787
  %v1100 = vpack.c.b16 %v791, %v788
  %v1101 = vpack.c.b16 %v792, %v789
  %v1102 = vpack.c.b16 %v796, %v793
  %v1103 = vpack.c.b16 %v797, %v794
  %v1104 = vpack.c.b16 %v798, %v795
  %v1105 = vpack.c.b16 %v802, %v799
  %v1106 = vpack.c.b16 %v803, %v800
  %v1107 = vpack.c.b16 %v804, %v801
  %v1108 = vpack.c.b16 %v808, %v805
  %v1109 = vpack.c.b16 %v809, %v806
  %v1110 = vpack.c.b16 %v810, %v807
  %v1111 = vpack.c.b16 %v814, %v811
  %v1112 = vpack.c.b16 %v815, %v812
  %v1113 = vpack.c.b16 %v816, %v813
  %v1114 = vpack.c.b16 %v820, %v817
  %v1115 = vpack.c.b16 %v821, %v818
  %v1116 = vpack.c.b16 %v822, %v819
  %v1117 = vpack.c.b16 %v826, %v823
  %v1118 = vpack.c.b16 %v827, %v824
  %v1119 = vpack.c.b16 %v828, %v825
  %v1120 = vpack.c.b16 %v832, %v829
  %v1121 = vpack.c.b16 %v833, %v830
  %v1122 = vpack.c.b16 %v834, %v831
  %v1123 = vpack.c.b16 %v838, %v835
  %v1124 = vpack.c.b16 %v839, %v836
  %v1125 = vpack.c.b16 %v840, %v837
  %v1126 = vpack.c.b16 %v844, %v841
  %v1127 = vpack.c.b16 %v845, %v842
  %v1128 = vpack.c.b16 %v846, %v843
  %v1129 = vpack.c.b16 %v850, %v847
  %v1130 = vpack.c.b16 %v851, %v848
  %v1131 = vpack.c.b16 %v852, %v849
  %v1132 = vpack.c.b16 %v856, %v853
  %v1133 = vpack.c.b16 %v857, %v854
  %v1134 = vpack.c.b16 %v858, %v855
  %v1135 = vpack.c.b16 %v862, %v859
  %v1136 = vpack.c.b16 %v863, %v860
  %v1137 = vpack.c.b16 %v864, %v861
  %v1138 = vpack.c.b16 %v868, %v865
  %v1139 = vpack.c.b16 %v869, %v866
  %v1140 = vpack.c.b16 %v870, %v867
  %v1141 = vpack.c.b16 %v874, %v871
  %v1142 = vpack.c.b16 %v875, %v872
  %v1143 = vpack.c.b16 %v876, %v873
  %v1144 = vpack.c.b16 %v880, %v877
  %v1145 = vpack.c.b16 %v881, %v878
  %v1146 = vpack.c.b16 %v882, %v879
  %v1147 = vpack.c.b16 %v886, %v883
  %v1148 = vpack.c.b16 %v887, %v884
  %v1149 = vpack.c.b16 %v888, %v885
  %v1150 = vpack.c.b16 %v892, %v889
  %v1151 = vpack.c.b16 %v893, %v890
  %v1152 = vpack.c.b16 %v894, %v891
  %v1153 = vpack.c.b16 %v898, %v895
  %v1154 = vpack.c.b16 %v899, %v896
  %v1155 = vpack.c.b16 %v900, %v897
  %v1156 = vpack.c.b16 %v904, %v901
  %v1157 = vpack.c.b16 %v905, %v902
  %v1158 = vpack.c.b16 %v906, %v903
  %v1159 = vpack.c.b16 %v910, %v907
  %v1160 = vpack.c.b16 %v911, %v908
  %v1161 = vpack.c.b16 %v912, %v909
  %v1162 = vpack.c.b16 %v916, %v913
  %v1163 = vpack.c.b16 %v917, %v914
  %v1164 = vpack.c.b16 %v918, %v915
  %v1165 = vpack.c.b16 %v922, %v919
  %v1166 = vpack.c.b16 %v923, %v920
  %v1167 = vpack.c.b16 %v924, %v921
  %v1168 = vpack.c.b16 %v928, %v925
  %v1169 = vpack.c.b16 %v929, %v926
  %v1170 = vpack.c.b16 %v930, %v927
  %v1171 = vpack.c.b16 %v934, %v931
  %v1172 = vpack.c.b16 %v935, %v932
  %v1173 = vpack.c.b16 %v936, %v933
  %v1174 = vpack.c.b16 %v940, %v937
  %v1175 = vpack.c.b16 %v941, %v938
  %v1176 = vpack.c.b16 %v942, %v939
  %v1177 = vpack.c.b16 %v946, %v943
  %v1178 = vpack.c.b16 %v947, %v944
  %v1179 = vpack.c.b16 %v948, %v945
  %v1180 = vpack.c.b16 %v952, %v949
  %v1181 = vpack.c.b16 %v953, %v950
  %v1182 = vpack.c.b16 %v954, %v951
  %v1183 = vpack.c.b16 %v958, %v955
  %v1184 = vpack.c.b16 %v959, %v956
  %v1185 = vpack.c.b16 %v960, %v957
  %v1186 = vpack.c.b16 %v964, %v961
  %v1187 = vpack.c.b16 %v965, %v962
  %v1188 = vpack.c.b16 %v966, %v963
  %v1189 = vpack.c.b16 %v970, %v967
  %v1190 = vpack.c.b16 %v971, %v968
  %v1191 = vpack.c.b16 %v972, %v969
  %v1192 = vpack.c.b16 %v976, %v973
  %v1193 = vpack.c.b16 %v977, %v974
  %v1194 = vpack.c.b16 %v978, %v975
  %v1195 = vpack.c.b16 %v982, %v979
  %v1196 = vpack.c.b16 %v983, %v980
  %v1197 = vpack.c.b16 %v984, %v981
  %v1198 = vpack.c.b16 %v988, %v985
  %v1199 = vpack.c.b16 %v989, %v986
  %v1200 = vpack.c.b16 %v990, %v987
  %v1201 = vpack.c.b16 %v994, %v991
  %v1202 = vpack.c.b16 %v995, %v992
  %v1203 = vpack.c.b16 %v996, %v993
  %v1204 = vpack.c.b16 %v1000, %v997
  %v1205 = vpack.c.b16 %v1001, %v998
  %v1206 = vpack.c.b16 %v1002, %v999
  %v1207 = vpack.c.b16 %v1006, %v1003
  %v1208 = vpack.c.b16 %v1007, %v1004
  %v1209 = vpack.c.b16 %v1008, %v1005
  %v1210 = vpack.c.b16 %v1012, %v1009
  %v1211 = vpack.c.b16 %v1013, %v1010
  %v1212 = vpack.c.b16 %v1014, %v1011
  %v1213 = vpack.c.b16 %v1018, %v1015
  %v1214 = vpack.c.b16 %v1019, %v1016
  %v1215 = vpack.c.b16 %v1020, %v1017
  %v1216 = vpack.c.b16 %v1024, %v1021
  %v1217 = vpack.c.b16 %v1025, %v1022
  %v1218 = vpack.c.b16 %v1026, %v1023
  %1411 = vmatprep.subr.bf16.mxu0 %v1028
  %1412 = vmatpush1.bf16.msra.mxu0 %v1027
  %1413 = vmatprep.subr.bf16.mxu0 %v1031
  %1414 = vmatpush1.bf16.msra.mxu0 %v1030
  %1415 = vmatprep.subr.bf16.mxu0 %v1034
  %1416 = vmatpush1.bf16.msra.mxu0 %v1033
  %1417 = vmatprep.subr.bf16.mxu0 %v1037
  %1418 = vmatpush1.bf16.msra.mxu0 %v1036
  %1419 = vmatprep.subr.bf16.mxu0 %v1040
  %1420 = vmatpush1.bf16.msra.mxu0 %v1039
  %1421 = vmatprep.subr.bf16.mxu0 %v1043
  %1422 = vmatpush1.bf16.msra.mxu0 %v1042
  %1423 = vmatprep.subr.bf16.mxu0 %v1046
  %1424 = vmatpush1.bf16.msra.mxu0 %v1045
  %1425 = vmatprep.subr.bf16.mxu0 %v1049
  %1426 = vmatpush1.bf16.msra.mxu0 %v1048
  %1427 = vmatprep.subr.bf16.mxu0 %v1052
  %1428 = vmatpush1.bf16.msra.mxu0 %v1051
  %1429 = vmatprep.subr.bf16.mxu0 %v1055
  %1430 = vmatpush1.bf16.msra.mxu0 %v1054
  %1431 = vmatprep.subr.bf16.mxu0 %v1058
  %1432 = vmatpush1.bf16.msra.mxu0 %v1057
  %1433 = vmatprep.subr.bf16.mxu0 %v1061
  %1434 = vmatpush1.bf16.msra.mxu0 %v1060
  %1435 = vmatprep.subr.bf16.mxu0 %v1064
  %1436 = vmatpush1.bf16.msra.mxu0 %v1063
  %1437 = vmatprep.subr.bf16.mxu0 %v1067
  %1438 = vmatpush1.bf16.msra.mxu0 %v1066
  %1439 = vmatprep.subr.bf16.mxu0 %v1070
  %1440 = vmatpush1.bf16.msra.mxu0 %v1069
  %1441 = vmatprep.subr.bf16.mxu0 %v1073
  %1442 = vmatpush1.bf16.msra.mxu0 %v1072
  %1443 = vmatprep.mubr.bf16.mxu0 %v372
  %1444 = vmatmul.mubr.bf16.gmra.mrb[0].mxu0 %v371
  %v1445 = vpop.f32.mrb[0].mxu0
  %v1446 = vadd.f32 0.0, %v1445
  %v1447 = vpop.f32.mrb[0].mxu0
  %v1448 = vadd.f32 0.0, %v1447
  %v1449 = vpop.f32.mrb[0].mxu0
  %v1450 = vadd.f32 0.0, %v1449
  %v1451 = vpop.f32.mrb[0].mxu0
  %v1452 = vadd.f32 0.0, %v1451
  %1453 = vdwg.mxu0
  %1454 = vmatprep.subr.bf16.mxu0 %v1076
  %1455 = vmatpush1.bf16.msra.mxu0 %v1075
  %1456 = vmatprep.subr.bf16.mxu0 %v1079
  %1457 = vmatpush1.bf16.msra.mxu0 %v1078
  %1458 = vmatprep.subr.bf16.mxu0 %v1082
  %1459 = vmatpush1.bf16.msra.mxu0 %v1081
  %1460 = vmatprep.subr.bf16.mxu0 %v1085
  %1461 = vmatpush1.bf16.msra.mxu0 %v1084
  %1462 = vmatprep.subr.bf16.mxu0 %v1088
  %1463 = vmatpush1.bf16.msra.mxu0 %v1087
  %1464 = vmatprep.subr.bf16.mxu0 %v1091
  %1465 = vmatpush1.bf16.msra.mxu0 %v1090
  %1466 = vmatprep.subr.bf16.mxu0 %v1094
  %1467 = vmatpush1.bf16.msra.mxu0 %v1093
  %1468 = vmatprep.subr.bf16.mxu0 %v1097
  %1469 = vmatpush1.bf16.msra.mxu0 %v1096
  %1470 = vmatprep.subr.bf16.mxu0 %v1100
  %1471 = vmatpush1.bf16.msra.mxu0 %v1099
  %1472 = vmatprep.subr.bf16.mxu0 %v1103
  %1473 = vmatpush1.bf16.msra.mxu0 %v1102
  %1474 = vmatprep.subr.bf16.mxu0 %v1106
  %1475 = vmatpush1.bf16.msra.mxu0 %v1105
  %1476 = vmatprep.subr.bf16.mxu0 %v1109
  %1477 = vmatpush1.bf16.msra.mxu0 %v1108
  %1478 = vmatprep.subr.bf16.mxu0 %v1112
  %1479 = vmatpush1.bf16.msra.mxu0 %v1111
  %1480 = vmatprep.subr.bf16.mxu0 %v1115
  %1481 = vmatpush1.bf16.msra.mxu0 %v1114
  %1482 = vmatprep.subr.bf16.mxu0 %v1118
  %1483 = vmatpush1.bf16.msra.mxu0 %v1117
  %1484 = vmatprep.subr.bf16.mxu0 %v1121
  %1485 = vmatpush1.bf16.msra.mxu0 %v1120
  %1486 = vmatprep.mubr.bf16.mxu0 %v374
  %1487 = vmatmul.mubr.bf16.gmra.mrb[0].mxu0 %v373
  %v1488 = vpop.f32.mrb[0].mxu0
  %v1489 = vadd.f32 %v1446, %v1488
  %v1490 = vpop.f32.mrb[0].mxu0
  %v1491 = vadd.f32 %v1448, %v1490
  %v1492 = vpop.f32.mrb[0].mxu0
  %v1493 = vadd.f32 %v1450, %v1492
  %v1494 = vpop.f32.mrb[0].mxu0
  %v1495 = vadd.f32 %v1452, %v1494
  %1496 = vdwg.mxu0
  %1497 = vmatprep.subr.bf16.mxu0 %v1124
  %1498 = vmatpush1.bf16.msra.mxu0 %v1123
  %1499 = vmatprep.subr.bf16.mxu0 %v1127
  %1500 = vmatpush1.bf16.msra.mxu0 %v1126
  %1501 = vmatprep.subr.bf16.mxu0 %v1130
  %1502 = vmatpush1.bf16.msra.mxu0 %v1129
  %1503 = vmatprep.subr.bf16.mxu0 %v1133
  %1504 = vmatpush1.bf16.msra.mxu0 %v1132
  %1505 = vmatprep.subr.bf16.mxu0 %v1136
  %1506 = vmatpush1.bf16.msra.mxu0 %v1135
  %1507 = vmatprep.subr.bf16.mxu0 %v1139
  %1508 = vmatpush1.bf16.msra.mxu0 %v1138
  %1509 = vmatprep.subr.bf16.mxu0 %v1142
  %1510 = vmatpush1.bf16.msra.mxu0 %v1141
  %1511 = vmatprep.subr.bf16.mxu0 %v1145
  %1512 = vmatpush1.bf16.msra.mxu0 %v1144
  %1513 = vmatprep.subr.bf16.mxu0 %v1148
  %1514 = vmatpush1.bf16.msra.mxu0 %v1147
  %1515 = vmatprep.subr.bf16.mxu0 %v1151
  %1516 = vmatpush1.bf16.msra.mxu0 %v1150
  %1517 = vmatprep.subr.bf16.mxu0 %v1154
  %1518 = vmatpush1.bf16.msra.mxu0 %v1153
  %1519 = vmatprep.subr.bf16.mxu0 %v1157
  %1520 = vmatpush1.bf16.msra.mxu0 %v1156
  %1521 = vmatprep.subr.bf16.mxu0 %v1160
  %1522 = vmatpush1.bf16.msra.mxu0 %v1159
  %1523 = vmatprep.subr.bf16.mxu0 %v1163
  %1524 = vmatpush1.bf16.msra.mxu0 %v1162
  %1525 = vmatprep.subr.bf16.mxu0 %v1166
  %1526 = vmatpush1.bf16.msra.mxu0 %v1165
  %1527 = vmatprep.subr.bf16.mxu0 %v1169
  %1528 = vmatpush1.bf16.msra.mxu0 %v1168
  %1529 = vmatprep.mubr.bf16.mxu0 %v376
  %1530 = vmatmul.mubr.bf16.gmra.mrb[0].mxu0 %v375
  %v1531 = vpop.f32.mrb[0].mxu0
  %v1532 = vadd.f32 %v1489, %v1531
  %v1533 = vpop.f32.mrb[0].mxu0
  %v1534 = vadd.f32 %v1491, %v1533
  %v1535 = vpop.f32.mrb[0].mxu0
  %v1536 = vadd.f32 %v1493, %v1535
  %v1537 = vpop.f32.mrb[0].mxu0
  %v1538 = vadd.f32 %v1495, %v1537
  %1539 = vdwg.mxu0
  %1540 = vmatprep.subr.bf16.mxu0 %v1172
  %1541 = vmatpush1.bf16.msra.mxu0 %v1171
  %1542 = vmatprep.subr.bf16.mxu0 %v1175
  %1543 = vmatpush1.bf16.msra.mxu0 %v1174
  %1544 = vmatprep.subr.bf16.mxu0 %v1178
  %1545 = vmatpush1.bf16.msra.mxu0 %v1177
  %1546 = vmatprep.subr.bf16.mxu0 %v1181
  %1547 = vmatpush1.bf16.msra.mxu0 %v1180
  %1548 = vmatprep.subr.bf16.mxu0 %v1184
  %1549 = vmatpush1.bf16.msra.mxu0 %v1183
  %1550 = vmatprep.subr.bf16.mxu0 %v1187
  %1551 = vmatpush1.bf16.msra.mxu0 %v1186
  %1552 = vmatprep.subr.bf16.mxu0 %v1190
  %1553 = vmatpush1.bf16.msra.mxu0 %v1189
  %1554 = vmatprep.subr.bf16.mxu0 %v1193
  %1555 = vmatpush1.bf16.msra.mxu0 %v1192
  %1556 = vmatprep.subr.bf16.mxu0 %v1196
  %1557 = vmatpush1.bf16.msra.mxu0 %v1195
  %1558 = vmatprep.subr.bf16.mxu0 %v1199
  %1559 = vmatpush1.bf16.msra.mxu0 %v1198
  %1560 = vmatprep.subr.bf16.mxu0 %v1202
  %1561 = vmatpush1.bf16.msra.mxu0 %v1201
  %1562 = vmatprep.subr.bf16.mxu0 %v1205
  %1563 = vmatpush1.bf16.msra.mxu0 %v1204
  %1564 = vmatprep.subr.bf16.mxu0 %v1208
  %1565 = vmatpush1.bf16.msra.mxu0 %v1207
  %1566 = vmatprep.subr.bf16.mxu0 %v1211
  %1567 = vmatpush1.bf16.msra.mxu0 %v1210
  %1568 = vmatprep.subr.bf16.mxu0 %v1214
  %1569 = vmatpush1.bf16.msra.mxu0 %v1213
  %1570 = vmatprep.subr.bf16.mxu0 %v1217
  %1571 = vmatpush1.bf16.msra.mxu0 %v1216
  %1572 = vmatprep.mubr.bf16.mxu0 %v378
  %1573 = vmatmul.mubr.bf16.gmra.mrb[0].mxu0 %v377
  %v1574 = vpop.f32.mrb[0].mxu0
  %v1575 = vadd.f32 %v1532, %v1574
  %v1576 = vpop.f32.mrb[0].mxu0
  %v1577 = vadd.f32 %v1534, %v1576
  %v1578 = vpop.f32.mrb[0].mxu0
  %v1579 = vadd.f32 %v1536, %v1578
  %v1580 = vpop.f32.mrb[0].mxu0
  %v1581 = vadd.f32 %v1538, %v1580
  %1582 = vdwg.mxu0
  %1583 = vmatprep.subr.bf16.mxu0 0
  %1584 = vmatpush1.bf16.msra.mxu0 %v1029
  %1585 = vmatprep.subr.bf16.mxu0 0
  %1586 = vmatpush1.bf16.msra.mxu0 %v1032
  %1587 = vmatprep.subr.bf16.mxu0 0
  %1588 = vmatpush1.bf16.msra.mxu0 %v1035
  %1589 = vmatprep.subr.bf16.mxu0 0
  %1590 = vmatpush1.bf16.msra.mxu0 %v1038
  %1591 = vmatprep.subr.bf16.mxu0 0
  %1592 = vmatpush1.bf16.msra.mxu0 %v1041
  %1593 = vmatprep.subr.bf16.mxu0 0
  %1594 = vmatpush1.bf16.msra.mxu0 %v1044
  %1595 = vmatprep.subr.bf16.mxu0 0
  %1596 = vmatpush1.bf16.msra.mxu0 %v1047
  %1597 = vmatprep.subr.bf16.mxu0 0
  %1598 = vmatpush1.bf16.msra.mxu0 %v1050
  %1599 = vmatprep.subr.bf16.mxu0 0
  %1600 = vmatpush1.bf16.msra.mxu0 %v1053
  %1601 = vmatprep.subr.bf16.mxu0 0
  %1602 = vmatpush1.bf16.msra.mxu0 %v1056
  %1603 = vmatprep.subr.bf16.mxu0 0
  %1604 = vmatpush1.bf16.msra.mxu0 %v1059
  %1605 = vmatprep.subr.bf16.mxu0 0
  %1606 = vmatpush1.bf16.msra.mxu0 %v1062
  %1607 = vmatprep.subr.bf16.mxu0 0
  %1608 = vmatpush1.bf16.msra.mxu0 %v1065
  %1609 = vmatprep.subr.bf16.mxu0 0
  %1610 = vmatpush1.bf16.msra.mxu0 %v1068
  %1611 = vmatprep.subr.bf16.mxu0 0
  %1612 = vmatpush1.bf16.msra.mxu0 %v1071
  %1613 = vmatprep.subr.bf16.mxu0 0
  %1614 = vmatpush1.bf16.msra.mxu0 %v1074
  %1615 = vmatprep.mubr.bf16.mxu0 %v372
  %1616 = vmatmul.mubr.bf16.gmra.mrb[0].mxu0 %v371
  %v1617 = vpop.f32.mrb[0].mxu0
  %v1618 = vadd.f32 0.0, %v1617
  %v1619 = vpop.f32.mrb[0].mxu0
  %v1620 = vpop.f32.mrb[0].mxu0
  %v1621 = vadd.f32 0.0, %v1620
  %v1622 = vpop.f32.mrb[0].mxu0
  %1623 = vdwg.mxu0
  %1624 = vmatprep.subr.bf16.mxu0 0
  %1625 = vmatpush1.bf16.msra.mxu0 %v1077
  %1626 = vmatprep.subr.bf16.mxu0 0
  %1627 = vmatpush1.bf16.msra.mxu0 %v1080
  %1628 = vmatprep.subr.bf16.mxu0 0
  %1629 = vmatpush1.bf16.msra.mxu0 %v1083
  %1630 = vmatprep.subr.bf16.mxu0 0
  %1631 = vmatpush1.bf16.msra.mxu0 %v1086
  %1632 = vmatprep.subr.bf16.mxu0 0
  %1633 = vmatpush1.bf16.msra.mxu0 %v1089
  %1634 = vmatprep.subr.bf16.mxu0 0
  %1635 = vmatpush1.bf16.msra.mxu0 %v1092
  %1636 = vmatprep.subr.bf16.mxu0 0
  %1637 = vmatpush1.bf16.msra.mxu0 %v1095
  %1638 = vmatprep.subr.bf16.mxu0 0
  %1639 = vmatpush1.bf16.msra.mxu0 %v1098
  %1640 = vmatprep.subr.bf16.mxu0 0
  %1641 = vmatpush1.bf16.msra.mxu0 %v1101
  %1642 = vmatprep.subr.bf16.mxu0 0
  %1643 = vmatpush1.bf16.msra.mxu0 %v1104
  %1644 = vmatprep.subr.bf16.mxu0 0
  %1645 = vmatpush1.bf16.msra.mxu0 %v1107
  %1646 = vmatprep.subr.bf16.mxu0 0
  %1647 = vmatpush1.bf16.msra.mxu0 %v1110
  %1648 = vmatprep.subr.bf16.mxu0 0
  %1649 = vmatpush1.bf16.msra.mxu0 %v1113
  %1650 = vmatprep.subr.bf16.mxu0 0
  %1651 = vmatpush1.bf16.msra.mxu0 %v1116
  %1652 = vmatprep.subr.bf16.mxu0 0
  %1653 = vmatpush1.bf16.msra.mxu0 %v1119
  %1654 = vmatprep.subr.bf16.mxu0 0
  %1655 = vmatpush1.bf16.msra.mxu0 %v1122
  %1656 = vmatprep.mubr.bf16.mxu0 %v374
  %1657 = vmatmul.mubr.bf16.gmra.mrb[0].mxu0 %v373
  %v1658 = vpop.f32.mrb[0].mxu0
  %v1659 = vadd.f32 %v1618, %v1658
  %v1660 = vpop.f32.mrb[0].mxu0
  %v1661 = vpop.f32.mrb[0].mxu0
  %v1662 = vadd.f32 %v1621, %v1661
  %v1663 = vpop.f32.mrb[0].mxu0
  %1664 = vdwg.mxu0
  %1665 = vmatprep.subr.bf16.mxu0 0
  %1666 = vmatpush1.bf16.msra.mxu0 %v1125
  %1667 = vmatprep.subr.bf16.mxu0 0
  %1668 = vmatpush1.bf16.msra.mxu0 %v1128
  %1669 = vmatprep.subr.bf16.mxu0 0
  %1670 = vmatpush1.bf16.msra.mxu0 %v1131
  %1671 = vmatprep.subr.bf16.mxu0 0
  %1672 = vmatpush1.bf16.msra.mxu0 %v1134
  %1673 = vmatprep.subr.bf16.mxu0 0
  %1674 = vmatpush1.bf16.msra.mxu0 %v1137
  %1675 = vmatprep.subr.bf16.mxu0 0
  %1676 = vmatpush1.bf16.msra.mxu0 %v1140
  %1677 = vmatprep.subr.bf16.mxu0 0
  %1678 = vmatpush1.bf16.msra.mxu0 %v1143
  %1679 = vmatprep.subr.bf16.mxu0 0
  %1680 = vmatpush1.bf16.msra.mxu0 %v1146
  %1681 = vmatprep.subr.bf16.mxu0 0
  %1682 = vmatpush1.bf16.msra.mxu0 %v1149
  %1683 = vmatprep.subr.bf16.mxu0 0
  %1684 = vmatpush1.bf16.msra.mxu0 %v1152
  %1685 = vmatprep.subr.bf16.mxu0 0
  %1686 = vmatpush1.bf16.msra.mxu0 %v1155
  %1687 = vmatprep.subr.bf16.mxu0 0
  %1688 = vmatpush1.bf16.msra.mxu0 %v1158
  %1689 = vmatprep.subr.bf16.mxu0 0
  %1690 = vmatpush1.bf16.msra.mxu0 %v1161
  %1691 = vmatprep.subr.bf16.mxu0 0
  %1692 = vmatpush1.bf16.msra.mxu0 %v1164
  %1693 = vmatprep.subr.bf16.mxu0 0
  %1694 = vmatpush1.bf16.msra.mxu0 %v1167
  %1695 = vmatprep.subr.bf16.mxu0 0
  %1696 = vmatpush1.bf16.msra.mxu0 %v1170
  %1697 = vmatprep.mubr.bf16.mxu0 %v376
  %1698 = vmatmul.mubr.bf16.gmra.mrb[0].mxu0 %v375
  %v1699 = vpop.f32.mrb[0].mxu0
  %v1700 = vadd.f32 %v1659, %v1699
  %v1701 = vpop.f32.mrb[0].mxu0
  %v1702 = vpop.f32.mrb[0].mxu0
  %v1703 = vadd.f32 %v1662, %v1702
  %v1704 = vpop.f32.mrb[0].mxu0
  %1705 = vdwg.mxu0
  %1706 = vmatprep.subr.bf16.mxu0 0
  %1707 = vmatpush1.bf16.msra.mxu0 %v1173
  %1708 = vmatprep.subr.bf16.mxu0 0
  %1709 = vmatpush1.bf16.msra.mxu0 %v1176
  %1710 = vmatprep.subr.bf16.mxu0 0
  %1711 = vmatpush1.bf16.msra.mxu0 %v1179
  %1712 = vmatprep.subr.bf16.mxu0 0
  %1713 = vmatpush1.bf16.msra.mxu0 %v1182
  %1714 = vmatprep.subr.bf16.mxu0 0
  %1715 = vmatpush1.bf16.msra.mxu0 %v1185
  %1716 = vmatprep.subr.bf16.mxu0 0
  %1717 = vmatpush1.bf16.msra.mxu0 %v1188
  %1718 = vmatprep.subr.bf16.mxu0 0
  %1719 = vmatpush1.bf16.msra.mxu0 %v1191
  %1720 = vmatprep.subr.bf16.mxu0 0
  %1721 = vmatpush1.bf16.msra.mxu0 %v1194
  %1722 = vmatprep.subr.bf16.mxu0 0
  %1723 = vmatpush1.bf16.msra.mxu0 %v1197
  %1724 = vmatprep.subr.bf16.mxu0 0
  %1725 = vmatpush1.bf16.msra.mxu0 %v1200
  %1726 = vmatprep.subr.bf16.mxu0 0
  %1727 = vmatpush1.bf16.msra.mxu0 %v1203
  %1728 = vmatprep.subr.bf16.mxu0 0
  %1729 = vmatpush1.bf16.msra.mxu0 %v1206
  %1730 = vmatprep.subr.bf16.mxu0 0
  %1731 = vmatpush1.bf16.msra.mxu0 %v1209
  %1732 = vmatprep.subr.bf16.mxu0 0
  %1733 = vmatpush1.bf16.msra.mxu0 %v1212
  %1734 = vmatprep.subr.bf16.mxu0 0
  %1735 = vmatpush1.bf16.msra.mxu0 %v1215
  %1736 = vmatprep.subr.bf16.mxu0 0
  %1737 = vmatpush1.bf16.msra.mxu0 %v1218
  %1738 = vmatprep.mubr.bf16.mxu0 %v378
  %1739 = vmatmul.mubr.bf16.gmra.mrb[0].mxu0 %v377
  %v1740 = vpop.f32.mrb[0].mxu0
  %v1741 = vadd.f32 %v1700, %v1740
  %v1742 = vpop.f32.mrb[0].mxu0
  %v1743 = vpop.f32.mrb[0].mxu0
  %v1744 = vadd.f32 %v1703, %v1743
  %v1745 = vpop.f32.mrb[0].mxu0
  %1746 = vdwg.mxu0
  %v1747 = vld [vmem:[%s6] sm:$0xff]
  %v1748 = vld [vmem:[%s6 + $0x8] sm:$0xff]
  %v1749 = vld [vmem:[%s6 + $0x10] sm:$0xff]
  %v1750 = vld [vmem:[%s6 + $0x18] sm:$0xff]
  %v1751 = vld [vmem:[%s6 + $0x20] sm:$0xff]
  %v1752 = vld [vmem:[%s6 + $0x28] sm:$0xff]
  %v1753 = vld [vmem:[%s6 + $0x30] sm:$0xff]
  %v1754 = vld [vmem:[%s6 + $0x38] sm:$0xff]
  %v1755 = vld [vmem:[%s6 + $0x40] sm:$0xff]
  %v1756 = vld [vmem:[%s6 + $0x48] sm:$0xff]
  %v1757 = vld [vmem:[%s6 + $0x50] sm:$0xff]
  %v1758 = vld [vmem:[%s6 + $0x58] sm:$0xff]
  %v1759 = vld [vmem:[%s6 + $0x60] sm:$0xff]
  %v1760 = vld [vmem:[%s6 + $0x68] sm:$0xff]
  %v1761 = vld [vmem:[%s6 + $0x70] sm:$0xff]
  %v1762 = vld [vmem:[%s6 + $0x78] sm:$0xff]
  %v1765 = vunpack.c.l.b16 %v87
  %v1766 = vunpack.c.l.b16 %v88
  %v1767 = vpack.c.b16 %v1766, %v1765
  %v1785 = vunpack.c.l.b16 %v1747
  %v1786 = vunpack.c.h.b16 %v1747
  %v1787 = vunpack.c.l.b16 %v1748
  %v1788 = vunpack.c.h.b16 %v1748
  %v1789 = vunpack.c.l.b16 %v1749
  %v1790 = vunpack.c.h.b16 %v1749
  %v1791 = vunpack.c.l.b16 %v1750
  %v1792 = vunpack.c.h.b16 %v1750
  %v1793 = vunpack.c.l.b16 %v1751
  %v1794 = vunpack.c.h.b16 %v1751
  %v1795 = vunpack.c.l.b16 %v1752
  %v1796 = vunpack.c.h.b16 %v1752
  %v1797 = vunpack.c.l.b16 %v1753
  %v1798 = vunpack.c.h.b16 %v1753
  %v1799 = vunpack.c.l.b16 %v1754
  %v1800 = vunpack.c.h.b16 %v1754
  %v1801 = vunpack.c.l.b16 %v1755
  %v1802 = vunpack.c.h.b16 %v1755
  %v1803 = vunpack.c.l.b16 %v1756
  %v1804 = vunpack.c.h.b16 %v1756
  %v1805 = vunpack.c.l.b16 %v1757
  %v1806 = vunpack.c.h.b16 %v1757
  %v1807 = vunpack.c.l.b16 %v1758
  %v1808 = vunpack.c.h.b16 %v1758
  %v1809 = vunpack.c.l.b16 %v1759
  %v1810 = vunpack.c.h.b16 %v1759
  %v1811 = vunpack.c.l.b16 %v1760
  %v1812 = vunpack.c.h.b16 %v1760
  %v1813 = vunpack.c.l.b16 %v1761
  %v1814 = vunpack.c.h.b16 %v1761
  %v1815 = vunpack.c.l.b16 %v1762
  %v1816 = vunpack.c.h.b16 %v1762
  %v1817 = vpack.c.b16 %v1787, %v1785
  %v1818 = vpack.c.b16 %v1788, %v1786
  %v1819 = vpack.c.b16 %v1791, %v1789
  %v1820 = vpack.c.b16 %v1792, %v1790
  %v1821 = vpack.c.b16 %v1795, %v1793
  %v1822 = vpack.c.b16 %v1796, %v1794
  %v1823 = vpack.c.b16 %v1799, %v1797
  %v1824 = vpack.c.b16 %v1800, %v1798
  %v1825 = vpack.c.b16 %v1803, %v1801
  %v1826 = vpack.c.b16 %v1804, %v1802
  %v1827 = vpack.c.b16 %v1807, %v1805
  %v1828 = vpack.c.b16 %v1808, %v1806
  %v1829 = vpack.c.b16 %v1811, %v1809
  %v1830 = vpack.c.b16 %v1812, %v1810
  %v1831 = vpack.c.b16 %v1815, %v1813
  %v1832 = vpack.c.b16 %v1816, %v1814
  %1849 = vmatprep.subr.bf16.mxu0 %v1818
  %1850 = vmatpush1.bf16.msra.mxu0 %v1817
  %1851 = vmatprep.subr.bf16.mxu0 %v1820
  %1852 = vmatpush1.bf16.msra.mxu0 %v1819
  %1853 = vmatprep.subr.bf16.mxu0 %v1822
  %1854 = vmatpush1.bf16.msra.mxu0 %v1821
  %1855 = vmatprep.subr.bf16.mxu0 %v1824
  %1856 = vmatpush1.bf16.msra.mxu0 %v1823
  %1857 = vmatprep.subr.bf16.mxu0 %v1826
  %1858 = vmatpush1.bf16.msra.mxu0 %v1825
  %1859 = vmatprep.subr.bf16.mxu0 %v1828
  %1860 = vmatpush1.bf16.msra.mxu0 %v1827
  %1861 = vmatprep.subr.bf16.mxu0 %v1830
  %1862 = vmatpush1.bf16.msra.mxu0 %v1829
  %1863 = vmatprep.subr.bf16.mxu0 %v1832
  %1864 = vmatpush1.bf16.msra.mxu0 %v1831
  %1865 = vmatprep.subr.bf16.mxu0 0
  %1866 = vmatpush1.bf16.msra.mxu0 0
  %1867 = vmatprep.subr.bf16.mxu0 0
  %1868 = vmatpush1.bf16.msra.mxu0 0
  %1869 = vmatprep.subr.bf16.mxu0 0
  %1870 = vmatpush1.bf16.msra.mxu0 0
  %1871 = vmatprep.subr.bf16.mxu0 0
  %1872 = vmatpush1.bf16.msra.mxu0 0
  %1873 = vmatprep.subr.bf16.mxu0 0
  %1874 = vmatpush1.bf16.msra.mxu0 0
  %1875 = vmatprep.subr.bf16.mxu0 0
  %1876 = vmatpush1.bf16.msra.mxu0 0
  %1877 = vmatprep.subr.bf16.mxu0 0
  %1878 = vmatpush1.bf16.msra.mxu0 0
  %1879 = vmatprep.subr.bf16.mxu0 0
  %1880 = vmatpush1.bf16.msra.mxu0 0
  %1881 = vmatprep.mubr.bf16.mxu0 0
  %1882 = vmatmul.mubr.bf16.gmra.mrb[0].mxu0 %v1767
  %v1883 = vpop.f32.mrb[0].mxu0
  %v1884 = vadd.f32 0.0, %v1883
  %v1885 = vpop.f32.mrb[0].mxu0
  %v1886 = vadd.f32 0.0, %v1885
  %v1887 = vpop.f32.mrb[0].mxu0
  %v1888 = vadd.f32 0.0, %v1887
  %v1889 = vpop.f32.mrb[0].mxu0
  %v1890 = vadd.f32 0.0, %v1889
  %1891 = vdwg.mxu0
  %v1892 = vld [vmem:[%s7] sm:$0x1]
  %v1894 = vlaneseq
  %v1895 = vshrl.u32 %v1894, 7
  %v1896 = vsub.s32 0, %v1895
  %v1897 = vrot.slane %v1892, %v1896
  %v1899 = vadd.f32 %v1575, %v1897
  %v1900 = vadd.f32 %v1579, %v1897
  %v1901 = vmax.f32 %v1899, 0.0
  %v1902 = vmax.f32 %v1900, 0.0
  %v1903 = vpack.c.bf16 %v1902, %v1901
  %v1904 = vld [vmem:[%s10] sm:$0xf]
  %v1905 = vld [vmem:[%s10 + $0x4] sm:$0xf]
  %v1906 = vld [vmem:[%s10 + $0x8] sm:$0xf]
  %v1907 = vld [vmem:[%s10 + $0xc] sm:$0xf]
  %v1908 = vld [vmem:[%s10 + $0x10] sm:$0xf]
  %v1909 = vld [vmem:[%s10 + $0x14] sm:$0xf]
  %v1910 = vld [vmem:[%s10 + $0x18] sm:$0xf]
  %v1911 = vld [vmem:[%s10 + $0x1c] sm:$0xf]
  %v1912 = vld [vmem:[%s10 + $0x20] sm:$0xf]
  %v1913 = vld [vmem:[%s10 + $0x24] sm:$0xf]
  %v1914 = vld [vmem:[%s10 + $0x28] sm:$0xf]
  %v1915 = vld [vmem:[%s10 + $0x2c] sm:$0xf]
  %v1916 = vld [vmem:[%s10 + $0x30] sm:$0xf]
  %v1917 = vld [vmem:[%s10 + $0x34] sm:$0xf]
  %v1918 = vld [vmem:[%s10 + $0x38] sm:$0xf]
  %v1919 = vld [vmem:[%s10 + $0x3c] sm:$0xf]
  %v1920 = vld [vmem:[%s11] sm:$0x1]
  %v1922 = vlaneseq
  %v1923 = vshrl.u32 %v1922, 7
  %v1924 = vsub.s32 0, %v1923
  %v1925 = vrot.slane %v1920, %v1924
  %v1943 = vunpack.c.l.b16 %v1904
  %v1944 = vunpack.c.l.b16 %v1905
  %v1945 = vunpack.c.l.b16 %v1906
  %v1946 = vunpack.c.l.b16 %v1907
  %v1947 = vunpack.c.l.b16 %v1908
  %v1948 = vunpack.c.l.b16 %v1909
  %v1949 = vunpack.c.l.b16 %v1910
  %v1950 = vunpack.c.l.b16 %v1911
  %v1951 = vunpack.c.l.b16 %v1912
  %v1952 = vunpack.c.l.b16 %v1913
  %v1953 = vunpack.c.l.b16 %v1914
  %v1954 = vunpack.c.l.b16 %v1915
  %v1955 = vunpack.c.l.b16 %v1916
  %v1956 = vunpack.c.l.b16 %v1917
  %v1957 = vunpack.c.l.b16 %v1918
  %v1958 = vunpack.c.l.b16 %v1919
  %v1959 = vpack.c.b16 %v1944, %v1943
  %v1960 = vpack.c.b16 %v1946, %v1945
  %v1961 = vpack.c.b16 %v1948, %v1947
  %v1962 = vpack.c.b16 %v1950, %v1949
  %v1963 = vpack.c.b16 %v1952, %v1951
  %v1964 = vpack.c.b16 %v1954, %v1953
  %v1965 = vpack.c.b16 %v1956, %v1955
  %v1966 = vpack.c.b16 %v1958, %v1957
  %1975 = vmatprep.subr.bf16.mxu0 0
  %1976 = vmatpush1.bf16.msra.mxu0 %v1959
  %1977 = vmatprep.subr.bf16.mxu0 0
  %1978 = vmatpush1.bf16.msra.mxu0 %v1960
  %1979 = vmatprep.subr.bf16.mxu0 0
  %1980 = vmatpush1.bf16.msra.mxu0 %v1961
  %1981 = vmatprep.subr.bf16.mxu0 0
  %1982 = vmatpush1.bf16.msra.mxu0 %v1962
  %1983 = vmatprep.subr.bf16.mxu0 0
  %1984 = vmatpush1.bf16.msra.mxu0 %v1963
  %1985 = vmatprep.subr.bf16.mxu0 0
  %1986 = vmatpush1.bf16.msra.mxu0 %v1964
  %1987 = vmatprep.subr.bf16.mxu0 0
  %1988 = vmatpush1.bf16.msra.mxu0 %v1965
  %1989 = vmatprep.subr.bf16.mxu0 0
  %1990 = vmatpush1.bf16.msra.mxu0 %v1966
  %1991 = vmatprep.subr.bf16.mxu0 0
  %1992 = vmatpush1.bf16.msra.mxu0 0
  %1993 = vmatprep.subr.bf16.mxu0 0
  %1994 = vmatpush1.bf16.msra.mxu0 0
  %1995 = vmatprep.subr.bf16.mxu0 0
  %1996 = vmatpush1.bf16.msra.mxu0 0
  %1997 = vmatprep.subr.bf16.mxu0 0
  %1998 = vmatpush1.bf16.msra.mxu0 0
  %1999 = vmatprep.subr.bf16.mxu0 0
  %2000 = vmatpush1.bf16.msra.mxu0 0
  %2001 = vmatprep.subr.bf16.mxu0 0
  %2002 = vmatpush1.bf16.msra.mxu0 0
  %2003 = vmatprep.subr.bf16.mxu0 0
  %2004 = vmatpush1.bf16.msra.mxu0 0
  %2005 = vmatprep.subr.bf16.mxu0 0
  %2006 = vmatpush1.bf16.msra.mxu0 0
  %2007 = vmatprep.mubr.bf16.mxu0 0
  %2008 = vmatmul.mubr.bf16.gmra.mrb[0].mxu0 %v1903
  %v2009 = vpop.f32.mrb[0].mxu0
  %v2010 = vadd.f32 %v1925, %v2009
  %v2011 = vpop.f32.mrb[0].mxu0
  %v2012 = vpop.f32.mrb[0].mxu0
  %v2013 = vadd.f32 %v1925, %v2012
  %v2014 = vpop.f32.mrb[0].mxu0
  %2015 = vdwg.mxu0
  %v2016 = vmul.f32 %v2010, 0.5
  %v2017 = vmul.f32 %v2013, 0.5
  %v2018 = vmul.f32 %v2016, 1.442695
  %v2019 = vpow.pop %v2018
  %v2020 = vmul.f32 %v2017, 1.442695
  %v2021 = vpow.pop %v2020
  %2024 = vrot.lane.b32.xlu0 %v89, 16
  %v2025 = vpop.permute.xlu0 %2024
  %2026 = vrot.lane.b32.xlu0 %v90, 16
  %v2027 = vpop.permute.xlu0 %2026
  %v2030 = vmul.f32 %v2019, %v2025
  %v2031 = vmul.f32 %v2021, %v2027
  %2034 = vrot.lane.b32.xlu0 %v2030, 112
  %v2035 = vpop.permute.xlu0 %2034
  %2036 = vrot.lane.b32.xlu0 %v2031, 112
  %v2037 = vpop.permute.xlu0 %2036
  %v2040 = vadd.f32 %v2010, %v2035
  %v2041 = vadd.f32 %v2013, %v2037
  %v2042 = vpack.c.bf16 %v2041, %v2040
  %v2043 = vld [vmem:[%s14] sm:$0xf]
  %v2044 = vld [vmem:[%s14 + $0x4] sm:$0xf]
  %v2045 = vld [vmem:[%s15] sm:$0x1]
  %v2047 = vlaneseq
  %v2048 = vshrl.u32 %v2047, 7
  %v2049 = vsub.s32 0, %v2048
  %v2050 = vrot.slane %v2045, %v2049
  %v2054 = vunpack.c.l.b16 %v2043
  %v2055 = vunpack.c.l.b16 %v2044
  %v2056 = vpack.c.b16 %v2055, %v2054
  %vm2058 = vcmask 130048
  %v2060 = vsel %vm2058, %v2042, 0
  %2062 = vmatprep.subr.bf16.mxu0 0
  %2063 = vmatpush1.bf16.msra.mxu0 %v2056
  %2064 = vmatprep.subr.bf16.mxu0 0
  %2065 = vmatpush1.bf16.msra.mxu0 0
  %2066 = vmatprep.subr.bf16.mxu0 0
  %2067 = vmatpush1.bf16.msra.mxu0 0
  %2068 = vmatprep.subr.bf16.mxu0 0
  %2069 = vmatpush1.bf16.msra.mxu0 0
  %2070 = vmatprep.subr.bf16.mxu0 0
  %2071 = vmatpush1.bf16.msra.mxu0 0
  %2072 = vmatprep.subr.bf16.mxu0 0
  %2073 = vmatpush1.bf16.msra.mxu0 0
  %2074 = vmatprep.subr.bf16.mxu0 0
  %2075 = vmatpush1.bf16.msra.mxu0 0
  %2076 = vmatprep.subr.bf16.mxu0 0
  %2077 = vmatpush1.bf16.msra.mxu0 0
  %2078 = vmatprep.subr.bf16.mxu0 0
  %2079 = vmatpush1.bf16.msra.mxu0 0
  %2080 = vmatprep.subr.bf16.mxu0 0
  %2081 = vmatpush1.bf16.msra.mxu0 0
  %2082 = vmatprep.subr.bf16.mxu0 0
  %2083 = vmatpush1.bf16.msra.mxu0 0
  %2084 = vmatprep.subr.bf16.mxu0 0
  %2085 = vmatpush1.bf16.msra.mxu0 0
  %2086 = vmatprep.subr.bf16.mxu0 0
  %2087 = vmatpush1.bf16.msra.mxu0 0
  %2088 = vmatprep.subr.bf16.mxu0 0
  %2089 = vmatpush1.bf16.msra.mxu0 0
  %2090 = vmatprep.subr.bf16.mxu0 0
  %2091 = vmatpush1.bf16.msra.mxu0 0
  %2092 = vmatprep.subr.bf16.mxu0 0
  %2093 = vmatpush1.bf16.msra.mxu0 0
  %2094 = vmatprep.mubr.bf16.mxu0 0
  %2095 = vmatmul.mubr.bf16.gmra.mrb[0].mxu0 %v2060
  %v2096 = vpop.f32.mrb[0].mxu0
  %v2097 = vadd.f32 %v2050, %v2096
  %v2098 = vpop.f32.mrb[0].mxu0
  %v2099 = vpop.f32.mrb[0].mxu0
  %v2100 = vadd.f32 %v2050, %v2099
  %v2101 = vpop.f32.mrb[0].mxu0
  %2102 = vdwg.mxu0
  %v2103 = vmax.f32 %v2097, 0.0
  %v2104 = vmax.f32 %v2100, 0.0
  %v2105 = vpack.c.bf16 %v2104, %v2103
  %v2106 = vld [vmem:[%s16] sm:$0xff]
  %v2107 = vld [vmem:[%s16 + $0x8] sm:$0xff]
  %v2108 = vld [vmem:[%s16 + $0x10] sm:$0xff]
  %v2109 = vld [vmem:[%s16 + $0x18] sm:$0xff]
  %v2110 = vld [vmem:[%s16 + $0x20] sm:$0xff]
  %v2111 = vld [vmem:[%s16 + $0x28] sm:$0xff]
  %v2112 = vld [vmem:[%s16 + $0x30] sm:$0xff]
  %v2113 = vld [vmem:[%s16 + $0x38] sm:$0xff]
  %v2114 = vld [vmem:[%s16 + $0x40] sm:$0xff]
  %v2115 = vld [vmem:[%s16 + $0x48] sm:$0xff]
  %v2116 = vld [vmem:[%s16 + $0x50] sm:$0xff]
  %v2117 = vld [vmem:[%s16 + $0x58] sm:$0xff]
  %v2118 = vld [vmem:[%s16 + $0x60] sm:$0xff]
  %v2119 = vld [vmem:[%s16 + $0x68] sm:$0xff]
  %v2120 = vld [vmem:[%s16 + $0x70] sm:$0xff]
  %v2121 = vld [vmem:[%s16 + $0x78] sm:$0xff]
  %v2122 = vld [vmem:[%s16 + $0x80] sm:$0xff]
  %v2123 = vld [vmem:[%s16 + $0x88] sm:$0xff]
  %v2124 = vld [vmem:[%s16 + $0x90] sm:$0xff]
  %v2125 = vld [vmem:[%s16 + $0x98] sm:$0xff]
  %v2126 = vld [vmem:[%s16 + $0xa0] sm:$0xff]
  %v2127 = vld [vmem:[%s16 + $0xa8] sm:$0xff]
  %v2128 = vld [vmem:[%s16 + $0xb0] sm:$0xff]
  %v2129 = vld [vmem:[%s16 + $0xb8] sm:$0xff]
  %v2130 = vld [vmem:[%s16 + $0xc0] sm:$0xff]
  %v2131 = vld [vmem:[%s16 + $0xc8] sm:$0xff]
  %v2132 = vld [vmem:[%s16 + $0xd0] sm:$0xff]
  %v2133 = vld [vmem:[%s16 + $0xd8] sm:$0xff]
  %v2134 = vld [vmem:[%s16 + $0xe0] sm:$0xff]
  %v2135 = vld [vmem:[%s16 + $0xe8] sm:$0xff]
  %v2136 = vld [vmem:[%s16 + $0xf0] sm:$0xff]
  %v2137 = vld [vmem:[%s16 + $0xf8] sm:$0xff]
  %v2138 = vld [vmem:[%s16 + $0x100] sm:$0xff]
  %v2139 = vld [vmem:[%s16 + $0x108] sm:$0xff]
  %v2140 = vld [vmem:[%s16 + $0x110] sm:$0xff]
  %v2141 = vld [vmem:[%s16 + $0x118] sm:$0xff]
  %v2142 = vld [vmem:[%s16 + $0x120] sm:$0xff]
  %v2143 = vld [vmem:[%s16 + $0x128] sm:$0xff]
  %v2144 = vld [vmem:[%s16 + $0x130] sm:$0xff]
  %v2145 = vld [vmem:[%s16 + $0x138] sm:$0xff]
  %v2146 = vld [vmem:[%s16 + $0x140] sm:$0xff]
  %v2147 = vld [vmem:[%s16 + $0x148] sm:$0xff]
  %v2148 = vld [vmem:[%s16 + $0x150] sm:$0xff]
  %v2149 = vld [vmem:[%s16 + $0x158] sm:$0xff]
  %v2150 = vld [vmem:[%s16 + $0x160] sm:$0xff]
  %v2151 = vld [vmem:[%s16 + $0x168] sm:$0xff]
  %v2152 = vld [vmem:[%s16 + $0x170] sm:$0xff]
  %v2153 = vld [vmem:[%s16 + $0x178] sm:$0xff]
  %v2154 = vld [vmem:[%s16 + $0x180] sm:$0xff]
  %v2155 = vld [vmem:[%s16 + $0x188] sm:$0xff]
  %v2156 = vld [vmem:[%s16 + $0x190] sm:$0xff]
  %v2157 = vld [vmem:[%s16 + $0x198] sm:$0xff]
  %v2158 = vld [vmem:[%s16 + $0x1a0] sm:$0xff]
  %v2159 = vld [vmem:[%s16 + $0x1a8] sm:$0xff]
  %v2160 = vld [vmem:[%s16 + $0x1b0] sm:$0xff]
  %v2161 = vld [vmem:[%s16 + $0x1b8] sm:$0xff]
  %v2162 = vld [vmem:[%s16 + $0x1c0] sm:$0xff]
  %v2163 = vld [vmem:[%s16 + $0x1c8] sm:$0xff]
  %v2164 = vld [vmem:[%s16 + $0x1d0] sm:$0xff]
  %v2165 = vld [vmem:[%s16 + $0x1d8] sm:$0xff]
  %v2166 = vld [vmem:[%s16 + $0x1e0] sm:$0xff]
  %v2167 = vld [vmem:[%s16 + $0x1e8] sm:$0xff]
  %v2168 = vld [vmem:[%s16 + $0x1f0] sm:$0xff]
  %v2169 = vld [vmem:[%s16 + $0x1f8] sm:$0xff]
  %v2170 = vld [vmem:[%s17] sm:$0xff]
  %v2172 = vlaneseq
  %v2173 = vshrl.u32 %v2172, 7
  %v2174 = vsub.s32 0, %v2173
  %v2175 = vrot.slane %v2170, %v2174
  %v2176 = vlaneseq
  %v2177 = vshrl.u32 %v2176, 7
  %v2178 = vsub.s32 1, %v2177
  %v2179 = vrot.slane %v2170, %v2178
  %v2180 = vlaneseq
  %v2181 = vshrl.u32 %v2180, 7
  %v2182 = vsub.s32 2, %v2181
  %v2183 = vrot.slane %v2170, %v2182
  %v2184 = vlaneseq
  %v2185 = vshrl.u32 %v2184, 7
  %v2186 = vsub.s32 3, %v2185
  %v2187 = vrot.slane %v2170, %v2186
  %v2188 = vlaneseq
  %v2189 = vshrl.u32 %v2188, 7
  %v2190 = vsub.s32 4, %v2189
  %v2191 = vrot.slane %v2170, %v2190
  %v2192 = vlaneseq
  %v2193 = vshrl.u32 %v2192, 7
  %v2194 = vsub.s32 5, %v2193
  %v2195 = vrot.slane %v2170, %v2194
  %v2196 = vlaneseq
  %v2197 = vshrl.u32 %v2196, 7
  %v2198 = vsub.s32 6, %v2197
  %v2199 = vrot.slane %v2170, %v2198
  %v2200 = vlaneseq
  %v2201 = vshrl.u32 %v2200, 7
  %v2202 = vsub.s32 7, %v2201
  %v2203 = vrot.slane %v2170, %v2202
  %v2276 = vunpack.c.l.b16 %v2106
  %v2277 = vunpack.c.h.b16 %v2106
  %v2278 = vunpack.c.l.b16 %v2107
  %v2279 = vunpack.c.h.b16 %v2107
  %v2280 = vunpack.c.l.b16 %v2108
  %v2281 = vunpack.c.h.b16 %v2108
  %v2282 = vunpack.c.l.b16 %v2109
  %v2283 = vunpack.c.h.b16 %v2109
  %v2284 = vunpack.c.l.b16 %v2110
  %v2285 = vunpack.c.h.b16 %v2110
  %v2286 = vunpack.c.l.b16 %v2111
  %v2287 = vunpack.c.h.b16 %v2111
  %v2288 = vunpack.c.l.b16 %v2112
  %v2289 = vunpack.c.h.b16 %v2112
  %v2290 = vunpack.c.l.b16 %v2113
  %v2291 = vunpack.c.h.b16 %v2113
  %v2292 = vunpack.c.l.b16 %v2114
  %v2293 = vunpack.c.h.b16 %v2114
  %v2294 = vunpack.c.l.b16 %v2115
  %v2295 = vunpack.c.h.b16 %v2115
  %v2296 = vunpack.c.l.b16 %v2116
  %v2297 = vunpack.c.h.b16 %v2116
  %v2298 = vunpack.c.l.b16 %v2117
  %v2299 = vunpack.c.h.b16 %v2117
  %v2300 = vunpack.c.l.b16 %v2118
  %v2301 = vunpack.c.h.b16 %v2118
  %v2302 = vunpack.c.l.b16 %v2119
  %v2303 = vunpack.c.h.b16 %v2119
  %v2304 = vunpack.c.l.b16 %v2120
  %v2305 = vunpack.c.h.b16 %v2120
  %v2306 = vunpack.c.l.b16 %v2121
  %v2307 = vunpack.c.h.b16 %v2121
  %v2308 = vunpack.c.l.b16 %v2122
  %v2309 = vunpack.c.h.b16 %v2122
  %v2310 = vunpack.c.l.b16 %v2123
  %v2311 = vunpack.c.h.b16 %v2123
  %v2312 = vunpack.c.l.b16 %v2124
  %v2313 = vunpack.c.h.b16 %v2124
  %v2314 = vunpack.c.l.b16 %v2125
  %v2315 = vunpack.c.h.b16 %v2125
  %v2316 = vunpack.c.l.b16 %v2126
  %v2317 = vunpack.c.h.b16 %v2126
  %v2318 = vunpack.c.l.b16 %v2127
  %v2319 = vunpack.c.h.b16 %v2127
  %v2320 = vunpack.c.l.b16 %v2128
  %v2321 = vunpack.c.h.b16 %v2128
  %v2322 = vunpack.c.l.b16 %v2129
  %v2323 = vunpack.c.h.b16 %v2129
  %v2324 = vunpack.c.l.b16 %v2130
  %v2325 = vunpack.c.h.b16 %v2130
  %v2326 = vunpack.c.l.b16 %v2131
  %v2327 = vunpack.c.h.b16 %v2131
  %v2328 = vunpack.c.l.b16 %v2132
  %v2329 = vunpack.c.h.b16 %v2132
  %v2330 = vunpack.c.l.b16 %v2133
  %v2331 = vunpack.c.h.b16 %v2133
  %v2332 = vunpack.c.l.b16 %v2134
  %v2333 = vunpack.c.h.b16 %v2134
  %v2334 = vunpack.c.l.b16 %v2135
  %v2335 = vunpack.c.h.b16 %v2135
  %v2336 = vunpack.c.l.b16 %v2136
  %v2337 = vunpack.c.h.b16 %v2136
  %v2338 = vunpack.c.l.b16 %v2137
  %v2339 = vunpack.c.h.b16 %v2137
  %v2340 = vunpack.c.l.b16 %v2138
  %v2341 = vunpack.c.h.b16 %v2138
  %v2342 = vunpack.c.l.b16 %v2139
  %v2343 = vunpack.c.h.b16 %v2139
  %v2344 = vunpack.c.l.b16 %v2140
  %v2345 = vunpack.c.h.b16 %v2140
  %v2346 = vunpack.c.l.b16 %v2141
  %v2347 = vunpack.c.h.b16 %v2141
  %v2348 = vunpack.c.l.b16 %v2142
  %v2349 = vunpack.c.h.b16 %v2142
  %v2350 = vunpack.c.l.b16 %v2143
  %v2351 = vunpack.c.h.b16 %v2143
  %v2352 = vunpack.c.l.b16 %v2144
  %v2353 = vunpack.c.h.b16 %v2144
  %v2354 = vunpack.c.l.b16 %v2145
  %v2355 = vunpack.c.h.b16 %v2145
  %v2356 = vunpack.c.l.b16 %v2146
  %v2357 = vunpack.c.h.b16 %v2146
  %v2358 = vunpack.c.l.b16 %v2147
  %v2359 = vunpack.c.h.b16 %v2147
  %v2360 = vunpack.c.l.b16 %v2148
  %v2361 = vunpack.c.h.b16 %v2148
  %v2362 = vunpack.c.l.b16 %v2149
  %v2363 = vunpack.c.h.b16 %v2149
  %v2364 = vunpack.c.l.b16 %v2150
  %v2365 = vunpack.c.h.b16 %v2150
  %v2366 = vunpack.c.l.b16 %v2151
  %v2367 = vunpack.c.h.b16 %v2151
  %v2368 = vunpack.c.l.b16 %v2152
  %v2369 = vunpack.c.h.b16 %v2152
  %v2370 = vunpack.c.l.b16 %v2153
  %v2371 = vunpack.c.h.b16 %v2153
  %v2372 = vunpack.c.l.b16 %v2154
  %v2373 = vunpack.c.h.b16 %v2154
  %v2374 = vunpack.c.l.b16 %v2155
  %v2375 = vunpack.c.h.b16 %v2155
  %v2376 = vunpack.c.l.b16 %v2156
  %v2377 = vunpack.c.h.b16 %v2156
  %v2378 = vunpack.c.l.b16 %v2157
  %v2379 = vunpack.c.h.b16 %v2157
  %v2380 = vunpack.c.l.b16 %v2158
  %v2381 = vunpack.c.h.b16 %v2158
  %v2382 = vunpack.c.l.b16 %v2159
  %v2383 = vunpack.c.h.b16 %v2159
  %v2384 = vunpack.c.l.b16 %v2160
  %v2385 = vunpack.c.h.b16 %v2160
  %v2386 = vunpack.c.l.b16 %v2161
  %v2387 = vunpack.c.h.b16 %v2161
  %v2388 = vunpack.c.l.b16 %v2162
  %v2389 = vunpack.c.h.b16 %v2162
  %v2390 = vunpack.c.l.b16 %v2163
  %v2391 = vunpack.c.h.b16 %v2163
  %v2392 = vunpack.c.l.b16 %v2164
  %v2393 = vunpack.c.h.b16 %v2164
  %v2394 = vunpack.c.l.b16 %v2165
  %v2395 = vunpack.c.h.b16 %v2165
  %v2396 = vunpack.c.l.b16 %v2166
  %v2397 = vunpack.c.h.b16 %v2166
  %v2398 = vunpack.c.l.b16 %v2167
  %v2399 = vunpack.c.h.b16 %v2167
  %v2400 = vunpack.c.l.b16 %v2168
  %v2401 = vunpack.c.h.b16 %v2168
  %v2402 = vunpack.c.l.b16 %v2169
  %v2403 = vunpack.c.h.b16 %v2169
  %v2404 = vpack.c.b16 %v2284, %v2276
  %v2405 = vpack.c.b16 %v2285, %v2277
  %v2406 = vpack.c.b16 %v2286, %v2278
  %v2407 = vpack.c.b16 %v2287, %v2279
  %v2408 = vpack.c.b16 %v2288, %v2280
  %v2409 = vpack.c.b16 %v2289, %v2281
  %v2410 = vpack.c.b16 %v2290, %v2282
  %v2411 = vpack.c.b16 %v2291, %v2283
  %v2412 = vpack.c.b16 %v2300, %v2292
  %v2413 = vpack.c.b16 %v2301, %v2293
  %v2414 = vpack.c.b16 %v2302, %v2294
  %v2415 = vpack.c.b16 %v2303, %v2295
  %v2416 = vpack.c.b16 %v2304, %v2296
  %v2417 = vpack.c.b16 %v2305, %v2297
  %v2418 = vpack.c.b16 %v2306, %v2298
  %v2419 = vpack.c.b16 %v2307, %v2299
  %v2420 = vpack.c.b16 %v2316, %v2308
  %v2421 = vpack.c.b16 %v2317, %v2309
  %v2422 = vpack.c.b16 %v2318, %v2310
  %v2423 = vpack.c.b16 %v2319, %v2311
  %v2424 = vpack.c.b16 %v2320, %v2312
  %v2425 = vpack.c.b16 %v2321, %v2313
  %v2426 = vpack.c.b16 %v2322, %v2314
  %v2427 = vpack.c.b16 %v2323, %v2315
  %v2428 = vpack.c.b16 %v2332, %v2324
  %v2429 = vpack.c.b16 %v2333, %v2325
  %v2430 = vpack.c.b16 %v2334, %v2326
  %v2431 = vpack.c.b16 %v2335, %v2327
  %v2432 = vpack.c.b16 %v2336, %v2328
  %v2433 = vpack.c.b16 %v2337, %v2329
  %v2434 = vpack.c.b16 %v2338, %v2330
  %v2435 = vpack.c.b16 %v2339, %v2331
  %v2436 = vpack.c.b16 %v2348, %v2340
  %v2437 = vpack.c.b16 %v2349, %v2341
  %v2438 = vpack.c.b16 %v2350, %v2342
  %v2439 = vpack.c.b16 %v2351, %v2343
  %v2440 = vpack.c.b16 %v2352, %v2344
  %v2441 = vpack.c.b16 %v2353, %v2345
  %v2442 = vpack.c.b16 %v2354, %v2346
  %v2443 = vpack.c.b16 %v2355, %v2347
  %v2444 = vpack.c.b16 %v2364, %v2356
  %v2445 = vpack.c.b16 %v2365, %v2357
  %v2446 = vpack.c.b16 %v2366, %v2358
  %v2447 = vpack.c.b16 %v2367, %v2359
  %v2448 = vpack.c.b16 %v2368, %v2360
  %v2449 = vpack.c.b16 %v2369, %v2361
  %v2450 = vpack.c.b16 %v2370, %v2362
  %v2451 = vpack.c.b16 %v2371, %v2363
  %v2452 = vpack.c.b16 %v2380, %v2372
  %v2453 = vpack.c.b16 %v2381, %v2373
  %v2454 = vpack.c.b16 %v2382, %v2374
  %v2455 = vpack.c.b16 %v2383, %v2375
  %v2456 = vpack.c.b16 %v2384, %v2376
  %v2457 = vpack.c.b16 %v2385, %v2377
  %v2458 = vpack.c.b16 %v2386, %v2378
  %v2459 = vpack.c.b16 %v2387, %v2379
  %v2460 = vpack.c.b16 %v2396, %v2388
  %v2461 = vpack.c.b16 %v2397, %v2389
  %v2462 = vpack.c.b16 %v2398, %v2390
  %v2463 = vpack.c.b16 %v2399, %v2391
  %v2464 = vpack.c.b16 %v2400, %v2392
  %v2465 = vpack.c.b16 %v2401, %v2393
  %v2466 = vpack.c.b16 %v2402, %v2394
  %v2467 = vpack.c.b16 %v2403, %v2395
  %2532 = vmatprep.subr.bf16.mxu0 %v2405
  %2533 = vmatpush1.bf16.msra.mxu0 %v2404
  %2534 = vmatprep.subr.bf16.mxu0 %v2413
  %2535 = vmatpush1.bf16.msra.mxu0 %v2412
  %2536 = vmatprep.subr.bf16.mxu0 %v2421
  %2537 = vmatpush1.bf16.msra.mxu0 %v2420
  %2538 = vmatprep.subr.bf16.mxu0 %v2429
  %2539 = vmatpush1.bf16.msra.mxu0 %v2428
  %2540 = vmatprep.subr.bf16.mxu0 %v2437
  %2541 = vmatpush1.bf16.msra.mxu0 %v2436
  %2542 = vmatprep.subr.bf16.mxu0 %v2445
  %2543 = vmatpush1.bf16.msra.mxu0 %v2444
  %2544 = vmatprep.subr.bf16.mxu0 %v2453
  %2545 = vmatpush1.bf16.msra.mxu0 %v2452
  %2546 = vmatprep.subr.bf16.mxu0 %v2461
  %2547 = vmatpush1.bf16.msra.mxu0 %v2460
  %2548 = vmatprep.subr.bf16.mxu0 0
  %2549 = vmatpush1.bf16.msra.mxu0 0
  %2550 = vmatprep.subr.bf16.mxu0 0
  %2551 = vmatpush1.bf16.msra.mxu0 0
  %2552 = vmatprep.subr.bf16.mxu0 0
  %2553 = vmatpush1.bf16.msra.mxu0 0
  %2554 = vmatprep.subr.bf16.mxu0 0
  %2555 = vmatpush1.bf16.msra.mxu0 0
  %2556 = vmatprep.subr.bf16.mxu0 0
  %2557 = vmatpush1.bf16.msra.mxu0 0
  %2558 = vmatprep.subr.bf16.mxu0 0
  %2559 = vmatpush1.bf16.msra.mxu0 0
  %2560 = vmatprep.subr.bf16.mxu0 0
  %2561 = vmatpush1.bf16.msra.mxu0 0
  %2562 = vmatprep.subr.bf16.mxu0 0
  %2563 = vmatpush1.bf16.msra.mxu0 0
  %2564 = vmatprep.mubr.bf16.mxu0 0
  %2565 = vmatmul.mubr.bf16.gmra.mrb[0].mxu0 %v2105
  %v2566 = vpop.f32.mrb[0].mxu0
  %v2567 = vadd.f32 %v2175, %v2566
  %v2568 = vpop.f32.mrb[0].mxu0
  %v2569 = vadd.f32 %v2179, %v2568
  %v2570 = vpop.f32.mrb[0].mxu0
  %v2571 = vadd.f32 %v2175, %v2570
  %v2572 = vpop.f32.mrb[0].mxu0
  %v2573 = vadd.f32 %v2179, %v2572
  %2574 = vdwg.mxu0
  %2575 = vmatprep.subr.bf16.mxu0 %v2407
  %2576 = vmatpush1.bf16.msra.mxu0 %v2406
  %2577 = vmatprep.subr.bf16.mxu0 %v2415
  %2578 = vmatpush1.bf16.msra.mxu0 %v2414
  %2579 = vmatprep.subr.bf16.mxu0 %v2423
  %2580 = vmatpush1.bf16.msra.mxu0 %v2422
  %2581 = vmatprep.subr.bf16.mxu0 %v2431
  %2582 = vmatpush1.bf16.msra.mxu0 %v2430
  %2583 = vmatprep.subr.bf16.mxu0 %v2439
  %2584 = vmatpush1.bf16.msra.mxu0 %v2438
  %2585 = vmatprep.subr.bf16.mxu0 %v2447
  %2586 = vmatpush1.bf16.msra.mxu0 %v2446
  %2587 = vmatprep.subr.bf16.mxu0 %v2455
  %2588 = vmatpush1.bf16.msra.mxu0 %v2454
  %2589 = vmatprep.subr.bf16.mxu0 %v2463
  %2590 = vmatpush1.bf16.msra.mxu0 %v2462
  %2591 = vmatprep.subr.bf16.mxu0 0
  %2592 = vmatpush1.bf16.msra.mxu0 0
  %2593 = vmatprep.subr.bf16.mxu0 0
  %2594 = vmatpush1.bf16.msra.mxu0 0
  %2595 = vmatprep.subr.bf16.mxu0 0
  %2596 = vmatpush1.bf16.msra.mxu0 0
  %2597 = vmatprep.subr.bf16.mxu0 0
  %2598 = vmatpush1.bf16.msra.mxu0 0
  %2599 = vmatprep.subr.bf16.mxu0 0
  %2600 = vmatpush1.bf16.msra.mxu0 0
  %2601 = vmatprep.subr.bf16.mxu0 0
  %2602 = vmatpush1.bf16.msra.mxu0 0
  %2603 = vmatprep.subr.bf16.mxu0 0
  %2604 = vmatpush1.bf16.msra.mxu0 0
  %2605 = vmatprep.subr.bf16.mxu0 0
  %2606 = vmatpush1.bf16.msra.mxu0 0
  %2607 = vmatprep.mubr.bf16.mxu0 0
  %2608 = vmatmul.mubr.bf16.gmra.mrb[0].mxu0 %v2105
  %v2609 = vpop.f32.mrb[0].mxu0
  %v2610 = vadd.f32 %v2183, %v2609
  %v2611 = vpop.f32.mrb[0].mxu0
  %v2612 = vadd.f32 %v2187, %v2611
  %v2613 = vpop.f32.mrb[0].mxu0
  %v2614 = vadd.f32 %v2183, %v2613
  %v2615 = vpop.f32.mrb[0].mxu0
  %v2616 = vadd.f32 %v2187, %v2615
  %2617 = vdwg.mxu0
  %2618 = vmatprep.subr.bf16.mxu0 %v2409
  %2619 = vmatpush1.bf16.msra.mxu0 %v2408
  %2620 = vmatprep.subr.bf16.mxu0 %v2417
  %2621 = vmatpush1.bf16.msra.mxu0 %v2416
  %2622 = vmatprep.subr.bf16.mxu0 %v2425
  %2623 = vmatpush1.bf16.msra.mxu0 %v2424
  %2624 = vmatprep.subr.bf16.mxu0 %v2433
  %2625 = vmatpush1.bf16.msra.mxu0 %v2432
  %2626 = vmatprep.subr.bf16.mxu0 %v2441
  %2627 = vmatpush1.bf16.msra.mxu0 %v2440
  %2628 = vmatprep.subr.bf16.mxu0 %v2449
  %2629 = vmatpush1.bf16.msra.mxu0 %v2448
  %2630 = vmatprep.subr.bf16.mxu0 %v2457
  %2631 = vmatpush1.bf16.msra.mxu0 %v2456
  %2632 = vmatprep.subr.bf16.mxu0 %v2465
  %2633 = vmatpush1.bf16.msra.mxu0 %v2464
  %2634 = vmatprep.subr.bf16.mxu0 0
  %2635 = vmatpush1.bf16.msra.mxu0 0
  %2636 = vmatprep.subr.bf16.mxu0 0
  %2637 = vmatpush1.bf16.msra.mxu0 0
  %2638 = vmatprep.subr.bf16.mxu0 0
  %2639 = vmatpush1.bf16.msra.mxu0 0
  %2640 = vmatprep.subr.bf16.mxu0 0
  %2641 = vmatpush1.bf16.msra.mxu0 0
  %2642 = vmatprep.subr.bf16.mxu0 0
  %2643 = vmatpush1.bf16.msra.mxu0 0
  %2644 = vmatprep.subr.bf16.mxu0 0
  %2645 = vmatpush1.bf16.msra.mxu0 0
  %2646 = vmatprep.subr.bf16.mxu0 0
  %2647 = vmatpush1.bf16.msra.mxu0 0
  %2648 = vmatprep.subr.bf16.mxu0 0
  %2649 = vmatpush1.bf16.msra.mxu0 0
  %2650 = vmatprep.mubr.bf16.mxu0 0
  %2651 = vmatmul.mubr.bf16.gmra.mrb[0].mxu0 %v2105
  %v2652 = vpop.f32.mrb[0].mxu0
  %v2653 = vadd.f32 %v2191, %v2652
  %v2654 = vpop.f32.mrb[0].mxu0
  %v2655 = vadd.f32 %v2195, %v2654
  %v2656 = vpop.f32.mrb[0].mxu0
  %v2657 = vadd.f32 %v2191, %v2656
  %v2658 = vpop.f32.mrb[0].mxu0
  %v2659 = vadd.f32 %v2195, %v2658
  %2660 = vdwg.mxu0
  %2661 = vmatprep.subr.bf16.mxu0 %v2411
  %2662 = vmatpush1.bf16.msra.mxu0 %v2410
  %2663 = vmatprep.subr.bf16.mxu0 %v2419
  %2664 = vmatpush1.bf16.msra.mxu0 %v2418
  %2665 = vmatprep.subr.bf16.mxu0 %v2427
  %2666 = vmatpush1.bf16.msra.mxu0 %v2426
  %2667 = vmatprep.subr.bf16.mxu0 %v2435
  %2668 = vmatpush1.bf16.msra.mxu0 %v2434
  %2669 = vmatprep.subr.bf16.mxu0 %v2443
  %2670 = vmatpush1.bf16.msra.mxu0 %v2442
  %2671 = vmatprep.subr.bf16.mxu0 %v2451
  %2672 = vmatpush1.bf16.msra.mxu0 %v2450
  %2673 = vmatprep.subr.bf16.mxu0 %v2459
  %2674 = vmatpush1.bf16.msra.mxu0 %v2458
  %2675 = vmatprep.subr.bf16.mxu0 %v2467
  %2676 = vmatpush1.bf16.msra.mxu0 %v2466
  %2677 = vmatprep.subr.bf16.mxu0 0
  %2678 = vmatpush1.bf16.msra.mxu0 0
  %2679 = vmatprep.subr.bf16.mxu0 0
  %2680 = vmatpush1.bf16.msra.mxu0 0
  %2681 = vmatprep.subr.bf16.mxu0 0
  %2682 = vmatpush1.bf16.msra.mxu0 0
  %2683 = vmatprep.subr.bf16.mxu0 0
  %2684 = vmatpush1.bf16.msra.mxu0 0
  %2685 = vmatprep.subr.bf16.mxu0 0
  %2686 = vmatpush1.bf16.msra.mxu0 0
  %2687 = vmatprep.subr.bf16.mxu0 0
  %2688 = vmatpush1.bf16.msra.mxu0 0
  %2689 = vmatprep.subr.bf16.mxu0 0
  %2690 = vmatpush1.bf16.msra.mxu0 0
  %2691 = vmatprep.subr.bf16.mxu0 0
  %2692 = vmatpush1.bf16.msra.mxu0 0
  %2693 = vmatprep.mubr.bf16.mxu0 0
  %2694 = vmatmul.mubr.bf16.gmra.mrb[0].mxu0 %v2105
  %v2695 = vpop.f32.mrb[0].mxu0
  %v2696 = vadd.f32 %v2199, %v2695
  %v2697 = vpop.f32.mrb[0].mxu0
  %v2698 = vadd.f32 %v2203, %v2697
  %v2699 = vpop.f32.mrb[0].mxu0
  %v2700 = vadd.f32 %v2199, %v2699
  %v2701 = vpop.f32.mrb[0].mxu0
  %v2702 = vadd.f32 %v2203, %v2701
  %2703 = vdwg.mxu0
  %v2704 = vxor.u32 %v2567, 2147483648
  %v2705 = vxor.u32 %v2569, 2147483648
  %v2706 = vxor.u32 %v2610, 2147483648
  %v2707 = vxor.u32 %v2612, 2147483648
  %v2708 = vxor.u32 %v2653, 2147483648
  %v2709 = vxor.u32 %v2655, 2147483648
  %v2710 = vxor.u32 %v2696, 2147483648
  %v2711 = vxor.u32 %v2698, 2147483648
  %v2712 = vxor.u32 %v2571, 2147483648
  %v2713 = vxor.u32 %v2573, 2147483648
  %v2714 = vxor.u32 %v2614, 2147483648
  %v2715 = vxor.u32 %v2616, 2147483648
  %v2716 = vxor.u32 %v2657, 2147483648
  %v2717 = vxor.u32 %v2659, 2147483648
  %v2718 = vxor.u32 %v2700, 2147483648
  %v2719 = vxor.u32 %v2702, 2147483648
  %v2720 = vmul.f32 %v2704, 1.442695
  %v2721 = vpow.pop %v2720
  %v2722 = vmul.f32 %v2705, 1.442695
  %v2723 = vpow.pop %v2722
  %v2724 = vmul.f32 %v2706, 1.442695
  %v2725 = vpow.pop %v2724
  %v2726 = vmul.f32 %v2707, 1.442695
  %v2727 = vpow.pop %v2726
  %v2728 = vmul.f32 %v2708, 1.442695
  %v2729 = vpow.pop %v2728
  %v2730 = vmul.f32 %v2709, 1.442695
  %v2731 = vpow.pop %v2730
  %v2732 = vmul.f32 %v2710, 1.442695
  %v2733 = vpow.pop %v2732
  %v2734 = vmul.f32 %v2711, 1.442695
  %v2735 = vpow.pop %v2734
  %v2736 = vmul.f32 %v2712, 1.442695
  %v2737 = vpow.pop %v2736
  %v2738 = vmul.f32 %v2713, 1.442695
  %v2739 = vpow.pop %v2738
  %v2740 = vmul.f32 %v2714, 1.442695
  %v2741 = vpow.pop %v2740
  %v2742 = vmul.f32 %v2715, 1.442695
  %v2743 = vpow.pop %v2742
  %v2744 = vmul.f32 %v2716, 1.442695
  %v2745 = vpow.pop %v2744
  %v2746 = vmul.f32 %v2717, 1.442695
  %v2747 = vpow.pop %v2746
  %v2748 = vmul.f32 %v2718, 1.442695
  %v2749 = vpow.pop %v2748
  %v2750 = vmul.f32 %v2719, 1.442695
  %v2751 = vpow.pop %v2750
  %v2752 = vadd.f32 %v2721, 1.0
  %v2753 = vadd.f32 %v2723, 1.0
  %v2754 = vadd.f32 %v2725, 1.0
  %v2755 = vadd.f32 %v2727, 1.0
  %v2756 = vadd.f32 %v2729, 1.0
  %v2757 = vadd.f32 %v2731, 1.0
  %v2758 = vadd.f32 %v2733, 1.0
  %v2759 = vadd.f32 %v2735, 1.0
  %v2760 = vadd.f32 %v2737, 1.0
  %v2761 = vadd.f32 %v2739, 1.0
  %v2762 = vadd.f32 %v2741, 1.0
  %v2763 = vadd.f32 %v2743, 1.0
  %v2764 = vadd.f32 %v2745, 1.0
  %v2765 = vadd.f32 %v2747, 1.0
  %v2766 = vadd.f32 %v2749, 1.0
  %v2767 = vadd.f32 %v2751, 1.0
  %v2768 = vrcp.pop %v2752
  %v2769 = vmul.f32 1.0, %v2768
  %v2770 = vrcp.pop %v2753
  %v2771 = vmul.f32 1.0, %v2770
  %v2772 = vrcp.pop %v2754
  %v2773 = vmul.f32 1.0, %v2772
  %v2774 = vrcp.pop %v2755
  %v2775 = vmul.f32 1.0, %v2774
  %v2776 = vrcp.pop %v2756
  %v2777 = vmul.f32 1.0, %v2776
  %v2778 = vrcp.pop %v2757
  %v2779 = vmul.f32 1.0, %v2778
  %v2780 = vrcp.pop %v2758
  %v2781 = vmul.f32 1.0, %v2780
  %v2782 = vrcp.pop %v2759
  %v2783 = vmul.f32 1.0, %v2782
  %v2784 = vrcp.pop %v2760
  %v2785 = vmul.f32 1.0, %v2784
  %v2786 = vrcp.pop %v2761
  %v2787 = vmul.f32 1.0, %v2786
  %v2788 = vrcp.pop %v2762
  %v2789 = vmul.f32 1.0, %v2788
  %v2790 = vrcp.pop %v2763
  %v2791 = vmul.f32 1.0, %v2790
  %v2792 = vrcp.pop %v2764
  %v2793 = vmul.f32 1.0, %v2792
  %v2794 = vrcp.pop %v2765
  %v2795 = vmul.f32 1.0, %v2794
  %v2796 = vrcp.pop %v2766
  %v2797 = vmul.f32 1.0, %v2796
  %v2798 = vrcp.pop %v2767
  %v2799 = vmul.f32 1.0, %v2798
  %2800 = vst [vmem:[%s22] sm:$0xff] %v2769
  %2801 = vst [vmem:[%s22 + $0x8] sm:$0xff] %v2771
  %2802 = vst [vmem:[%s22 + $0x10] sm:$0xff] %v2773
  %2803 = vst [vmem:[%s22 + $0x18] sm:$0xff] %v2775
  %2804 = vst [vmem:[%s22 + $0x20] sm:$0xff] %v2777
  %2805 = vst [vmem:[%s22 + $0x28] sm:$0xff] %v2779
  %2806 = vst [vmem:[%s22 + $0x30] sm:$0xff] %v2781
  %2807 = vst [vmem:[%s22 + $0x38] sm:$0xff] %v2783
  %2808 = vst [vmem:[%s22 + $0x40] sm:$0xff] %v2785
  %2809 = vst [vmem:[%s22 + $0x48] sm:$0xff] %v2787
  %2810 = vst [vmem:[%s22 + $0x50] sm:$0xff] %v2789
  %2811 = vst [vmem:[%s22 + $0x58] sm:$0xff] %v2791
  %2812 = vst [vmem:[%s22 + $0x60] sm:$0xff] %v2793
  %2813 = vst [vmem:[%s22 + $0x68] sm:$0xff] %v2795
  %2814 = vst [vmem:[%s22 + $0x70] sm:$0xff] %v2797
  %2815 = vst [vmem:[%s22 + $0x78] sm:$0xff] %v2799
  %v2816 = vld [vmem:[%s5] sm:$0xf]
  %v2817 = vld [vmem:[%s5 + $0x4] sm:$0xf]
  %v2818 = vld [vmem:[%s5 + $0x8] sm:$0xf]
  %v2819 = vld [vmem:[%s5 + $0xc] sm:$0xf]
  %v2820 = vld [vmem:[%s5 + $0x10] sm:$0xf]
  %v2821 = vld [vmem:[%s5 + $0x14] sm:$0xf]
  %v2822 = vld [vmem:[%s5 + $0x18] sm:$0xf]
  %v2823 = vld [vmem:[%s5 + $0x1c] sm:$0xf]
  %v2824 = vld [vmem:[%s5 + $0x20] sm:$0xf]
  %v2825 = vld [vmem:[%s5 + $0x24] sm:$0xf]
  %v2826 = vld [vmem:[%s5 + $0x28] sm:$0xf]
  %v2827 = vld [vmem:[%s5 + $0x2c] sm:$0xf]
  %v2828 = vld [vmem:[%s5 + $0x30] sm:$0xf]
  %v2829 = vld [vmem:[%s5 + $0x34] sm:$0xf]
  %v2830 = vld [vmem:[%s5 + $0x38] sm:$0xf]
  %v2831 = vld [vmem:[%s5 + $0x3c] sm:$0xf]
  %v2832 = vld [vmem:[%s5 + $0x40] sm:$0xf]
  %v2833 = vld [vmem:[%s5 + $0x44] sm:$0xf]
  %v2834 = vld [vmem:[%s5 + $0x48] sm:$0xf]
  %v2835 = vld [vmem:[%s5 + $0x4c] sm:$0xf]
  %v2836 = vld [vmem:[%s5 + $0x50] sm:$0xf]
  %v2837 = vld [vmem:[%s5 + $0x54] sm:$0xf]
  %v2838 = vld [vmem:[%s5 + $0x58] sm:$0xf]
  %v2839 = vld [vmem:[%s5 + $0x5c] sm:$0xf]
  %v2840 = vld [vmem:[%s5 + $0x60] sm:$0xf]
  %v2841 = vld [vmem:[%s5 + $0x64] sm:$0xf]
  %v2842 = vld [vmem:[%s5 + $0x68] sm:$0xf]
  %v2843 = vld [vmem:[%s5 + $0x6c] sm:$0xf]
  %v2844 = vld [vmem:[%s5 + $0x70] sm:$0xf]
  %v2845 = vld [vmem:[%s5 + $0x74] sm:$0xf]
  %v2846 = vld [vmem:[%s5 + $0x78] sm:$0xf]
  %v2847 = vld [vmem:[%s5 + $0x7c] sm:$0xf]
  %v2848 = vld [vmem:[%s5 + $0x80] sm:$0xf]
  %v2849 = vld [vmem:[%s5 + $0x84] sm:$0xf]
  %v2850 = vld [vmem:[%s5 + $0x88] sm:$0xf]
  %v2851 = vld [vmem:[%s5 + $0x8c] sm:$0xf]
  %v2852 = vld [vmem:[%s5 + $0x90] sm:$0xf]
  %v2853 = vld [vmem:[%s5 + $0x94] sm:$0xf]
  %v2854 = vld [vmem:[%s5 + $0x98] sm:$0xf]
  %v2855 = vld [vmem:[%s5 + $0x9c] sm:$0xf]
  %v2856 = vld [vmem:[%s5 + $0xa0] sm:$0xf]
  %v2857 = vld [vmem:[%s5 + $0xa4] sm:$0xf]
  %v2858 = vld [vmem:[%s5 + $0xa8] sm:$0xf]
  %v2859 = vld [vmem:[%s5 + $0xac] sm:$0xf]
  %v2860 = vld [vmem:[%s5 + $0xb0] sm:$0xf]
  %v2861 = vld [vmem:[%s5 + $0xb4] sm:$0xf]
  %v2862 = vld [vmem:[%s5 + $0xb8] sm:$0xf]
  %v2863 = vld [vmem:[%s5 + $0xbc] sm:$0xf]
  %v2864 = vld [vmem:[%s5 + $0xc0] sm:$0xf]
  %v2865 = vld [vmem:[%s5 + $0xc4] sm:$0xf]
  %v2866 = vld [vmem:[%s5 + $0xc8] sm:$0xf]
  %v2867 = vld [vmem:[%s5 + $0xcc] sm:$0xf]
  %v2868 = vld [vmem:[%s5 + $0xd0] sm:$0xf]
  %v2869 = vld [vmem:[%s5 + $0xd4] sm:$0xf]
  %v2870 = vld [vmem:[%s5 + $0xd8] sm:$0xf]
  %v2871 = vld [vmem:[%s5 + $0xdc] sm:$0xf]
  %v2872 = vld [vmem:[%s5 + $0xe0] sm:$0xf]
  %v2873 = vld [vmem:[%s5 + $0xe4] sm:$0xf]
  %v2874 = vld [vmem:[%s5 + $0xe8] sm:$0xf]
  %v2875 = vld [vmem:[%s5 + $0xec] sm:$0xf]
  %v2876 = vld [vmem:[%s5 + $0xf0] sm:$0xf]
  %v2877 = vld [vmem:[%s5 + $0xf4] sm:$0xf]
  %v2878 = vld [vmem:[%s5 + $0xf8] sm:$0xf]
  %v2879 = vld [vmem:[%s5 + $0xfc] sm:$0xf]
  %v2880 = vld [vmem:[%s5 + $0x100] sm:$0xf]
  %v2881 = vld [vmem:[%s5 + $0x104] sm:$0xf]
  %v2882 = vld [vmem:[%s5 + $0x108] sm:$0xf]
  %v2883 = vld [vmem:[%s5 + $0x10c] sm:$0xf]
  %v2884 = vld [vmem:[%s5 + $0x110] sm:$0xf]
  %v2885 = vld [vmem:[%s5 + $0x114] sm:$0xf]
  %v2886 = vld [vmem:[%s5 + $0x118] sm:$0xf]
  %v2887 = vld [vmem:[%s5 + $0x11c] sm:$0xf]
  %v2888 = vld [vmem:[%s5 + $0x120] sm:$0xf]
  %v2889 = vld [vmem:[%s5 + $0x124] sm:$0xf]
  %v2890 = vld [vmem:[%s5 + $0x128] sm:$0xf]
  %v2891 = vld [vmem:[%s5 + $0x12c] sm:$0xf]
  %v2892 = vld [vmem:[%s5 + $0x130] sm:$0xf]
  %v2893 = vld [vmem:[%s5 + $0x134] sm:$0xf]
  %v2894 = vld [vmem:[%s5 + $0x138] sm:$0xf]
  %v2895 = vld [vmem:[%s5 + $0x13c] sm:$0xf]
  %v2896 = vld [vmem:[%s5 + $0x140] sm:$0xf]
  %v2897 = vld [vmem:[%s5 + $0x144] sm:$0xf]
  %v2898 = vld [vmem:[%s5 + $0x148] sm:$0xf]
  %v2899 = vld [vmem:[%s5 + $0x14c] sm:$0xf]
  %v2900 = vld [vmem:[%s5 + $0x150] sm:$0xf]
  %v2901 = vld [vmem:[%s5 + $0x154] sm:$0xf]
  %v2902 = vld [vmem:[%s5 + $0x158] sm:$0xf]
  %v2903 = vld [vmem:[%s5 + $0x15c] sm:$0xf]
  %v2904 = vld [vmem:[%s5 + $0x160] sm:$0xf]
  %v2905 = vld [vmem:[%s5 + $0x164] sm:$0xf]
  %v2906 = vld [vmem:[%s5 + $0x168] sm:$0xf]
  %v2907 = vld [vmem:[%s5 + $0x16c] sm:$0xf]
  %v2908 = vld [vmem:[%s5 + $0x170] sm:$0xf]
  %v2909 = vld [vmem:[%s5 + $0x174] sm:$0xf]
  %v2910 = vld [vmem:[%s5 + $0x178] sm:$0xf]
  %v2911 = vld [vmem:[%s5 + $0x17c] sm:$0xf]
  %v2912 = vld [vmem:[%s5 + $0x180] sm:$0xf]
  %v2913 = vld [vmem:[%s5 + $0x184] sm:$0xf]
  %v2914 = vld [vmem:[%s5 + $0x188] sm:$0xf]
  %v2915 = vld [vmem:[%s5 + $0x18c] sm:$0xf]
  %v2916 = vld [vmem:[%s5 + $0x190] sm:$0xf]
  %v2917 = vld [vmem:[%s5 + $0x194] sm:$0xf]
  %v2918 = vld [vmem:[%s5 + $0x198] sm:$0xf]
  %v2919 = vld [vmem:[%s5 + $0x19c] sm:$0xf]
  %v2920 = vld [vmem:[%s5 + $0x1a0] sm:$0xf]
  %v2921 = vld [vmem:[%s5 + $0x1a4] sm:$0xf]
  %v2922 = vld [vmem:[%s5 + $0x1a8] sm:$0xf]
  %v2923 = vld [vmem:[%s5 + $0x1ac] sm:$0xf]
  %v2924 = vld [vmem:[%s5 + $0x1b0] sm:$0xf]
  %v2925 = vld [vmem:[%s5 + $0x1b4] sm:$0xf]
  %v2926 = vld [vmem:[%s5 + $0x1b8] sm:$0xf]
  %v2927 = vld [vmem:[%s5 + $0x1bc] sm:$0xf]
  %v2928 = vld [vmem:[%s5 + $0x1c0] sm:$0xf]
  %v2929 = vld [vmem:[%s5 + $0x1c4] sm:$0xf]
  %v2930 = vld [vmem:[%s5 + $0x1c8] sm:$0xf]
  %v2931 = vld [vmem:[%s5 + $0x1cc] sm:$0xf]
  %v2932 = vld [vmem:[%s5 + $0x1d0] sm:$0xf]
  %v2933 = vld [vmem:[%s5 + $0x1d4] sm:$0xf]
  %v2934 = vld [vmem:[%s5 + $0x1d8] sm:$0xf]
  %v2935 = vld [vmem:[%s5 + $0x1dc] sm:$0xf]
  %v2936 = vld [vmem:[%s5 + $0x1e0] sm:$0xf]
  %v2937 = vld [vmem:[%s5 + $0x1e4] sm:$0xf]
  %v2938 = vld [vmem:[%s5 + $0x1e8] sm:$0xf]
  %v2939 = vld [vmem:[%s5 + $0x1ec] sm:$0xf]
  %v2940 = vld [vmem:[%s5 + $0x1f0] sm:$0xf]
  %v2941 = vld [vmem:[%s5 + $0x1f4] sm:$0xf]
  %v2942 = vld [vmem:[%s5 + $0x1f8] sm:$0xf]
  %v2943 = vld [vmem:[%s5 + $0x1fc] sm:$0xf]
  %v2952 = vunpack.c.l.b16 %v79
  %v2953 = vunpack.c.h.b16 %v79
  %v2954 = vunpack.c.l.b16 %v80
  %v2955 = vunpack.c.h.b16 %v80
  %v2956 = vunpack.c.l.b16 %v81
  %v2957 = vunpack.c.h.b16 %v81
  %v2958 = vunpack.c.l.b16 %v82
  %v2959 = vunpack.c.h.b16 %v82
  %v2960 = vunpack.c.l.b16 %v83
  %v2961 = vunpack.c.h.b16 %v83
  %v2962 = vunpack.c.l.b16 %v84
  %v2963 = vunpack.c.h.b16 %v84
  %v2964 = vunpack.c.l.b16 %v85
  %v2965 = vunpack.c.h.b16 %v85
  %v2966 = vunpack.c.l.b16 %v86
  %v2967 = vunpack.c.h.b16 %v86
  %v2968 = vpack.c.b16 %v2960, %v2952
  %v2969 = vpack.c.b16 %v2961, %v2953
  %v2970 = vpack.c.b16 %v2962, %v2954
  %v2971 = vpack.c.b16 %v2963, %v2955
  %v2972 = vpack.c.b16 %v2964, %v2956
  %v2973 = vpack.c.b16 %v2965, %v2957
  %v2974 = vpack.c.b16 %v2966, %v2958
  %v2975 = vpack.c.b16 %v2967, %v2959
  %v3112 = vunpack.c.l.b16 %v2816
  %v3113 = vunpack.c.l.b16 %v2817
  %v3114 = vunpack.c.l.b16 %v2818
  %v3115 = vunpack.c.l.b16 %v2819
  %v3116 = vunpack.c.l.b16 %v2820
  %v3117 = vunpack.c.l.b16 %v2821
  %v3118 = vunpack.c.l.b16 %v2822
  %v3119 = vunpack.c.l.b16 %v2823
  %v3120 = vunpack.c.l.b16 %v2824
  %v3121 = vunpack.c.l.b16 %v2825
  %v3122 = vunpack.c.l.b16 %v2826
  %v3123 = vunpack.c.l.b16 %v2827
  %v3124 = vunpack.c.l.b16 %v2828
  %v3125 = vunpack.c.l.b16 %v2829
  %v3126 = vunpack.c.l.b16 %v2830
  %v3127 = vunpack.c.l.b16 %v2831
  %v3128 = vunpack.c.l.b16 %v2832
  %v3129 = vunpack.c.l.b16 %v2833
  %v3130 = vunpack.c.l.b16 %v2834
  %v3131 = vunpack.c.l.b16 %v2835
  %v3132 = vunpack.c.l.b16 %v2836
  %v3133 = vunpack.c.l.b16 %v2837
  %v3134 = vunpack.c.l.b16 %v2838
  %v3135 = vunpack.c.l.b16 %v2839
  %v3136 = vunpack.c.l.b16 %v2840
  %v3137 = vunpack.c.l.b16 %v2841
  %v3138 = vunpack.c.l.b16 %v2842
  %v3139 = vunpack.c.l.b16 %v2843
  %v3140 = vunpack.c.l.b16 %v2844
  %v3141 = vunpack.c.l.b16 %v2845
  %v3142 = vunpack.c.l.b16 %v2846
  %v3143 = vunpack.c.l.b16 %v2847
  %v3144 = vunpack.c.l.b16 %v2848
  %v3145 = vunpack.c.l.b16 %v2849
  %v3146 = vunpack.c.l.b16 %v2850
  %v3147 = vunpack.c.l.b16 %v2851
  %v3148 = vunpack.c.l.b16 %v2852
  %v3149 = vunpack.c.l.b16 %v2853
  %v3150 = vunpack.c.l.b16 %v2854
  %v3151 = vunpack.c.l.b16 %v2855
  %v3152 = vunpack.c.l.b16 %v2856
  %v3153 = vunpack.c.l.b16 %v2857
  %v3154 = vunpack.c.l.b16 %v2858
  %v3155 = vunpack.c.l.b16 %v2859
  %v3156 = vunpack.c.l.b16 %v2860
  %v3157 = vunpack.c.l.b16 %v2861
  %v3158 = vunpack.c.l.b16 %v2862
  %v3159 = vunpack.c.l.b16 %v2863
  %v3160 = vunpack.c.l.b16 %v2864
  %v3161 = vunpack.c.l.b16 %v2865
  %v3162 = vunpack.c.l.b16 %v2866
  %v3163 = vunpack.c.l.b16 %v2867
  %v3164 = vunpack.c.l.b16 %v2868
  %v3165 = vunpack.c.l.b16 %v2869
  %v3166 = vunpack.c.l.b16 %v2870
  %v3167 = vunpack.c.l.b16 %v2871
  %v3168 = vunpack.c.l.b16 %v2872
  %v3169 = vunpack.c.l.b16 %v2873
  %v3170 = vunpack.c.l.b16 %v2874
  %v3171 = vunpack.c.l.b16 %v2875
  %v3172 = vunpack.c.l.b16 %v2876
  %v3173 = vunpack.c.l.b16 %v2877
  %v3174 = vunpack.c.l.b16 %v2878
  %v3175 = vunpack.c.l.b16 %v2879
  %v3176 = vunpack.c.l.b16 %v2880
  %v3177 = vunpack.c.l.b16 %v2881
  %v3178 = vunpack.c.l.b16 %v2882
  %v3179 = vunpack.c.l.b16 %v2883
  %v3180 = vunpack.c.l.b16 %v2884
  %v3181 = vunpack.c.l.b16 %v2885
  %v3182 = vunpack.c.l.b16 %v2886
  %v3183 = vunpack.c.l.b16 %v2887
  %v3184 = vunpack.c.l.b16 %v2888
  %v3185 = vunpack.c.l.b16 %v2889
  %v3186 = vunpack.c.l.b16 %v2890
  %v3187 = vunpack.c.l.b16 %v2891
  %v3188 = vunpack.c.l.b16 %v2892
  %v3189 = vunpack.c.l.b16 %v2893
  %v3190 = vunpack.c.l.b16 %v2894
  %v3191 = vunpack.c.l.b16 %v2895
  %v3192 = vunpack.c.l.b16 %v2896
  %v3193 = vunpack.c.l.b16 %v2897
  %v3194 = vunpack.c.l.b16 %v2898
  %v3195 = vunpack.c.l.b16 %v2899
  %v3196 = vunpack.c.l.b16 %v2900
  %v3197 = vunpack.c.l.b16 %v2901
  %v3198 = vunpack.c.l.b16 %v2902
  %v3199 = vunpack.c.l.b16 %v2903
  %v3200 = vunpack.c.l.b16 %v2904
  %v3201 = vunpack.c.l.b16 %v2905
  %v3202 = vunpack.c.l.b16 %v2906
  %v3203 = vunpack.c.l.b16 %v2907
  %v3204 = vunpack.c.l.b16 %v2908
  %v3205 = vunpack.c.l.b16 %v2909
  %v3206 = vunpack.c.l.b16 %v2910
  %v3207 = vunpack.c.l.b16 %v2911
  %v3208 = vunpack.c.l.b16 %v2912
  %v3209 = vunpack.c.l.b16 %v2913
  %v3210 = vunpack.c.l.b16 %v2914
  %v3211 = vunpack.c.l.b16 %v2915
  %v3212 = vunpack.c.l.b16 %v2916
  %v3213 = vunpack.c.l.b16 %v2917
  %v3214 = vunpack.c.l.b16 %v2918
  %v3215 = vunpack.c.l.b16 %v2919
  %v3216 = vunpack.c.l.b16 %v2920
  %v3217 = vunpack.c.l.b16 %v2921
  %v3218 = vunpack.c.l.b16 %v2922
  %v3219 = vunpack.c.l.b16 %v2923
  %v3220 = vunpack.c.l.b16 %v2924
  %v3221 = vunpack.c.l.b16 %v2925
  %v3222 = vunpack.c.l.b16 %v2926
  %v3223 = vunpack.c.l.b16 %v2927
  %v3224 = vunpack.c.l.b16 %v2928
  %v3225 = vunpack.c.l.b16 %v2929
  %v3226 = vunpack.c.l.b16 %v2930
  %v3227 = vunpack.c.l.b16 %v2931
  %v3228 = vunpack.c.l.b16 %v2932
  %v3229 = vunpack.c.l.b16 %v2933
  %v3230 = vunpack.c.l.b16 %v2934
  %v3231 = vunpack.c.l.b16 %v2935
  %v3232 = vunpack.c.l.b16 %v2936
  %v3233 = vunpack.c.l.b16 %v2937
  %v3234 = vunpack.c.l.b16 %v2938
  %v3235 = vunpack.c.l.b16 %v2939
  %v3236 = vunpack.c.l.b16 %v2940
  %v3237 = vunpack.c.l.b16 %v2941
  %v3238 = vunpack.c.l.b16 %v2942
  %v3239 = vunpack.c.l.b16 %v2943
  %v3240 = vpack.c.b16 %v3113, %v3112
  %v3241 = vpack.c.b16 %v3115, %v3114
  %v3242 = vpack.c.b16 %v3117, %v3116
  %v3243 = vpack.c.b16 %v3119, %v3118
  %v3244 = vpack.c.b16 %v3121, %v3120
  %v3245 = vpack.c.b16 %v3123, %v3122
  %v3246 = vpack.c.b16 %v3125, %v3124
  %v3247 = vpack.c.b16 %v3127, %v3126
  %v3248 = vpack.c.b16 %v3129, %v3128
  %v3249 = vpack.c.b16 %v3131, %v3130
  %v3250 = vpack.c.b16 %v3133, %v3132
  %v3251 = vpack.c.b16 %v3135, %v3134
  %v3252 = vpack.c.b16 %v3137, %v3136
  %v3253 = vpack.c.b16 %v3139, %v3138
  %v3254 = vpack.c.b16 %v3141, %v3140
  %v3255 = vpack.c.b16 %v3143, %v3142
  %v3256 = vpack.c.b16 %v3145, %v3144
  %v3257 = vpack.c.b16 %v3147, %v3146
  %v3258 = vpack.c.b16 %v3149, %v3148
  %v3259 = vpack.c.b16 %v3151, %v3150
  %v3260 = vpack.c.b16 %v3153, %v3152
  %v3261 = vpack.c.b16 %v3155, %v3154
  %v3262 = vpack.c.b16 %v3157, %v3156
  %v3263 = vpack.c.b16 %v3159, %v3158
  %v3264 = vpack.c.b16 %v3161, %v3160
  %v3265 = vpack.c.b16 %v3163, %v3162
  %v3266 = vpack.c.b16 %v3165, %v3164
  %v3267 = vpack.c.b16 %v3167, %v3166
  %v3268 = vpack.c.b16 %v3169, %v3168
  %v3269 = vpack.c.b16 %v3171, %v3170
  %v3270 = vpack.c.b16 %v3173, %v3172
  %v3271 = vpack.c.b16 %v3175, %v3174
  %v3272 = vpack.c.b16 %v3177, %v3176
  %v3273 = vpack.c.b16 %v3179, %v3178
  %v3274 = vpack.c.b16 %v3181, %v3180
  %v3275 = vpack.c.b16 %v3183, %v3182
  %v3276 = vpack.c.b16 %v3185, %v3184
  %v3277 = vpack.c.b16 %v3187, %v3186
  %v3278 = vpack.c.b16 %v3189, %v3188
  %v3279 = vpack.c.b16 %v3191, %v3190
  %v3280 = vpack.c.b16 %v3193, %v3192
  %v3281 = vpack.c.b16 %v3195, %v3194
  %v3282 = vpack.c.b16 %v3197, %v3196
  %v3283 = vpack.c.b16 %v3199, %v3198
  %v3284 = vpack.c.b16 %v3201, %v3200
  %v3285 = vpack.c.b16 %v3203, %v3202
  %v3286 = vpack.c.b16 %v3205, %v3204
  %v3287 = vpack.c.b16 %v3207, %v3206
  %v3288 = vpack.c.b16 %v3209, %v3208
  %v3289 = vpack.c.b16 %v3211, %v3210
  %v3290 = vpack.c.b16 %v3213, %v3212
  %v3291 = vpack.c.b16 %v3215, %v3214
  %v3292 = vpack.c.b16 %v3217, %v3216
  %v3293 = vpack.c.b16 %v3219, %v3218
  %v3294 = vpack.c.b16 %v3221, %v3220
  %v3295 = vpack.c.b16 %v3223, %v3222
  %v3296 = vpack.c.b16 %v3225, %v3224
  %v3297 = vpack.c.b16 %v3227, %v3226
  %v3298 = vpack.c.b16 %v3229, %v3228
  %v3299 = vpack.c.b16 %v3231, %v3230
  %v3300 = vpack.c.b16 %v3233, %v3232
  %v3301 = vpack.c.b16 %v3235, %v3234
  %v3302 = vpack.c.b16 %v3237, %v3236
  %v3303 = vpack.c.b16 %v3239, %v3238
  %3368 = vmatprep.subr.bf16.mxu0 0
  %3369 = vmatpush1.bf16.msra.mxu0 %v3240
  %3370 = vmatprep.subr.bf16.mxu0 0
  %3371 = vmatpush1.bf16.msra.mxu0 %v3241
  %3372 = vmatprep.subr.bf16.mxu0 0
  %3373 = vmatpush1.bf16.msra.mxu0 %v3242
  %3374 = vmatprep.subr.bf16.mxu0 0
  %3375 = vmatpush1.bf16.msra.mxu0 %v3243
  %3376 = vmatprep.subr.bf16.mxu0 0
  %3377 = vmatpush1.bf16.msra.mxu0 %v3244
  %3378 = vmatprep.subr.bf16.mxu0 0
  %3379 = vmatpush1.bf16.msra.mxu0 %v3245
  %3380 = vmatprep.subr.bf16.mxu0 0
  %3381 = vmatpush1.bf16.msra.mxu0 %v3246
  %3382 = vmatprep.subr.bf16.mxu0 0
  %3383 = vmatpush1.bf16.msra.mxu0 %v3247
  %3384 = vmatprep.subr.bf16.mxu0 0
  %3385 = vmatpush1.bf16.msra.mxu0 %v3248
  %3386 = vmatprep.subr.bf16.mxu0 0
  %3387 = vmatpush1.bf16.msra.mxu0 %v3249
  %3388 = vmatprep.subr.bf16.mxu0 0
  %3389 = vmatpush1.bf16.msra.mxu0 %v3250
  %3390 = vmatprep.subr.bf16.mxu0 0
  %3391 = vmatpush1.bf16.msra.mxu0 %v3251
  %3392 = vmatprep.subr.bf16.mxu0 0
  %3393 = vmatpush1.bf16.msra.mxu0 %v3252
  %3394 = vmatprep.subr.bf16.mxu0 0
  %3395 = vmatpush1.bf16.msra.mxu0 %v3253
  %3396 = vmatprep.subr.bf16.mxu0 0
  %3397 = vmatpush1.bf16.msra.mxu0 %v3254
  %3398 = vmatprep.subr.bf16.mxu0 0
  %3399 = vmatpush1.bf16.msra.mxu0 %v3255
  %3400 = vmatprep.mubr.bf16.mxu0 %v2969
  %3401 = vmatmul.mubr.bf16.gmra.mrb[0].mxu0 %v2968
  %v3402 = vpop.f32.mrb[0].mxu0
  %v3403 = vadd.f32 %v1577, %v3402
  %v3404 = vpop.f32.mrb[0].mxu0
  %v3405 = vpop.f32.mrb[0].mxu0
  %v3406 = vadd.f32 %v1581, %v3405
  %v3407 = vpop.f32.mrb[0].mxu0
  %3408 = vdwg.mxu0
  %3409 = vmatprep.subr.bf16.mxu0 0
  %3410 = vmatpush1.bf16.msra.mxu0 %v3256
  %3411 = vmatprep.subr.bf16.mxu0 0
  %3412 = vmatpush1.bf16.msra.mxu0 %v3257
  %3413 = vmatprep.subr.bf16.mxu0 0
  %3414 = vmatpush1.bf16.msra.mxu0 %v3258
  %3415 = vmatprep.subr.bf16.mxu0 0
  %3416 = vmatpush1.bf16.msra.mxu0 %v3259
  %3417 = vmatprep.subr.bf16.mxu0 0
  %3418 = vmatpush1.bf16.msra.mxu0 %v3260
  %3419 = vmatprep.subr.bf16.mxu0 0
  %3420 = vmatpush1.bf16.msra.mxu0 %v3261
  %3421 = vmatprep.subr.bf16.mxu0 0
  %3422 = vmatpush1.bf16.msra.mxu0 %v3262
  %3423 = vmatprep.subr.bf16.mxu0 0
  %3424 = vmatpush1.bf16.msra.mxu0 %v3263
  %3425 = vmatprep.subr.bf16.mxu0 0
  %3426 = vmatpush1.bf16.msra.mxu0 %v3264
  %3427 = vmatprep.subr.bf16.mxu0 0
  %3428 = vmatpush1.bf16.msra.mxu0 %v3265
  %3429 = vmatprep.subr.bf16.mxu0 0
  %3430 = vmatpush1.bf16.msra.mxu0 %v3266
  %3431 = vmatprep.subr.bf16.mxu0 0
  %3432 = vmatpush1.bf16.msra.mxu0 %v3267
  %3433 = vmatprep.subr.bf16.mxu0 0
  %3434 = vmatpush1.bf16.msra.mxu0 %v3268
  %3435 = vmatprep.subr.bf16.mxu0 0
  %3436 = vmatpush1.bf16.msra.mxu0 %v3269
  %3437 = vmatprep.subr.bf16.mxu0 0
  %3438 = vmatpush1.bf16.msra.mxu0 %v3270
  %3439 = vmatprep.subr.bf16.mxu0 0
  %3440 = vmatpush1.bf16.msra.mxu0 %v3271
  %3441 = vmatprep.mubr.bf16.mxu0 %v2971
  %3442 = vmatmul.mubr.bf16.gmra.mrb[0].mxu0 %v2970
  %v3443 = vpop.f32.mrb[0].mxu0
  %v3444 = vadd.f32 %v3403, %v3443
  %v3445 = vpop.f32.mrb[0].mxu0
  %v3446 = vpop.f32.mrb[0].mxu0
  %v3447 = vadd.f32 %v3406, %v3446
  %v3448 = vpop.f32.mrb[0].mxu0
  %3449 = vdwg.mxu0
  %3450 = vmatprep.subr.bf16.mxu0 0
  %3451 = vmatpush1.bf16.msra.mxu0 %v3272
  %3452 = vmatprep.subr.bf16.mxu0 0
  %3453 = vmatpush1.bf16.msra.mxu0 %v3273
  %3454 = vmatprep.subr.bf16.mxu0 0
  %3455 = vmatpush1.bf16.msra.mxu0 %v3274
  %3456 = vmatprep.subr.bf16.mxu0 0
  %3457 = vmatpush1.bf16.msra.mxu0 %v3275
  %3458 = vmatprep.subr.bf16.mxu0 0
  %3459 = vmatpush1.bf16.msra.mxu0 %v3276
  %3460 = vmatprep.subr.bf16.mxu0 0
  %3461 = vmatpush1.bf16.msra.mxu0 %v3277
  %3462 = vmatprep.subr.bf16.mxu0 0
  %3463 = vmatpush1.bf16.msra.mxu0 %v3278
  %3464 = vmatprep.subr.bf16.mxu0 0
  %3465 = vmatpush1.bf16.msra.mxu0 %v3279
  %3466 = vmatprep.subr.bf16.mxu0 0
  %3467 = vmatpush1.bf16.msra.mxu0 %v3280
  %3468 = vmatprep.subr.bf16.mxu0 0
  %3469 = vmatpush1.bf16.msra.mxu0 %v3281
  %3470 = vmatprep.subr.bf16.mxu0 0
  %3471 = vmatpush1.bf16.msra.mxu0 %v3282
  %3472 = vmatprep.subr.bf16.mxu0 0
  %3473 = vmatpush1.bf16.msra.mxu0 %v3283
  %3474 = vmatprep.subr.bf16.mxu0 0
  %3475 = vmatpush1.bf16.msra.mxu0 %v3284
  %3476 = vmatprep.subr.bf16.mxu0 0
  %3477 = vmatpush1.bf16.msra.mxu0 %v3285
  %3478 = vmatprep.subr.bf16.mxu0 0
  %3479 = vmatpush1.bf16.msra.mxu0 %v3286
  %3480 = vmatprep.subr.bf16.mxu0 0
  %3481 = vmatpush1.bf16.msra.mxu0 %v3287
  %3482 = vmatprep.mubr.bf16.mxu0 %v2973
  %3483 = vmatmul.mubr.bf16.gmra.mrb[0].mxu0 %v2972
  %v3484 = vpop.f32.mrb[0].mxu0
  %v3485 = vadd.f32 %v3444, %v3484
  %v3486 = vpop.f32.mrb[0].mxu0
  %v3487 = vpop.f32.mrb[0].mxu0
  %v3488 = vadd.f32 %v3447, %v3487
  %v3489 = vpop.f32.mrb[0].mxu0
  %3490 = vdwg.mxu0
  %3491 = vmatprep.subr.bf16.mxu0 0
  %3492 = vmatpush1.bf16.msra.mxu0 %v3288
  %3493 = vmatprep.subr.bf16.mxu0 0
  %3494 = vmatpush1.bf16.msra.mxu0 %v3289
  %3495 = vmatprep.subr.bf16.mxu0 0
  %3496 = vmatpush1.bf16.msra.mxu0 %v3290
  %3497 = vmatprep.subr.bf16.mxu0 0
  %3498 = vmatpush1.bf16.msra.mxu0 %v3291
  %3499 = vmatprep.subr.bf16.mxu0 0
  %3500 = vmatpush1.bf16.msra.mxu0 %v3292
  %3501 = vmatprep.subr.bf16.mxu0 0
  %3502 = vmatpush1.bf16.msra.mxu0 %v3293
  %3503 = vmatprep.subr.bf16.mxu0 0
  %3504 = vmatpush1.bf16.msra.mxu0 %v3294
  %3505 = vmatprep.subr.bf16.mxu0 0
  %3506 = vmatpush1.bf16.msra.mxu0 %v3295
  %3507 = vmatprep.subr.bf16.mxu0 0
  %3508 = vmatpush1.bf16.msra.mxu0 %v3296
  %3509 = vmatprep.subr.bf16.mxu0 0
  %3510 = vmatpush1.bf16.msra.mxu0 %v3297
  %3511 = vmatprep.subr.bf16.mxu0 0
  %3512 = vmatpush1.bf16.msra.mxu0 %v3298
  %3513 = vmatprep.subr.bf16.mxu0 0
  %3514 = vmatpush1.bf16.msra.mxu0 %v3299
  %3515 = vmatprep.subr.bf16.mxu0 0
  %3516 = vmatpush1.bf16.msra.mxu0 %v3300
  %3517 = vmatprep.subr.bf16.mxu0 0
  %3518 = vmatpush1.bf16.msra.mxu0 %v3301
  %3519 = vmatprep.subr.bf16.mxu0 0
  %3520 = vmatpush1.bf16.msra.mxu0 %v3302
  %3521 = vmatprep.subr.bf16.mxu0 0
  %3522 = vmatpush1.bf16.msra.mxu0 %v3303
  %3523 = vmatprep.mubr.bf16.mxu0 %v2975
  %3524 = vmatmul.mubr.bf16.gmra.mrb[0].mxu0 %v2974
  %v3525 = vpop.f32.mrb[0].mxu0
  %v3526 = vadd.f32 %v3485, %v3525
  %v3527 = vpop.f32.mrb[0].mxu0
  %v3528 = vpop.f32.mrb[0].mxu0
  %v3529 = vadd.f32 %v3488, %v3528
  %v3530 = vpop.f32.mrb[0].mxu0
  %3531 = vdwg.mxu0
  %v3532 = vadd.f32 %v3526, %v1884
  %v3533 = vadd.f32 %v3529, %v1888
  %v3534 = vld [vmem:[%s8] sm:$0x1]
  %v3536 = vlaneseq
  %v3537 = vshrl.u32 %v3536, 7
  %v3538 = vsub.s32 0, %v3537
  %v3539 = vrot.slane %v3534, %v3538
  %v3541 = vadd.f32 %v3532, %v3539
  %v3542 = vadd.f32 %v3533, %v3539
  %v3543 = vmax.f32 %v3541, 0.0
  %v3544 = vmax.f32 %v3542, 0.0
  %v3545 = vpack.c.bf16 %v3544, %v3543
  %v3546 = vld [vmem:[%s12] sm:$0xf]
  %v3547 = vld [vmem:[%s12 + $0x4] sm:$0xf]
  %v3548 = vld [vmem:[%s12 + $0x8] sm:$0xf]
  %v3549 = vld [vmem:[%s12 + $0xc] sm:$0xf]
  %v3550 = vld [vmem:[%s12 + $0x10] sm:$0xf]
  %v3551 = vld [vmem:[%s12 + $0x14] sm:$0xf]
  %v3552 = vld [vmem:[%s12 + $0x18] sm:$0xf]
  %v3553 = vld [vmem:[%s12 + $0x1c] sm:$0xf]
  %v3554 = vld [vmem:[%s12 + $0x20] sm:$0xf]
  %v3555 = vld [vmem:[%s12 + $0x24] sm:$0xf]
  %v3556 = vld [vmem:[%s12 + $0x28] sm:$0xf]
  %v3557 = vld [vmem:[%s12 + $0x2c] sm:$0xf]
  %v3558 = vld [vmem:[%s12 + $0x30] sm:$0xf]
  %v3559 = vld [vmem:[%s12 + $0x34] sm:$0xf]
  %v3560 = vld [vmem:[%s12 + $0x38] sm:$0xf]
  %v3561 = vld [vmem:[%s12 + $0x3c] sm:$0xf]
  %v3562 = vld [vmem:[%s13] sm:$0x1]
  %v3564 = vlaneseq
  %v3565 = vshrl.u32 %v3564, 7
  %v3566 = vsub.s32 0, %v3565
  %v3567 = vrot.slane %v3562, %v3566
  %v3585 = vunpack.c.l.b16 %v3546
  %v3586 = vunpack.c.l.b16 %v3547
  %v3587 = vunpack.c.l.b16 %v3548
  %v3588 = vunpack.c.l.b16 %v3549
  %v3589 = vunpack.c.l.b16 %v3550
  %v3590 = vunpack.c.l.b16 %v3551
  %v3591 = vunpack.c.l.b16 %v3552
  %v3592 = vunpack.c.l.b16 %v3553
  %v3593 = vunpack.c.l.b16 %v3554
  %v3594 = vunpack.c.l.b16 %v3555
  %v3595 = vunpack.c.l.b16 %v3556
  %v3596 = vunpack.c.l.b16 %v3557
  %v3597 = vunpack.c.l.b16 %v3558
  %v3598 = vunpack.c.l.b16 %v3559
  %v3599 = vunpack.c.l.b16 %v3560
  %v3600 = vunpack.c.l.b16 %v3561
  %v3601 = vpack.c.b16 %v3586, %v3585
  %v3602 = vpack.c.b16 %v3588, %v3587
  %v3603 = vpack.c.b16 %v3590, %v3589
  %v3604 = vpack.c.b16 %v3592, %v3591
  %v3605 = vpack.c.b16 %v3594, %v3593
  %v3606 = vpack.c.b16 %v3596, %v3595
  %v3607 = vpack.c.b16 %v3598, %v3597
  %v3608 = vpack.c.b16 %v3600, %v3599
  %3617 = vmatprep.subr.bf16.mxu0 0
  %3618 = vmatpush1.bf16.msra.mxu0 %v3601
  %3619 = vmatprep.subr.bf16.mxu0 0
  %3620 = vmatpush1.bf16.msra.mxu0 %v3602
  %3621 = vmatprep.subr.bf16.mxu0 0
  %3622 = vmatpush1.bf16.msra.mxu0 %v3603
  %3623 = vmatprep.subr.bf16.mxu0 0
  %3624 = vmatpush1.bf16.msra.mxu0 %v3604
  %3625 = vmatprep.subr.bf16.mxu0 0
  %3626 = vmatpush1.bf16.msra.mxu0 %v3605
  %3627 = vmatprep.subr.bf16.mxu0 0
  %3628 = vmatpush1.bf16.msra.mxu0 %v3606
  %3629 = vmatprep.subr.bf16.mxu0 0
  %3630 = vmatpush1.bf16.msra.mxu0 %v3607
  %3631 = vmatprep.subr.bf16.mxu0 0
  %3632 = vmatpush1.bf16.msra.mxu0 %v3608
  %3633 = vmatprep.subr.bf16.mxu0 0
  %3634 = vmatpush1.bf16.msra.mxu0 0
  %3635 = vmatprep.subr.bf16.mxu0 0
  %3636 = vmatpush1.bf16.msra.mxu0 0
  %3637 = vmatprep.subr.bf16.mxu0 0
  %3638 = vmatpush1.bf16.msra.mxu0 0
  %3639 = vmatprep.subr.bf16.mxu0 0
  %3640 = vmatpush1.bf16.msra.mxu0 0
  %3641 = vmatprep.subr.bf16.mxu0 0
  %3642 = vmatpush1.bf16.msra.mxu0 0
  %3643 = vmatprep.subr.bf16.mxu0 0
  %3644 = vmatpush1.bf16.msra.mxu0 0
  %3645 = vmatprep.subr.bf16.mxu0 0
  %3646 = vmatpush1.bf16.msra.mxu0 0
  %3647 = vmatprep.subr.bf16.mxu0 0
  %3648 = vmatpush1.bf16.msra.mxu0 0
  %3649 = vmatprep.mubr.bf16.mxu0 0
  %3650 = vmatmul.mubr.bf16.gmra.mrb[0].mxu0 %v3545
  %v3651 = vpop.f32.mrb[0].mxu0
  %v3652 = vadd.f32 %v3567, %v3651
  %v3653 = vpop.f32.mrb[0].mxu0
  %v3654 = vpop.f32.mrb[0].mxu0
  %v3655 = vadd.f32 %v3567, %v3654
  %v3656 = vpop.f32.mrb[0].mxu0
  %3657 = vdwg.mxu0
  %v3658 = vmul.f32 %v3652, 0.5
  %v3659 = vmul.f32 %v3655, 0.5
  %v3660 = vmul.f32 %v3658, 1.442695
  %v3661 = vpow.pop %v3660
  %v3662 = vmul.f32 %v3659, 1.442695
  %v3663 = vpow.pop %v3662
  %v3664 = vmul.f32 %v3661, %v89
  %v3665 = vmul.f32 %v3663, %v90
  %3668 = vrot.lane.b32.xlu0 %v3664, 112
  %v3669 = vpop.permute.xlu0 %3668
  %3670 = vrot.lane.b32.xlu0 %v3665, 112
  %v3671 = vpop.permute.xlu0 %3670
  %v3674 = vadd.f32 %v3652, %v3669
  %v3675 = vadd.f32 %v3655, %v3671
  %v3676 = vpack.c.bf16 %v3675, %v3674
  %v3677 = vld [vmem:[%s18] sm:$0xf]
  %v3678 = vld [vmem:[%s18 + $0x4] sm:$0xf]
  %v3681 = vunpack.c.l.b16 %v3677
  %v3682 = vunpack.c.l.b16 %v3678
  %v3683 = vpack.c.b16 %v3682, %v3681
  %v3686 = vsel %vm2058, %v3676, 0
  %3688 = vmatprep.subr.bf16.mxu0 0
  %3689 = vmatpush1.bf16.msra.mxu0 %v3683
  %3690 = vmatprep.subr.bf16.mxu0 0
  %3691 = vmatpush1.bf16.msra.mxu0 0
  %3692 = vmatprep.subr.bf16.mxu0 0
  %3693 = vmatpush1.bf16.msra.mxu0 0
  %3694 = vmatprep.subr.bf16.mxu0 0
  %3695 = vmatpush1.bf16.msra.mxu0 0
  %3696 = vmatprep.subr.bf16.mxu0 0
  %3697 = vmatpush1.bf16.msra.mxu0 0
  %3698 = vmatprep.subr.bf16.mxu0 0
  %3699 = vmatpush1.bf16.msra.mxu0 0
  %3700 = vmatprep.subr.bf16.mxu0 0
  %3701 = vmatpush1.bf16.msra.mxu0 0
  %3702 = vmatprep.subr.bf16.mxu0 0
  %3703 = vmatpush1.bf16.msra.mxu0 0
  %3704 = vmatprep.subr.bf16.mxu0 0
  %3705 = vmatpush1.bf16.msra.mxu0 0
  %3706 = vmatprep.subr.bf16.mxu0 0
  %3707 = vmatpush1.bf16.msra.mxu0 0
  %3708 = vmatprep.subr.bf16.mxu0 0
  %3709 = vmatpush1.bf16.msra.mxu0 0
  %3710 = vmatprep.subr.bf16.mxu0 0
  %3711 = vmatpush1.bf16.msra.mxu0 0
  %3712 = vmatprep.subr.bf16.mxu0 0
  %3713 = vmatpush1.bf16.msra.mxu0 0
  %3714 = vmatprep.subr.bf16.mxu0 0
  %3715 = vmatpush1.bf16.msra.mxu0 0
  %3716 = vmatprep.subr.bf16.mxu0 0
  %3717 = vmatpush1.bf16.msra.mxu0 0
  %3718 = vmatprep.subr.bf16.mxu0 0
  %3719 = vmatpush1.bf16.msra.mxu0 0
  %3720 = vmatprep.mubr.bf16.mxu0 0
  %3721 = vmatmul.mubr.bf16.gmra.mrb[0].mxu0 %v3686
  %v3722 = vpop.f32.mrb[0].mxu0
  %v3723 = vadd.f32 %v1741, %v3722
  %v3724 = vpop.f32.mrb[0].mxu0
  %v3725 = vpop.f32.mrb[0].mxu0
  %v3726 = vadd.f32 %v1744, %v3725
  %v3727 = vpop.f32.mrb[0].mxu0
  %3728 = vdwg.mxu0
  %v3729 = vadd.f32 %v3723, %v1886
  %v3730 = vadd.f32 %v3726, %v1890
  %v3731 = vld [vmem:[%s9] sm:$0x1]
  %v3733 = vlaneseq
  %v3734 = vshrl.u32 %v3733, 7
  %v3735 = vsub.s32 0, %v3734
  %v3736 = vrot.slane %v3731, %v3735
  %v3738 = vadd.f32 %v3729, %v3736
  %v3739 = vadd.f32 %v3730, %v3736
  %v3740 = vmax.f32 %v3738, 0.0
  %v3741 = vmax.f32 %v3739, 0.0
  %v3742 = vpack.c.bf16 %v3741, %v3740
  %v3743 = vld [vmem:[%s19] sm:$0xff]
  %v3744 = vld [vmem:[%s19 + $0x8] sm:$0xff]
  %v3745 = vld [vmem:[%s19 + $0x10] sm:$0xff]
  %v3746 = vld [vmem:[%s19 + $0x18] sm:$0xff]
  %v3747 = vld [vmem:[%s19 + $0x20] sm:$0xff]
  %v3748 = vld [vmem:[%s19 + $0x28] sm:$0xff]
  %v3749 = vld [vmem:[%s19 + $0x30] sm:$0xff]
  %v3750 = vld [vmem:[%s19 + $0x38] sm:$0xff]
  %v3751 = vld [vmem:[%s19 + $0x40] sm:$0xff]
  %v3752 = vld [vmem:[%s19 + $0x48] sm:$0xff]
  %v3753 = vld [vmem:[%s19 + $0x50] sm:$0xff]
  %v3754 = vld [vmem:[%s19 + $0x58] sm:$0xff]
  %v3755 = vld [vmem:[%s19 + $0x60] sm:$0xff]
  %v3756 = vld [vmem:[%s19 + $0x68] sm:$0xff]
  %v3757 = vld [vmem:[%s19 + $0x70] sm:$0xff]
  %v3758 = vld [vmem:[%s19 + $0x78] sm:$0xff]
  %v3759 = vld [vmem:[%s19 + $0x80] sm:$0xff]
  %v3760 = vld [vmem:[%s19 + $0x88] sm:$0xff]
  %v3761 = vld [vmem:[%s19 + $0x90] sm:$0xff]
  %v3762 = vld [vmem:[%s19 + $0x98] sm:$0xff]
  %v3763 = vld [vmem:[%s19 + $0xa0] sm:$0xff]
  %v3764 = vld [vmem:[%s19 + $0xa8] sm:$0xff]
  %v3765 = vld [vmem:[%s19 + $0xb0] sm:$0xff]
  %v3766 = vld [vmem:[%s19 + $0xb8] sm:$0xff]
  %v3767 = vld [vmem:[%s19 + $0xc0] sm:$0xff]
  %v3768 = vld [vmem:[%s19 + $0xc8] sm:$0xff]
  %v3769 = vld [vmem:[%s19 + $0xd0] sm:$0xff]
  %v3770 = vld [vmem:[%s19 + $0xd8] sm:$0xff]
  %v3771 = vld [vmem:[%s19 + $0xe0] sm:$0xff]
  %v3772 = vld [vmem:[%s19 + $0xe8] sm:$0xff]
  %v3773 = vld [vmem:[%s19 + $0xf0] sm:$0xff]
  %v3774 = vld [vmem:[%s19 + $0xf8] sm:$0xff]
  %v3775 = vld [vmem:[%s19 + $0x100] sm:$0xff]
  %v3776 = vld [vmem:[%s19 + $0x108] sm:$0xff]
  %v3777 = vld [vmem:[%s19 + $0x110] sm:$0xff]
  %v3778 = vld [vmem:[%s19 + $0x118] sm:$0xff]
  %v3779 = vld [vmem:[%s19 + $0x120] sm:$0xff]
  %v3780 = vld [vmem:[%s19 + $0x128] sm:$0xff]
  %v3781 = vld [vmem:[%s19 + $0x130] sm:$0xff]
  %v3782 = vld [vmem:[%s19 + $0x138] sm:$0xff]
  %v3783 = vld [vmem:[%s19 + $0x140] sm:$0xff]
  %v3784 = vld [vmem:[%s19 + $0x148] sm:$0xff]
  %v3785 = vld [vmem:[%s19 + $0x150] sm:$0xff]
  %v3786 = vld [vmem:[%s19 + $0x158] sm:$0xff]
  %v3787 = vld [vmem:[%s19 + $0x160] sm:$0xff]
  %v3788 = vld [vmem:[%s19 + $0x168] sm:$0xff]
  %v3789 = vld [vmem:[%s19 + $0x170] sm:$0xff]
  %v3790 = vld [vmem:[%s19 + $0x178] sm:$0xff]
  %v3791 = vld [vmem:[%s19 + $0x180] sm:$0xff]
  %v3792 = vld [vmem:[%s19 + $0x188] sm:$0xff]
  %v3793 = vld [vmem:[%s19 + $0x190] sm:$0xff]
  %v3794 = vld [vmem:[%s19 + $0x198] sm:$0xff]
  %v3795 = vld [vmem:[%s19 + $0x1a0] sm:$0xff]
  %v3796 = vld [vmem:[%s19 + $0x1a8] sm:$0xff]
  %v3797 = vld [vmem:[%s19 + $0x1b0] sm:$0xff]
  %v3798 = vld [vmem:[%s19 + $0x1b8] sm:$0xff]
  %v3799 = vld [vmem:[%s19 + $0x1c0] sm:$0xff]
  %v3800 = vld [vmem:[%s19 + $0x1c8] sm:$0xff]
  %v3801 = vld [vmem:[%s19 + $0x1d0] sm:$0xff]
  %v3802 = vld [vmem:[%s19 + $0x1d8] sm:$0xff]
  %v3803 = vld [vmem:[%s19 + $0x1e0] sm:$0xff]
  %v3804 = vld [vmem:[%s19 + $0x1e8] sm:$0xff]
  %v3805 = vld [vmem:[%s19 + $0x1f0] sm:$0xff]
  %v3806 = vld [vmem:[%s19 + $0x1f8] sm:$0xff]
  %v3807 = vld [vmem:[%s20] sm:$0xff]
  %v3809 = vlaneseq
  %v3810 = vshrl.u32 %v3809, 7
  %v3811 = vsub.s32 0, %v3810
  %v3812 = vrot.slane %v3807, %v3811
  %v3813 = vlaneseq
  %v3814 = vshrl.u32 %v3813, 7
  %v3815 = vsub.s32 1, %v3814
  %v3816 = vrot.slane %v3807, %v3815
  %v3817 = vlaneseq
  %v3818 = vshrl.u32 %v3817, 7
  %v3819 = vsub.s32 2, %v3818
  %v3820 = vrot.slane %v3807, %v3819
  %v3821 = vlaneseq
  %v3822 = vshrl.u32 %v3821, 7
  %v3823 = vsub.s32 3, %v3822
  %v3824 = vrot.slane %v3807, %v3823
  %v3825 = vlaneseq
  %v3826 = vshrl.u32 %v3825, 7
  %v3827 = vsub.s32 4, %v3826
  %v3828 = vrot.slane %v3807, %v3827
  %v3829 = vlaneseq
  %v3830 = vshrl.u32 %v3829, 7
  %v3831 = vsub.s32 5, %v3830
  %v3832 = vrot.slane %v3807, %v3831
  %v3833 = vlaneseq
  %v3834 = vshrl.u32 %v3833, 7
  %v3835 = vsub.s32 6, %v3834
  %v3836 = vrot.slane %v3807, %v3835
  %v3837 = vlaneseq
  %v3838 = vshrl.u32 %v3837, 7
  %v3839 = vsub.s32 7, %v3838
  %v3840 = vrot.slane %v3807, %v3839
  %v3913 = vunpack.c.l.b16 %v3743
  %v3914 = vunpack.c.h.b16 %v3743
  %v3915 = vunpack.c.l.b16 %v3744
  %v3916 = vunpack.c.h.b16 %v3744
  %v3917 = vunpack.c.l.b16 %v3745
  %v3918 = vunpack.c.h.b16 %v3745
  %v3919 = vunpack.c.l.b16 %v3746
  %v3920 = vunpack.c.h.b16 %v3746
  %v3921 = vunpack.c.l.b16 %v3747
  %v3922 = vunpack.c.h.b16 %v3747
  %v3923 = vunpack.c.l.b16 %v3748
  %v3924 = vunpack.c.h.b16 %v3748
  %v3925 = vunpack.c.l.b16 %v3749
  %v3926 = vunpack.c.h.b16 %v3749
  %v3927 = vunpack.c.l.b16 %v3750
  %v3928 = vunpack.c.h.b16 %v3750
  %v3929 = vunpack.c.l.b16 %v3751
  %v3930 = vunpack.c.h.b16 %v3751
  %v3931 = vunpack.c.l.b16 %v3752
  %v3932 = vunpack.c.h.b16 %v3752
  %v3933 = vunpack.c.l.b16 %v3753
  %v3934 = vunpack.c.h.b16 %v3753
  %v3935 = vunpack.c.l.b16 %v3754
  %v3936 = vunpack.c.h.b16 %v3754
  %v3937 = vunpack.c.l.b16 %v3755
  %v3938 = vunpack.c.h.b16 %v3755
  %v3939 = vunpack.c.l.b16 %v3756
  %v3940 = vunpack.c.h.b16 %v3756
  %v3941 = vunpack.c.l.b16 %v3757
  %v3942 = vunpack.c.h.b16 %v3757
  %v3943 = vunpack.c.l.b16 %v3758
  %v3944 = vunpack.c.h.b16 %v3758
  %v3945 = vunpack.c.l.b16 %v3759
  %v3946 = vunpack.c.h.b16 %v3759
  %v3947 = vunpack.c.l.b16 %v3760
  %v3948 = vunpack.c.h.b16 %v3760
  %v3949 = vunpack.c.l.b16 %v3761
  %v3950 = vunpack.c.h.b16 %v3761
  %v3951 = vunpack.c.l.b16 %v3762
  %v3952 = vunpack.c.h.b16 %v3762
  %v3953 = vunpack.c.l.b16 %v3763
  %v3954 = vunpack.c.h.b16 %v3763
  %v3955 = vunpack.c.l.b16 %v3764
  %v3956 = vunpack.c.h.b16 %v3764
  %v3957 = vunpack.c.l.b16 %v3765
  %v3958 = vunpack.c.h.b16 %v3765
  %v3959 = vunpack.c.l.b16 %v3766
  %v3960 = vunpack.c.h.b16 %v3766
  %v3961 = vunpack.c.l.b16 %v3767
  %v3962 = vunpack.c.h.b16 %v3767
  %v3963 = vunpack.c.l.b16 %v3768
  %v3964 = vunpack.c.h.b16 %v3768
  %v3965 = vunpack.c.l.b16 %v3769
  %v3966 = vunpack.c.h.b16 %v3769
  %v3967 = vunpack.c.l.b16 %v3770
  %v3968 = vunpack.c.h.b16 %v3770
  %v3969 = vunpack.c.l.b16 %v3771
  %v3970 = vunpack.c.h.b16 %v3771
  %v3971 = vunpack.c.l.b16 %v3772
  %v3972 = vunpack.c.h.b16 %v3772
  %v3973 = vunpack.c.l.b16 %v3773
  %v3974 = vunpack.c.h.b16 %v3773
  %v3975 = vunpack.c.l.b16 %v3774
  %v3976 = vunpack.c.h.b16 %v3774
  %v3977 = vunpack.c.l.b16 %v3775
  %v3978 = vunpack.c.h.b16 %v3775
  %v3979 = vunpack.c.l.b16 %v3776
  %v3980 = vunpack.c.h.b16 %v3776
  %v3981 = vunpack.c.l.b16 %v3777
  %v3982 = vunpack.c.h.b16 %v3777
  %v3983 = vunpack.c.l.b16 %v3778
  %v3984 = vunpack.c.h.b16 %v3778
  %v3985 = vunpack.c.l.b16 %v3779
  %v3986 = vunpack.c.h.b16 %v3779
  %v3987 = vunpack.c.l.b16 %v3780
  %v3988 = vunpack.c.h.b16 %v3780
  %v3989 = vunpack.c.l.b16 %v3781
  %v3990 = vunpack.c.h.b16 %v3781
  %v3991 = vunpack.c.l.b16 %v3782
  %v3992 = vunpack.c.h.b16 %v3782
  %v3993 = vunpack.c.l.b16 %v3783
  %v3994 = vunpack.c.h.b16 %v3783
  %v3995 = vunpack.c.l.b16 %v3784
  %v3996 = vunpack.c.h.b16 %v3784
  %v3997 = vunpack.c.l.b16 %v3785
  %v3998 = vunpack.c.h.b16 %v3785
  %v3999 = vunpack.c.l.b16 %v3786
  %v4000 = vunpack.c.h.b16 %v3786
  %v4001 = vunpack.c.l.b16 %v3787
  %v4002 = vunpack.c.h.b16 %v3787
  %v4003 = vunpack.c.l.b16 %v3788
  %v4004 = vunpack.c.h.b16 %v3788
  %v4005 = vunpack.c.l.b16 %v3789
  %v4006 = vunpack.c.h.b16 %v3789
  %v4007 = vunpack.c.l.b16 %v3790
  %v4008 = vunpack.c.h.b16 %v3790
  %v4009 = vunpack.c.l.b16 %v3791
  %v4010 = vunpack.c.h.b16 %v3791
  %v4011 = vunpack.c.l.b16 %v3792
  %v4012 = vunpack.c.h.b16 %v3792
  %v4013 = vunpack.c.l.b16 %v3793
  %v4014 = vunpack.c.h.b16 %v3793
  %v4015 = vunpack.c.l.b16 %v3794
  %v4016 = vunpack.c.h.b16 %v3794
  %v4017 = vunpack.c.l.b16 %v3795
  %v4018 = vunpack.c.h.b16 %v3795
  %v4019 = vunpack.c.l.b16 %v3796
  %v4020 = vunpack.c.h.b16 %v3796
  %v4021 = vunpack.c.l.b16 %v3797
  %v4022 = vunpack.c.h.b16 %v3797
  %v4023 = vunpack.c.l.b16 %v3798
  %v4024 = vunpack.c.h.b16 %v3798
  %v4025 = vunpack.c.l.b16 %v3799
  %v4026 = vunpack.c.h.b16 %v3799
  %v4027 = vunpack.c.l.b16 %v3800
  %v4028 = vunpack.c.h.b16 %v3800
  %v4029 = vunpack.c.l.b16 %v3801
  %v4030 = vunpack.c.h.b16 %v3801
  %v4031 = vunpack.c.l.b16 %v3802
  %v4032 = vunpack.c.h.b16 %v3802
  %v4033 = vunpack.c.l.b16 %v3803
  %v4034 = vunpack.c.h.b16 %v3803
  %v4035 = vunpack.c.l.b16 %v3804
  %v4036 = vunpack.c.h.b16 %v3804
  %v4037 = vunpack.c.l.b16 %v3805
  %v4038 = vunpack.c.h.b16 %v3805
  %v4039 = vunpack.c.l.b16 %v3806
  %v4040 = vunpack.c.h.b16 %v3806
  %v4041 = vpack.c.b16 %v3921, %v3913
  %v4042 = vpack.c.b16 %v3922, %v3914
  %v4043 = vpack.c.b16 %v3923, %v3915
  %v4044 = vpack.c.b16 %v3924, %v3916
  %v4045 = vpack.c.b16 %v3925, %v3917
  %v4046 = vpack.c.b16 %v3926, %v3918
  %v4047 = vpack.c.b16 %v3927, %v3919
  %v4048 = vpack.c.b16 %v3928, %v3920
  %v4049 = vpack.c.b16 %v3937, %v3929
  %v4050 = vpack.c.b16 %v3938, %v3930
  %v4051 = vpack.c.b16 %v3939, %v3931
  %v4052 = vpack.c.b16 %v3940, %v3932
  %v4053 = vpack.c.b16 %v3941, %v3933
  %v4054 = vpack.c.b16 %v3942, %v3934
  %v4055 = vpack.c.b16 %v3943, %v3935
  %v4056 = vpack.c.b16 %v3944, %v3936
  %v4057 = vpack.c.b16 %v3953, %v3945
  %v4058 = vpack.c.b16 %v3954, %v3946
  %v4059 = vpack.c.b16 %v3955, %v3947
  %v4060 = vpack.c.b16 %v3956, %v3948
  %v4061 = vpack.c.b16 %v3957, %v3949
  %v4062 = vpack.c.b16 %v3958, %v3950
  %v4063 = vpack.c.b16 %v3959, %v3951
  %v4064 = vpack.c.b16 %v3960, %v3952
  %v4065 = vpack.c.b16 %v3969, %v3961
  %v4066 = vpack.c.b16 %v3970, %v3962
  %v4067 = vpack.c.b16 %v3971, %v3963
  %v4068 = vpack.c.b16 %v3972, %v3964
  %v4069 = vpack.c.b16 %v3973, %v3965
  %v4070 = vpack.c.b16 %v3974, %v3966
  %v4071 = vpack.c.b16 %v3975, %v3967
  %v4072 = vpack.c.b16 %v3976, %v3968
  %v4073 = vpack.c.b16 %v3985, %v3977
  %v4074 = vpack.c.b16 %v3986, %v3978
  %v4075 = vpack.c.b16 %v3987, %v3979
  %v4076 = vpack.c.b16 %v3988, %v3980
  %v4077 = vpack.c.b16 %v3989, %v3981
  %v4078 = vpack.c.b16 %v3990, %v3982
  %v4079 = vpack.c.b16 %v3991, %v3983
  %v4080 = vpack.c.b16 %v3992, %v3984
  %v4081 = vpack.c.b16 %v4001, %v3993
  %v4082 = vpack.c.b16 %v4002, %v3994
  %v4083 = vpack.c.b16 %v4003, %v3995
  %v4084 = vpack.c.b16 %v4004, %v3996
  %v4085 = vpack.c.b16 %v4005, %v3997
  %v4086 = vpack.c.b16 %v4006, %v3998
  %v4087 = vpack.c.b16 %v4007, %v3999
  %v4088 = vpack.c.b16 %v4008, %v4000
  %v4089 = vpack.c.b16 %v4017, %v4009
  %v4090 = vpack.c.b16 %v4018, %v4010
  %v4091 = vpack.c.b16 %v4019, %v4011
  %v4092 = vpack.c.b16 %v4020, %v4012
  %v4093 = vpack.c.b16 %v4021, %v4013
  %v4094 = vpack.c.b16 %v4022, %v4014
  %v4095 = vpack.c.b16 %v4023, %v4015
  %v4096 = vpack.c.b16 %v4024, %v4016
  %v4097 = vpack.c.b16 %v4033, %v4025
  %v4098 = vpack.c.b16 %v4034, %v4026
  %v4099 = vpack.c.b16 %v4035, %v4027
  %v4100 = vpack.c.b16 %v4036, %v4028
  %v4101 = vpack.c.b16 %v4037, %v4029
  %v4102 = vpack.c.b16 %v4038, %v4030
  %v4103 = vpack.c.b16 %v4039, %v4031
  %v4104 = vpack.c.b16 %v4040, %v4032
  %4169 = vmatprep.subr.bf16.mxu0 %v4042
  %4170 = vmatpush1.bf16.msra.mxu0 %v4041
  %4171 = vmatprep.subr.bf16.mxu0 %v4050
  %4172 = vmatpush1.bf16.msra.mxu0 %v4049
  %4173 = vmatprep.subr.bf16.mxu0 %v4058
  %4174 = vmatpush1.bf16.msra.mxu0 %v4057
  %4175 = vmatprep.subr.bf16.mxu0 %v4066
  %4176 = vmatpush1.bf16.msra.mxu0 %v4065
  %4177 = vmatprep.subr.bf16.mxu0 %v4074
  %4178 = vmatpush1.bf16.msra.mxu0 %v4073
  %4179 = vmatprep.subr.bf16.mxu0 %v4082
  %4180 = vmatpush1.bf16.msra.mxu0 %v4081
  %4181 = vmatprep.subr.bf16.mxu0 %v4090
  %4182 = vmatpush1.bf16.msra.mxu0 %v4089
  %4183 = vmatprep.subr.bf16.mxu0 %v4098
  %4184 = vmatpush1.bf16.msra.mxu0 %v4097
  %4185 = vmatprep.subr.bf16.mxu0 0
  %4186 = vmatpush1.bf16.msra.mxu0 0
  %4187 = vmatprep.subr.bf16.mxu0 0
  %4188 = vmatpush1.bf16.msra.mxu0 0
  %4189 = vmatprep.subr.bf16.mxu0 0
  %4190 = vmatpush1.bf16.msra.mxu0 0
  %4191 = vmatprep.subr.bf16.mxu0 0
  %4192 = vmatpush1.bf16.msra.mxu0 0
  %4193 = vmatprep.subr.bf16.mxu0 0
  %4194 = vmatpush1.bf16.msra.mxu0 0
  %4195 = vmatprep.subr.bf16.mxu0 0
  %4196 = vmatpush1.bf16.msra.mxu0 0
  %4197 = vmatprep.subr.bf16.mxu0 0
  %4198 = vmatpush1.bf16.msra.mxu0 0
  %4199 = vmatprep.subr.bf16.mxu0 0
  %4200 = vmatpush1.bf16.msra.mxu0 0
  %4201 = vmatprep.mubr.bf16.mxu0 0
  %4202 = vmatmul.mubr.bf16.gmra.mrb[0].mxu0 %v3742
  %v4203 = vpop.f32.mrb[0].mxu0
  %v4204 = vadd.f32 %v3812, %v4203
  %v4205 = vpop.f32.mrb[0].mxu0
  %v4206 = vadd.f32 %v3816, %v4205
  %v4207 = vpop.f32.mrb[0].mxu0
  %v4208 = vadd.f32 %v3812, %v4207
  %v4209 = vpop.f32.mrb[0].mxu0
  %v4210 = vadd.f32 %v3816, %v4209
  %4211 = vdwg.mxu0
  %4212 = vmatprep.subr.bf16.mxu0 %v4044
  %4213 = vmatpush1.bf16.msra.mxu0 %v4043
  %4214 = vmatprep.subr.bf16.mxu0 %v4052
  %4215 = vmatpush1.bf16.msra.mxu0 %v4051
  %4216 = vmatprep.subr.bf16.mxu0 %v4060
  %4217 = vmatpush1.bf16.msra.mxu0 %v4059
  %4218 = vmatprep.subr.bf16.mxu0 %v4068
  %4219 = vmatpush1.bf16.msra.mxu0 %v4067
  %4220 = vmatprep.subr.bf16.mxu0 %v4076
  %4221 = vmatpush1.bf16.msra.mxu0 %v4075
  %4222 = vmatprep.subr.bf16.mxu0 %v4084
  %4223 = vmatpush1.bf16.msra.mxu0 %v4083
  %4224 = vmatprep.subr.bf16.mxu0 %v4092
  %4225 = vmatpush1.bf16.msra.mxu0 %v4091
  %4226 = vmatprep.subr.bf16.mxu0 %v4100
  %4227 = vmatpush1.bf16.msra.mxu0 %v4099
  %4228 = vmatprep.subr.bf16.mxu0 0
  %4229 = vmatpush1.bf16.msra.mxu0 0
  %4230 = vmatprep.subr.bf16.mxu0 0
  %4231 = vmatpush1.bf16.msra.mxu0 0
  %4232 = vmatprep.subr.bf16.mxu0 0
  %4233 = vmatpush1.bf16.msra.mxu0 0
  %4234 = vmatprep.subr.bf16.mxu0 0
  %4235 = vmatpush1.bf16.msra.mxu0 0
  %4236 = vmatprep.subr.bf16.mxu0 0
  %4237 = vmatpush1.bf16.msra.mxu0 0
  %4238 = vmatprep.subr.bf16.mxu0 0
  %4239 = vmatpush1.bf16.msra.mxu0 0
  %4240 = vmatprep.subr.bf16.mxu0 0
  %4241 = vmatpush1.bf16.msra.mxu0 0
  %4242 = vmatprep.subr.bf16.mxu0 0
  %4243 = vmatpush1.bf16.msra.mxu0 0
  %4244 = vmatprep.mubr.bf16.mxu0 0
  %4245 = vmatmul.mubr.bf16.gmra.mrb[0].mxu0 %v3742
  %v4246 = vpop.f32.mrb[0].mxu0
  %v4247 = vadd.f32 %v3820, %v4246
  %v4248 = vpop.f32.mrb[0].mxu0
  %v4249 = vadd.f32 %v3824, %v4248
  %v4250 = vpop.f32.mrb[0].mxu0
  %v4251 = vadd.f32 %v3820, %v4250
  %v4252 = vpop.f32.mrb[0].mxu0
  %v4253 = vadd.f32 %v3824, %v4252
  %4254 = vdwg.mxu0
  %4255 = vmatprep.subr.bf16.mxu0 %v4046
  %4256 = vmatpush1.bf16.msra.mxu0 %v4045
  %4257 = vmatprep.subr.bf16.mxu0 %v4054
  %4258 = vmatpush1.bf16.msra.mxu0 %v4053
  %4259 = vmatprep.subr.bf16.mxu0 %v4062
  %4260 = vmatpush1.bf16.msra.mxu0 %v4061
  %4261 = vmatprep.subr.bf16.mxu0 %v4070
  %4262 = vmatpush1.bf16.msra.mxu0 %v4069
  %4263 = vmatprep.subr.bf16.mxu0 %v4078
  %4264 = vmatpush1.bf16.msra.mxu0 %v4077
  %4265 = vmatprep.subr.bf16.mxu0 %v4086
  %4266 = vmatpush1.bf16.msra.mxu0 %v4085
  %4267 = vmatprep.subr.bf16.mxu0 %v4094
  %4268 = vmatpush1.bf16.msra.mxu0 %v4093
  %4269 = vmatprep.subr.bf16.mxu0 %v4102
  %4270 = vmatpush1.bf16.msra.mxu0 %v4101
  %4271 = vmatprep.subr.bf16.mxu0 0
  %4272 = vmatpush1.bf16.msra.mxu0 0
  %4273 = vmatprep.subr.bf16.mxu0 0
  %4274 = vmatpush1.bf16.msra.mxu0 0
  %4275 = vmatprep.subr.bf16.mxu0 0
  %4276 = vmatpush1.bf16.msra.mxu0 0
  %4277 = vmatprep.subr.bf16.mxu0 0
  %4278 = vmatpush1.bf16.msra.mxu0 0
  %4279 = vmatprep.subr.bf16.mxu0 0
  %4280 = vmatpush1.bf16.msra.mxu0 0
  %4281 = vmatprep.subr.bf16.mxu0 0
  %4282 = vmatpush1.bf16.msra.mxu0 0
  %4283 = vmatprep.subr.bf16.mxu0 0
  %4284 = vmatpush1.bf16.msra.mxu0 0
  %4285 = vmatprep.subr.bf16.mxu0 0
  %4286 = vmatpush1.bf16.msra.mxu0 0
  %4287 = vmatprep.mubr.bf16.mxu0 0
  %4288 = vmatmul.mubr.bf16.gmra.mrb[0].mxu0 %v3742
  %v4289 = vpop.f32.mrb[0].mxu0
  %v4290 = vadd.f32 %v3828, %v4289
  %v4291 = vpop.f32.mrb[0].mxu0
  %v4292 = vadd.f32 %v3832, %v4291
  %v4293 = vpop.f32.mrb[0].mxu0
  %v4294 = vadd.f32 %v3828, %v4293
  %v4295 = vpop.f32.mrb[0].mxu0
  %v4296 = vadd.f32 %v3832, %v4295
  %4297 = vdwg.mxu0
  %4298 = vmatprep.subr.bf16.mxu0 %v4048
  %4299 = vmatpush1.bf16.msra.mxu0 %v4047
  %4300 = vmatprep.subr.bf16.mxu0 %v4056
  %4301 = vmatpush1.bf16.msra.mxu0 %v4055
  %4302 = vmatprep.subr.bf16.mxu0 %v4064
  %4303 = vmatpush1.bf16.msra.mxu0 %v4063
  %4304 = vmatprep.subr.bf16.mxu0 %v4072
  %4305 = vmatpush1.bf16.msra.mxu0 %v4071
  %4306 = vmatprep.subr.bf16.mxu0 %v4080
  %4307 = vmatpush1.bf16.msra.mxu0 %v4079
  %4308 = vmatprep.subr.bf16.mxu0 %v4088
  %4309 = vmatpush1.bf16.msra.mxu0 %v4087
  %4310 = vmatprep.subr.bf16.mxu0 %v4096
  %4311 = vmatpush1.bf16.msra.mxu0 %v4095
  %4312 = vmatprep.subr.bf16.mxu0 %v4104
  %4313 = vmatpush1.bf16.msra.mxu0 %v4103
  %4314 = vmatprep.subr.bf16.mxu0 0
  %4315 = vmatpush1.bf16.msra.mxu0 0
  %4316 = vmatprep.subr.bf16.mxu0 0
  %4317 = vmatpush1.bf16.msra.mxu0 0
  %4318 = vmatprep.subr.bf16.mxu0 0
  %4319 = vmatpush1.bf16.msra.mxu0 0
  %4320 = vmatprep.subr.bf16.mxu0 0
  %4321 = vmatpush1.bf16.msra.mxu0 0
  %4322 = vmatprep.subr.bf16.mxu0 0
  %4323 = vmatpush1.bf16.msra.mxu0 0
  %4324 = vmatprep.subr.bf16.mxu0 0
  %4325 = vmatpush1.bf16.msra.mxu0 0
  %4326 = vmatprep.subr.bf16.mxu0 0
  %4327 = vmatpush1.bf16.msra.mxu0 0
  %4328 = vmatprep.subr.bf16.mxu0 0
  %4329 = vmatpush1.bf16.msra.mxu0 0
  %4330 = vmatprep.mubr.bf16.mxu0 0
  %4331 = vmatmul.mubr.bf16.gmra.mrb[0].mxu0 %v3742
  %v4332 = vpop.f32.mrb[0].mxu0
  %v4333 = vadd.f32 %v3836, %v4332
  %v4334 = vpop.f32.mrb[0].mxu0
  %v4335 = vadd.f32 %v3840, %v4334
  %v4336 = vpop.f32.mrb[0].mxu0
  %v4337 = vadd.f32 %v3836, %v4336
  %v4338 = vpop.f32.mrb[0].mxu0
  %v4339 = vadd.f32 %v3840, %v4338
  %4340 = vdwg.mxu0
  %v4341 = vxor.u32 %v4204, 2147483648
  %v4342 = vxor.u32 %v4206, 2147483648
  %v4343 = vxor.u32 %v4247, 2147483648
  %v4344 = vxor.u32 %v4249, 2147483648
  %v4345 = vxor.u32 %v4290, 2147483648
  %v4346 = vxor.u32 %v4292, 2147483648
  %v4347 = vxor.u32 %v4333, 2147483648
  %v4348 = vxor.u32 %v4335, 2147483648
  %v4349 = vxor.u32 %v4208, 2147483648
  %v4350 = vxor.u32 %v4210, 2147483648
  %v4351 = vxor.u32 %v4251, 2147483648
  %v4352 = vxor.u32 %v4253, 2147483648
  %v4353 = vxor.u32 %v4294, 2147483648
  %v4354 = vxor.u32 %v4296, 2147483648
  %v4355 = vxor.u32 %v4337, 2147483648
  %v4356 = vxor.u32 %v4339, 2147483648
  %v4357 = vmul.f32 %v4341, 1.442695
  %v4358 = vpow.pop %v4357
  %v4359 = vmul.f32 %v4342, 1.442695
  %v4360 = vpow.pop %v4359
  %v4361 = vmul.f32 %v4343, 1.442695
  %v4362 = vpow.pop %v4361
  %v4363 = vmul.f32 %v4344, 1.442695
  %v4364 = vpow.pop %v4363
  %v4365 = vmul.f32 %v4345, 1.442695
  %v4366 = vpow.pop %v4365
  %v4367 = vmul.f32 %v4346, 1.442695
  %v4368 = vpow.pop %v4367
  %v4369 = vmul.f32 %v4347, 1.442695
  %v4370 = vpow.pop %v4369
  %v4371 = vmul.f32 %v4348, 1.442695
  %v4372 = vpow.pop %v4371
  %v4373 = vmul.f32 %v4349, 1.442695
  %v4374 = vpow.pop %v4373
  %v4375 = vmul.f32 %v4350, 1.442695
  %v4376 = vpow.pop %v4375
  %v4377 = vmul.f32 %v4351, 1.442695
  %v4378 = vpow.pop %v4377
  %v4379 = vmul.f32 %v4352, 1.442695
  %v4380 = vpow.pop %v4379
  %v4381 = vmul.f32 %v4353, 1.442695
  %v4382 = vpow.pop %v4381
  %v4383 = vmul.f32 %v4354, 1.442695
  %v4384 = vpow.pop %v4383
  %v4385 = vmul.f32 %v4355, 1.442695
  %v4386 = vpow.pop %v4385
  %v4387 = vmul.f32 %v4356, 1.442695
  %v4388 = vpow.pop %v4387
  %v4389 = vadd.f32 %v4358, 1.0
  %v4390 = vadd.f32 %v4360, 1.0
  %v4391 = vadd.f32 %v4362, 1.0
  %v4392 = vadd.f32 %v4364, 1.0
  %v4393 = vadd.f32 %v4366, 1.0
  %v4394 = vadd.f32 %v4368, 1.0
  %v4395 = vadd.f32 %v4370, 1.0
  %v4396 = vadd.f32 %v4372, 1.0
  %v4397 = vadd.f32 %v4374, 1.0
  %v4398 = vadd.f32 %v4376, 1.0
  %v4399 = vadd.f32 %v4378, 1.0
  %v4400 = vadd.f32 %v4380, 1.0
  %v4401 = vadd.f32 %v4382, 1.0
  %v4402 = vadd.f32 %v4384, 1.0
  %v4403 = vadd.f32 %v4386, 1.0
  %v4404 = vadd.f32 %v4388, 1.0
  %v4405 = vrcp.pop %v4389
  %v4406 = vmul.f32 1.0, %v4405
  %v4407 = vrcp.pop %v4390
  %v4408 = vmul.f32 1.0, %v4407
  %v4409 = vrcp.pop %v4391
  %v4410 = vmul.f32 1.0, %v4409
  %v4411 = vrcp.pop %v4392
  %v4412 = vmul.f32 1.0, %v4411
  %v4413 = vrcp.pop %v4393
  %v4414 = vmul.f32 1.0, %v4413
  %v4415 = vrcp.pop %v4394
  %v4416 = vmul.f32 1.0, %v4415
  %v4417 = vrcp.pop %v4395
  %v4418 = vmul.f32 1.0, %v4417
  %v4419 = vrcp.pop %v4396
  %v4420 = vmul.f32 1.0, %v4419
  %v4421 = vrcp.pop %v4397
  %v4422 = vmul.f32 1.0, %v4421
  %v4423 = vrcp.pop %v4398
  %v4424 = vmul.f32 1.0, %v4423
  %v4425 = vrcp.pop %v4399
  %v4426 = vmul.f32 1.0, %v4425
  %v4427 = vrcp.pop %v4400
  %v4428 = vmul.f32 1.0, %v4427
  %v4429 = vrcp.pop %v4401
  %v4430 = vmul.f32 1.0, %v4429
  %v4431 = vrcp.pop %v4402
  %v4432 = vmul.f32 1.0, %v4431
  %v4433 = vrcp.pop %v4403
  %v4434 = vmul.f32 1.0, %v4433
  %v4435 = vrcp.pop %v4404
  %v4436 = vmul.f32 1.0, %v4435
  %4437 = vst [vmem:[%s21] sm:$0xff] %v4406
  %4438 = vst [vmem:[%s21 + $0x8] sm:$0xff] %v4408
  %4439 = vst [vmem:[%s21 + $0x10] sm:$0xff] %v4410
  %4440 = vst [vmem:[%s21 + $0x18] sm:$0xff] %v4412
  %4441 = vst [vmem:[%s21 + $0x20] sm:$0xff] %v4414
  %4442 = vst [vmem:[%s21 + $0x28] sm:$0xff] %v4416
  %4443 = vst [vmem:[%s21 + $0x30] sm:$0xff] %v4418
  %4444 = vst [vmem:[%s21 + $0x38] sm:$0xff] %v4420
  %4445 = vst [vmem:[%s21 + $0x40] sm:$0xff] %v4422
  %4446 = vst [vmem:[%s21 + $0x48] sm:$0xff] %v4424
  %4447 = vst [vmem:[%s21 + $0x50] sm:$0xff] %v4426
  %4448 = vst [vmem:[%s21 + $0x58] sm:$0xff] %v4428
  %4449 = vst [vmem:[%s21 + $0x60] sm:$0xff] %v4430
  %4450 = vst [vmem:[%s21 + $0x68] sm:$0xff] %v4432
  %4451 = vst [vmem:[%s21 + $0x70] sm:$0xff] %v4434
  %4452 = vst [vmem:[%s21 + $0x78] sm:$0xff] %v4436
  // Predicated region
  $region86: #{autoencoder_forward.3} parent=0 // pred_check
    _
  $region87: #{autoencoder_forward.3} parent=0 // pred_check_branch
    %4454 = sbr.rel (0) target = $region89
  $region88: #{autoencoder_forward.3} parent=0 // pred_region
    _
  $region89: #{autoencoder_forward.3} parent=0 // pred_fallthru
    _
  // Predicated region
  $region90: #{autoencoder_forward.3} parent=0 // pred_check
    _
  $region91: #{autoencoder_forward.3} parent=0 // pred_check_branch
    %4456 = sbr.rel (0) target = $region93
  $region92: #{autoencoder_forward.3} parent=0 // pred_region
    _
  $region93: #{autoencoder_forward.3} parent=0 // pred_fallthru
    _
  // Predicated region
  $region94: #{autoencoder_forward.3} parent=0 // pred_check
    _
  $region95: #{autoencoder_forward.3} parent=0 // pred_check_branch
    %4458 = sbr.rel (0) target = $region97
  $region96: #{autoencoder_forward.3} parent=0 // pred_region
    _
  $region97: #{autoencoder_forward.3} parent=0 // pred_fallthru
    _
  // Predicated region
  $region98: #{autoencoder_forward.3} parent=0 // pred_check
    _
  $region99: #{autoencoder_forward.3} parent=0 // pred_check_branch
    %4460 = sbr.rel (0) target = $region101
  $region100: #{autoencoder_forward.3} parent=0 // pred_region
    _
  $region101: #{autoencoder_forward.3} parent=0 // pred_fallthru
    _

</llo_original>
